<compile_context>
chip_gen: v6e
topology: v6e:2x2x1
jax: 0.10.0
libtpu: 0.0.40
codegen_flags: <defaults>
</compile_context>

<pallas_src>
import functools

import numpy as np
import jax
import jax.numpy as jnp
from jax import lax
from jax.experimental import pallas as pl
from jax.experimental.pallas import tpu as pltpu

BIN_SPACE = [[0.0, 0.032], [0.0, 0.032], [0.0, 0.032]]
EULER_RESOLUTION = 5            # -> 360 // 5 = 72 rotation bins per axis
NEG_INF = -1e30
PAGE = 16                       # bf16 sublane pairs: 16-row pages for the feat DMA

SELF_PARAMS = ["queries", "w_sq", "b_sq", "w_sk", "b_sk", "w_sv", "b_sv",
               "w_so", "b_so", "w_cq", "b_cq", "ln_g", "ln_b"]
CROSS_PARAMS = ["w_ck", "b_ck", "w_cv", "b_cv", "w_co", "b_co",
                "w_f1", "b_f1", "w_f2", "b_f2", "ln_g", "ln_b"]


def _round_up(x, m):
    return ((x + m - 1) // m) * m


def _next_pow2(x):
    return 1 << max(int(x) - 1, 0).bit_length()


def _mx(a, b):
    """MXU matmul: bf16 inputs, f32 accumulation."""
    return jnp.dot(a.astype(jnp.bfloat16), b.astype(jnp.bfloat16),
                   preferred_element_type=jnp.float32)


def _mx_nt(a, b):
    """a @ b.T on the MXU (contract last dims) without materializing b.T."""
    return lax.dot_general(a.astype(jnp.bfloat16), b.astype(jnp.bfloat16),
                           dimension_numbers=(((1,), (1,)), ((), ())),
                           preferred_element_type=jnp.float32)


def _layer_norm(x, g, b):
    mu = jnp.mean(x, axis=-1, keepdims=True)
    xc = x - mu
    var = jnp.mean(xc * xc, axis=-1, keepdims=True)
    return xc * lax.rsqrt(var + 1e-5) * g[None, :] + b[None, :]


# ---------------------------------------------------------------------------
# Prologue kernel (run once): self-attention over the learned queries plus the
# batch-invariant, pre-scaled cross-attention query projection.
# ---------------------------------------------------------------------------
def _self_attn_kernel(q_ref, w_sq, b_sq, w_sk, b_sk, w_sv, b_sv, w_so, b_so,
                      w_cq, b_cq, ln_g, ln_b, tgt0_ref, q0_ref, *, nq_valid):
    Nq, D = q_ref.shape
    scale = jnp.float32(1.0) / jnp.sqrt(jnp.float32(D))

    tgt = q_ref[...]                                        # (Nq, D) f32
    q = (_mx(tgt, w_sq[...]) + b_sq[...]) * scale           # scale folded into q
    k = _mx(tgt, w_sk[...]) + b_sk[...]
    v = _mx(tgt, w_sv[...]) + b_sv[...]

    s = _mx_nt(q, k)                                        # (Nq, Nq), no K transpose
    key_idx = lax.broadcasted_iota(jnp.int32, (1, Nq), 1)
    bias = jnp.where(key_idx < nq_valid, 0.0, NEG_INF).astype(jnp.float32)
    s = s + bias                                            # mask padded query keys

    # exact softmax (one-time prologue -> exactness is free).
    m = jnp.max(s, axis=-1, keepdims=True)
    e = jnp.exp(s - m)
    p = e / jnp.sum(e, axis=-1, keepdims=True)

    a = _mx(p, v)
    a = _mx(a, w_so[...]) + b_so[...]
    tgt0 = _layer_norm(tgt + a, ln_g[0, :], ln_b[0, :])
    tgt0_ref[...] = tgt0

    # batch-invariant cross-attention query projection, 1/sqrt(D) pre-folded.
    q0 = (_mx(tgt0, w_cq[...]) + b_cq[...]) * scale
    q0_ref[...] = q0.astype(jnp.bfloat16)


def self_attn_queries(params, nq_valid):
    args = [params[k] for k in SELF_PARAMS]
    Nq, D = params["queries"].shape
    return pl.pallas_call(
        functools.partial(_self_attn_kernel, nq_valid=nq_valid),
        out_shape=(jax.ShapeDtypeStruct((Nq, D), jnp.float32),
                   jax.ShapeDtypeStruct((Nq, D), jnp.bfloat16)),
    )(*args)


# ---------------------------------------------------------------------------
# Per-batch kernel: in-kernel feat window DMA, masked cross-attention, FFN,
# two LayerNorms.  Grid = (padded batch,), "parallel" for megacore.
# ---------------------------------------------------------------------------
def _cross_ffn_kernel(meta_ref,                          # SMEM (3, B): page0 / start / n
                      tgt0_ref, q0_ref, feat_hbm,        # (Nq,D) f32, (Nq,D) bf16, HBM pages
                      w_ck, b_ck, w_cv, b_cv, w_co, b_co,
                      w_f1, b_f1, w_f2, b_f2, ln_g, ln_b,
                      out_ref,                           # (D, Nq) lane-dense
                      feat_buf, sem):
    b = pl.program_id(0)
    page0 = meta_ref[0, b]                               # first 16-row page of the window
    start = meta_ref[1, b]                               # cloud start inside the window
    n_valid = meta_ref[2, b]                             # number of valid points

    n_pages, page, D = feat_buf.shape
    win = n_pages * page

    # DMA this batch element's page window straight from HBM (no host gather).
    # TODO(synk): double-buffer across grid steps / flash-tile over maxN for
    # realistic point clouds (mandatory on v7x, 64 MiB VMEM).
    cp = pltpu.make_async_copy(feat_hbm.at[pl.ds(page0, n_pages)],
                               feat_buf, sem.at[0])
    cp.start()

    tgt0 = tgt0_ref[...]                                 # (Nq, D) f32
    q0 = q0_ref[...]                                     # (Nq, D) bf16, pre-scaled

    cp.wait()
    mem = feat_buf[...].reshape(win, D)                  # (win, D) bf16

    # --- cross-attention (1 head); K/V un-fused (no mid-128-lane slices) ---
    k = (_mx(mem, w_ck[...]) + b_ck[...]).astype(jnp.bfloat16)
    v = (_mx(mem, w_cv[...]) + b_cv[...]).astype(jnp.bfloat16)
    s = _mx_nt(q0, k)                                    # (Nq, win) f32
    key_idx = lax.broadcasted_iota(jnp.int32, (1, win), 1)
    # Additive key-padding bias: rows outside [start, start+n) belong to
    # neighbouring clouds / zero pad (always finite), so one broadcast add
    # is sufficient (their softmax weight underflows to exactly 0).
    # NOTE: n_valid == 0 degenerates to a uniform distribution over padding,
    # finite but meaningless — same as the reference on an empty cloud.
    bias = jnp.where((key_idx >= start) & (key_idx < start + n_valid),
                     0.0, NEG_INF).astype(jnp.float32)
    s = s + bias
    m = jnp.max(s, axis=-1, keepdims=True)
    e = jnp.exp(s - m)
    p = e * pl.reciprocal(jnp.sum(e, axis=-1, keepdims=True), approx=True)
    a = _mx(p, v)
    a = _mx(a, w_co[...]) + b_co[...]
    tgt = _layer_norm(tgt0 + a, ln_g[1, :], ln_b[1, :])

    # --- feed-forward D -> 4D -> D with ReLU ---
    h = jnp.maximum(_mx(tgt, w_f1[...]) + b_f1[...], 0.0)
    h = _mx(h, w_f2[...]) + b_f2[...]
    tgt = _layer_norm(tgt + h, ln_g[2, :], ln_b[2, :])

    # lane-dense output: query axis (padded to a multiple of 128) on lanes.
    out_ref[...] = tgt.T.astype(out_ref.dtype)


def cross_decode(feat_pages, meta, tgt0, q0, params, win):
    _, page, D = feat_pages.shape
    Nq = tgt0.shape[0]
    B = meta.shape[1]
    weights = [params[k] for k in CROSS_PARAMS]

    def const_spec(arr):
        nd = arr.ndim
        return pl.BlockSpec(arr.shape, lambda *_, _nd=nd: (0,) * _nd)

    # TODO(synk): pipeline_mode=pl.Buffered(1) on the constant weight specs
    # would drop their useless second pipeline buffer (minor VMEM headroom).
    in_specs = [const_spec(tgt0), const_spec(q0),
                pl.BlockSpec(memory_space=pl.ANY)]        # feat stays in HBM
    in_specs += [const_spec(w) for w in weights]
    out_spec = pl.BlockSpec((pl.Squeezed(), D, Nq), lambda b, meta: (b, 0, 0))

    grid_spec = pltpu.PrefetchScalarGridSpec(
        num_scalar_prefetch=1,
        grid=(B,),
        in_specs=in_specs,
        out_specs=out_spec,
        scratch_shapes=[pltpu.VMEM((win // PAGE, PAGE, D), jnp.bfloat16),
                        pltpu.SemaphoreType.DMA((1,))],
    )
    return pl.pallas_call(
        _cross_ffn_kernel,
        out_shape=jax.ShapeDtypeStruct((B, D, Nq), jnp.float32),
        grid_spec=grid_spec,
        compiler_params=pltpu.CompilerParams(
            # disjoint (b,:,:) output blocks, no cross-step state -> megacore OK
            dimension_semantics=("parallel",),
        ),
    )(meta, tgt0, q0, feat_pages, *weights)


@functools.partial(jax.jit, static_argnames=("win",))
def _forward_batch(feat_pages, meta, tgt0, q0, cross_params, *, win):
    return cross_decode(feat_pages, meta, tgt0, q0, cross_params, win)


# ---------------------------------------------------------------------------
# Parameters / module wrapper.
# ---------------------------------------------------------------------------
def make_params(key, hidden_size, nq_valid, nq_pad):
    D = hidden_size
    ks = jax.random.split(key, 24)

    def w(k, shape, dtype=jnp.bfloat16):
        return (jax.random.normal(k, shape, jnp.float32) * 0.02).astype(dtype)

    def bias(k, n):
        return jax.random.normal(k, (1, n), jnp.float32) * 0.02

    queries = jnp.pad(w(ks[0], (nq_valid, D), jnp.float32),
                      ((0, nq_pad - nq_valid), (0, 0)))
    return dict(
        queries=queries,                                  # (Nq_pad, D) f32
        w_sq=w(ks[1], (D, D)),      b_sq=bias(ks[2], D),
        w_sk=w(ks[3], (D, D)),      b_sk=bias(ks[4], D),
        w_sv=w(ks[5], (D, D)),      b_sv=bias(ks[6], D),
        w_so=w(ks[7], (D, D)),      b_so=bias(ks[8], D),
        w_cq=w(ks[9], (D, D)),      b_cq=bias(ks[10], D),
        w_ck=w(ks[11], (D, D)),     b_ck=bias(ks[12], D),
        w_cv=w(ks[13], (D, D)),     b_cv=bias(ks[14], D),
        w_co=w(ks[15], (D, D)),     b_co=bias(ks[16], D),
        w_f1=w(ks[17], (D, 4 * D)), b_f1=bias(ks[18], 4 * D),
        w_f2=w(ks[19], (4 * D, D)), b_f2=bias(ks[20], D),
        ln_g=jnp.ones((3, D), jnp.float32), ln_b=jnp.zeros((3, D), jnp.float32),
    )


class ActionHeadPallas:
    """JAX/Pallas port of ActionHead.forward (this forward only exercises
    FeatureAggregate + slicing; reduce/pos/rot configs affect other paths)."""

    def __init__(self, hidden_size=64, dim_actions=8):
        self.hidden_size = hidden_size
        self.dim_actions = dim_actions
        self.euler_bins = 360 // EULER_RESOLUTION
        x_bins = np.arange(BIN_SPACE[0][0], BIN_SPACE[0][1], 0.001)
        y_bins = np.arange(BIN_SPACE[1][0], BIN_SPACE[1][1], 0.001)
        z_bins = np.arange(BIN_SPACE[2][0], BIN_SPACE[2][1], 0.001)
        self.num_pos_queries = len(x_bins) + len(y_bins) + len(z_bins)
        self.num_queries = self.num_pos_queries + 72 * 3 + 1          # 313 real queries
        self.num_queries_padded = _round_up(self.num_queries, 128)    # 384: lane-dense out
        self.params = make_params(jax.random.PRNGKey(0), hidden_size,
                                  self.num_queries, self.num_queries_padded)
        # One-time prologue: self-attention over the fixed learned queries and
        # the batch-invariant, pre-scaled cross-attention query projection.
        tgt0, q0 = self_attn_queries(self.params, self.num_queries)
        self.tgt0 = jax.block_until_ready(tgt0)
        self.q0 = jax.block_until_ready(q0)
        self.cross_params = {k: self.params[k] for k in CROSS_PARAMS}

    def __call__(self, feat, npoints_in_batch):
        B = len(npoints_in_batch)
        lens = np.asarray(npoints_in_batch, dtype=np.int64)
        offs = np.concatenate(([0], np.cumsum(lens)[:-1]))
        total = int(lens.sum())

        # Bucketed static sizes -> stable kernel shapes (no per-call recompile)
        # and an even batch grid (>= 2 steps) so both v7x TensorCores get work.
        max_n = max(128, _next_pow2(int(lens.max())))
        win = max_n + PAGE                          # page-aligned window, covers any offset
        b_pad = max(2, _next_pow2(B))
        total_pad = max(256, _next_pow2(int(offs[-1]) + win))

        page_idx = offs // PAGE
        meta = np.zeros((3, b_pad), np.int32)
        meta[0, :B] = page_idx                      # first 16-row page of the window
        meta[1, :B] = offs - page_idx * PAGE        # cloud start inside the window
        meta[2, :B] = lens                          # number of valid points

        # Single linear pad+cast pass over feat (replaces the old (B, maxN, D)
        # gather); the kernel DMAs each batch window straight from HBM.
        feat_pages = jnp.pad(feat, ((0, total_pad - total), (0, 0))) \
            .astype(jnp.bfloat16).reshape(total_pad // PAGE, PAGE, -1)

        out = _forward_batch(feat_pages, jnp.asarray(meta), self.tgt0, self.q0,
                             self.cross_params, win=win)   # (b_pad, D, Nq_pad)

        npos, nq = self.num_pos_queries, self.num_queries
        xt = [out[i, :, :npos] for i in range(B)]           # position bins
        xr = [out[i, :, npos:nq - 1] for i in range(B)]      # 72*3 euler bins
        xo = [out[i, :, nq - 1] for i in range(B)]            # open/close query
        return xt, xr, xo


# ---------------------------------------------------------------------------
# Pure-JAX f32 reference (validation of the reconstructed decoder math).
# ---------------------------------------------------------------------------
def _reference(feat, npoints_in_batch, params, nq_valid):
    f32 = lambda a: jnp.asarray(a, jnp.float32)
    D = feat.shape[1]
    scale = 1.0 / np.sqrt(D)

    def ln(x, g, b):
        mu = x.mean(-1, keepdims=True)
        var = ((x - mu) ** 2).mean(-1, keepdims=True)
        return (x - mu) / jnp.sqrt(var + 1e-5) * g + b

    tgt = f32(params["queries"])[:nq_valid]
    q = tgt @ f32(params["w_sq"]) + f32(params["b_sq"])
    k = tgt @ f32(params["w_sk"]) + f32(params["b_sk"])
    v = tgt @ f32(params["w_sv"]) + f32(params["b_sv"])
    p = jax.nn.softmax(q @ k.T * scale, axis=-1)
    a = (p @ v) @ f32(params["w_so"]) + f32(params["b_so"])
    tgt0 = ln(tgt + a, f32(params["ln_g"][0]), f32(params["ln_b"][0]))

    outs, off = [], 0
    for n in npoints_in_batch:
        mem = f32(feat[off:off + n]); off += n
        q = tgt0 @ f32(params["w_cq"]) + f32(params["b_cq"])
        k = mem @ f32(params["w_ck"]) + f32(params["b_ck"])
        v = mem @ f32(params["w_cv"]) + f32(params["b_cv"])
        p = jax.nn.softmax(q @ k.T * scale, axis=-1)
        a = (p @ v) @ f32(params["w_co"]) + f32(params["b_co"])
        t = ln(tgt0 + a, f32(params["ln_g"][1]), f32(params["ln_b"][1]))
        h = jnp.maximum(t @ f32(params["w_f1"]) + f32(params["b_f1"]), 0.0)
        h = h @ f32(params["w_f2"]) + f32(params["b_f2"])
        t = ln(t + h, f32(params["ln_g"][2]), f32(params["ln_b"][2]))
        outs.append(t.T)                                    # (D, nq_valid)
    return outs


if __name__ == "__main__":
    hidden_size = 64
    npoints_in_batch = [96, 128]          # batch of 2 point clouds
    total_points = sum(npoints_in_batch)

    key = jax.random.PRNGKey(0)
    feat = jax.random.normal(key, (total_points, hidden_size), jnp.float32)

    head = ActionHeadPallas(hidden_size=hidden_size, dim_actions=8)
    xt, xr, xo = head(feat, npoints_in_batch)

    for t in xt + xr + xo:
        jax.block_until_ready(t)

    # shapes implied by the module
    assert xt[0].shape == (hidden_size, head.num_pos_queries)
    assert xr[0].shape == (hidden_size, 72 * 3)
    assert xo[0].shape == (hidden_size,)

    # numeric check against a pure f32 JAX reference (loose tolerance: the
    # kernel feeds the MXU bf16 and uses approx reciprocal in the per-batch
    # softmax).
    ref = _reference(feat, npoints_in_batch, head.params, head.num_queries)
    for bi in range(len(npoints_in_batch)):
        got = np.concatenate([np.asarray(xt[bi]), np.asarray(xr[bi]),
                              np.asarray(xo[bi])[:, None]], axis=1)
        assert np.all(np.isfinite(got))
        np.testing.assert_allclose(got, np.asarray(ref[bi]), rtol=2e-1, atol=2e-1)

    print("KERNEL_OK")
</pallas_src>

<mosaic_0001>
module attributes {stable_mosaic.version = 11 : i64} {
  func.func @_self_attn_kernel(%arg0: memref<384x64xf32, #tpu.memory_space<vmem>>, %arg1: memref<64x64xbf16, #tpu.memory_space<vmem>>, %arg2: memref<1x64xf32, #tpu.memory_space<vmem>>, %arg3: memref<64x64xbf16, #tpu.memory_space<vmem>>, %arg4: memref<1x64xf32, #tpu.memory_space<vmem>>, %arg5: memref<64x64xbf16, #tpu.memory_space<vmem>>, %arg6: memref<1x64xf32, #tpu.memory_space<vmem>>, %arg7: memref<64x64xbf16, #tpu.memory_space<vmem>>, %arg8: memref<1x64xf32, #tpu.memory_space<vmem>>, %arg9: memref<64x64xbf16, #tpu.memory_space<vmem>>, %arg10: memref<1x64xf32, #tpu.memory_space<vmem>>, %arg11: memref<3x64xf32, #tpu.memory_space<vmem>>, %arg12: memref<3x64xf32, #tpu.memory_space<vmem>>, %arg13: memref<384x64xf32, #tpu.memory_space<vmem>>, %arg14: memref<384x64xbf16, #tpu.memory_space<vmem>>) attributes {dimension_semantics = [], scalar_prefetch = 0 : i64, scratch_operands = 0 : i64, tpu.core_type = #tpu.core_type<tc>} {
    %cst = arith.constant 6.400000e+01 : f32
    %0 = math.sqrt %cst : f32
    %cst_0 = arith.constant 1.000000e+00 : f32
    %1 = arith.divf %cst_0, %0 : f32
    %c0 = arith.constant 0 : index
    %c0_1 = arith.constant 0 : index
    %2 = vector.load %arg0[%c0, %c0_1] : memref<384x64xf32, #tpu.memory_space<vmem>>, vector<384x64xf32>
    %c0_2 = arith.constant 0 : index
    %c0_3 = arith.constant 0 : index
    %3 = vector.load %arg1[%c0_2, %c0_3] : memref<64x64xbf16, #tpu.memory_space<vmem>>, vector<64x64xbf16>
    %4 = arith.truncf %2 : vector<384x64xf32> to vector<384x64xbf16>
    %cst_4 = arith.constant dense<0.000000e+00> : vector<384x64xf32>
    %5 = tpu.matmul %4, %3, %cst_4 {dimension_numbers = #tpu.dot_dimension_numbers<[1], [0], [0], [1], [0, 0, 1, 1], [], []>} : vector<384x64xbf16>, vector<64x64xbf16>, vector<384x64xf32> -> vector<384x64xf32>
    %c0_5 = arith.constant 0 : index
    %c0_6 = arith.constant 0 : index
    %6 = vector.load %arg2[%c0_5, %c0_6] : memref<1x64xf32, #tpu.memory_space<vmem>>, vector<1x64xf32>
    %7 = vector.broadcast %6 : vector<1x64xf32> to vector<384x64xf32>
    %8 = arith.addf %5, %7 : vector<384x64xf32>
    %9 = vector.broadcast %1 : f32 to vector<384x64xf32>
    %10 = arith.mulf %8, %9 : vector<384x64xf32>
    %c0_7 = arith.constant 0 : index
    %c0_8 = arith.constant 0 : index
    %11 = vector.load %arg3[%c0_7, %c0_8] : memref<64x64xbf16, #tpu.memory_space<vmem>>, vector<64x64xbf16>
    %12 = arith.truncf %2 : vector<384x64xf32> to vector<384x64xbf16>
    %cst_9 = arith.constant dense<0.000000e+00> : vector<384x64xf32>
    %13 = tpu.matmul %12, %11, %cst_9 {dimension_numbers = #tpu.dot_dimension_numbers<[1], [0], [0], [1], [0, 0, 1, 1], [], []>} : vector<384x64xbf16>, vector<64x64xbf16>, vector<384x64xf32> -> vector<384x64xf32>
    %c0_10 = arith.constant 0 : index
    %c0_11 = arith.constant 0 : index
    %14 = vector.load %arg4[%c0_10, %c0_11] : memref<1x64xf32, #tpu.memory_space<vmem>>, vector<1x64xf32>
    %15 = vector.broadcast %14 : vector<1x64xf32> to vector<384x64xf32>
    %16 = arith.addf %13, %15 : vector<384x64xf32>
    %c0_12 = arith.constant 0 : index
    %c0_13 = arith.constant 0 : index
    %17 = vector.load %arg5[%c0_12, %c0_13] : memref<64x64xbf16, #tpu.memory_space<vmem>>, vector<64x64xbf16>
    %18 = arith.truncf %2 : vector<384x64xf32> to vector<384x64xbf16>
    %cst_14 = arith.constant dense<0.000000e+00> : vector<384x64xf32>
    %19 = tpu.matmul %18, %17, %cst_14 {dimension_numbers = #tpu.dot_dimension_numbers<[1], [0], [0], [1], [0, 0, 1, 1], [], []>} : vector<384x64xbf16>, vector<64x64xbf16>, vector<384x64xf32> -> vector<384x64xf32>
    %c0_15 = arith.constant 0 : index
    %c0_16 = arith.constant 0 : index
    %20 = vector.load %arg6[%c0_15, %c0_16] : memref<1x64xf32, #tpu.memory_space<vmem>>, vector<1x64xf32>
    %21 = vector.broadcast %20 : vector<1x64xf32> to vector<384x64xf32>
    %22 = arith.addf %19, %21 : vector<384x64xf32>
    %23 = arith.truncf %10 : vector<384x64xf32> to vector<384x64xbf16>
    %24 = arith.truncf %16 : vector<384x64xf32> to vector<384x64xbf16>
    %cst_17 = arith.constant dense<0.000000e+00> : vector<384x384xf32>
    %25 = tpu.matmul %23, %24, %cst_17 {dimension_numbers = #tpu.dot_dimension_numbers<[1], [1], [0], [0], [0, 0, 1, 0], [], []>} : vector<384x64xbf16>, vector<384x64xbf16>, vector<384x384xf32> -> vector<384x384xf32>
    %26 = tpu.iota {dimensions = array<i32: 1>} : vector<1x384xi32>
    %c313_i32 = arith.constant 313 : i32
    %27 = vector.broadcast %c313_i32 : i32 to vector<1x384xi32>
    %28 = arith.cmpi slt, %26, %27 : vector<1x384xi32>
    %cst_18 = arith.constant 0.000000e+00 : f32
    %cst_19 = arith.constant -1.000000e+30 : f32
    %29 = vector.broadcast %cst_18 : f32 to vector<1x384xf32>
    %30 = vector.broadcast %cst_19 : f32 to vector<1x384xf32>
    %31 = arith.select %28, %29, %30 : vector<1x384xi1>, vector<1x384xf32>
    %32 = vector.broadcast %31 : vector<1x384xf32> to vector<384x384xf32>
    %33 = arith.addf %25, %32 : vector<384x384xf32>
    %cst_20 = arith.constant dense<0xFF800000> : vector<384xf32>
    %34 = vector.multi_reduction <maximumf>, %33, %cst_20 [1] : vector<384x384xf32> to vector<384xf32>
    %35 = vector.shape_cast %34 : vector<384xf32> to vector<384x1xf32>
    %36 = vector.broadcast %35 : vector<384x1xf32> to vector<384x384xf32>
    %37 = arith.subf %33, %36 : vector<384x384xf32>
    %38 = math.exp %37 : vector<384x384xf32>
    %cst_21 = arith.constant dense<0.000000e+00> : vector<384xf32>
    %39 = vector.multi_reduction <add>, %38, %cst_21 [1] : vector<384x384xf32> to vector<384xf32>
    %40 = vector.shape_cast %39 : vector<384xf32> to vector<384x1xf32>
    %41 = vector.broadcast %40 : vector<384x1xf32> to vector<384x384xf32>
    %42 = arith.divf %38, %41 : vector<384x384xf32>
    %43 = arith.truncf %42 : vector<384x384xf32> to vector<384x384xbf16>
    %44 = arith.truncf %22 : vector<384x64xf32> to vector<384x64xbf16>
    %cst_22 = arith.constant dense<0.000000e+00> : vector<384x64xf32>
    %45 = tpu.matmul %43, %44, %cst_22 {dimension_numbers = #tpu.dot_dimension_numbers<[1], [0], [0], [1], [0, 0, 1, 1], [], []>} : vector<384x384xbf16>, vector<384x64xbf16>, vector<384x64xf32> -> vector<384x64xf32>
    %c0_23 = arith.constant 0 : index
    %c0_24 = arith.constant 0 : index
    %46 = vector.load %arg7[%c0_23, %c0_24] : memref<64x64xbf16, #tpu.memory_space<vmem>>, vector<64x64xbf16>
    %47 = arith.truncf %45 : vector<384x64xf32> to vector<384x64xbf16>
    %cst_25 = arith.constant dense<0.000000e+00> : vector<384x64xf32>
    %48 = tpu.matmul %47, %46, %cst_25 {dimension_numbers = #tpu.dot_dimension_numbers<[1], [0], [0], [1], [0, 0, 1, 1], [], []>} : vector<384x64xbf16>, vector<64x64xbf16>, vector<384x64xf32> -> vector<384x64xf32>
    %c0_26 = arith.constant 0 : index
    %c0_27 = arith.constant 0 : index
    %49 = vector.load %arg8[%c0_26, %c0_27] : memref<1x64xf32, #tpu.memory_space<vmem>>, vector<1x64xf32>
    %50 = vector.broadcast %49 : vector<1x64xf32> to vector<384x64xf32>
    %51 = arith.addf %48, %50 : vector<384x64xf32>
    %52 = arith.addf %2, %51 : vector<384x64xf32>
    %c0_28 = arith.constant 0 : index
    %c0_29 = arith.constant 0 : index
    %53 = vector.load %arg11[%c0_28, %c0_29] : memref<3x64xf32, #tpu.memory_space<vmem>>, vector<1x64xf32>
    %54 = vector.shape_cast %53 : vector<1x64xf32> to vector<64xf32>
    %c0_30 = arith.constant 0 : index
    %c0_31 = arith.constant 0 : index
    %55 = vector.load %arg12[%c0_30, %c0_31] : memref<3x64xf32, #tpu.memory_space<vmem>>, vector<1x64xf32>
    %56 = vector.shape_cast %55 : vector<1x64xf32> to vector<64xf32>
    %cst_32 = arith.constant dense<0.000000e+00> : vector<384xf32>
    %57 = vector.multi_reduction <add>, %52, %cst_32 [1] : vector<384x64xf32> to vector<384xf32>
    %58 = vector.shape_cast %57 : vector<384xf32> to vector<384x1xf32>
    %cst_33 = arith.constant 6.400000e+01 : f32
    %59 = vector.broadcast %cst_33 : f32 to vector<384x1xf32>
    %60 = arith.divf %58, %59 : vector<384x1xf32>
    %61 = vector.broadcast %60 : vector<384x1xf32> to vector<384x64xf32>
    %62 = arith.subf %52, %61 : vector<384x64xf32>
    %63 = arith.mulf %62, %62 : vector<384x64xf32>
    %cst_34 = arith.constant dense<0.000000e+00> : vector<384xf32>
    %64 = vector.multi_reduction <add>, %63, %cst_34 [1] : vector<384x64xf32> to vector<384xf32>
    %65 = vector.shape_cast %64 : vector<384xf32> to vector<384x1xf32>
    %cst_35 = arith.constant 6.400000e+01 : f32
    %66 = vector.broadcast %cst_35 : f32 to vector<384x1xf32>
    %67 = arith.divf %65, %66 : vector<384x1xf32>
    %cst_36 = arith.constant 9.99999974E-6 : f32
    %68 = vector.broadcast %cst_36 : f32 to vector<384x1xf32>
    %69 = arith.addf %67, %68 : vector<384x1xf32>
    %70 = math.rsqrt %69 : vector<384x1xf32>
    %71 = vector.broadcast %70 : vector<384x1xf32> to vector<384x64xf32>
    %72 = arith.mulf %62, %71 : vector<384x64xf32>
    %73 = vector.shape_cast %54 : vector<64xf32> to vector<1x64xf32>
    %74 = vector.broadcast %73 : vector<1x64xf32> to vector<384x64xf32>
    %75 = arith.mulf %72, %74 : vector<384x64xf32>
    %76 = vector.shape_cast %56 : vector<64xf32> to vector<1x64xf32>
    %77 = vector.broadcast %76 : vector<1x64xf32> to vector<384x64xf32>
    %78 = arith.addf %75, %77 : vector<384x64xf32>
    %c0_37 = arith.constant 0 : index
    %c0_38 = arith.constant 0 : index
    %79 = vector.load %arg13[%c0_37, %c0_38] : memref<384x64xf32, #tpu.memory_space<vmem>>, vector<384x64xf32>
    tpu.vector_store %arg13[%c0_37, %c0_38], %78 {strides = array<i32>} : memref<384x64xf32, #tpu.memory_space<vmem>>, vector<384x64xf32>,
    %c0_39 = arith.constant 0 : index
    %c0_40 = arith.constant 0 : index
    %80 = vector.load %arg9[%c0_39, %c0_40] : memref<64x64xbf16, #tpu.memory_space<vmem>>, vector<64x64xbf16>
    %81 = arith.truncf %78 : vector<384x64xf32> to vector<384x64xbf16>
    %cst_41 = arith.constant dense<0.000000e+00> : vector<384x64xf32>
    %82 = tpu.matmul %81, %80, %cst_41 {dimension_numbers = #tpu.dot_dimension_numbers<[1], [0], [0], [1], [0, 0, 1, 1], [], []>} : vector<384x64xbf16>, vector<64x64xbf16>, vector<384x64xf32> -> vector<384x64xf32>
    %c0_42 = arith.constant 0 : index
    %c0_43 = arith.constant 0 : index
    %83 = vector.load %arg10[%c0_42, %c0_43] : memref<1x64xf32, #tpu.memory_space<vmem>>, vector<1x64xf32>
    %84 = vector.broadcast %83 : vector<1x64xf32> to vector<384x64xf32>
    %85 = arith.addf %82, %84 : vector<384x64xf32>
    %86 = vector.broadcast %1 : f32 to vector<384x64xf32>
    %87 = arith.mulf %85, %86 : vector<384x64xf32>
    %88 = arith.truncf %87 : vector<384x64xf32> to vector<384x64xbf16>
    %c0_44 = arith.constant 0 : index
    %c0_45 = arith.constant 0 : index
    %89 = vector.load %arg14[%c0_44, %c0_45] : memref<384x64xbf16, #tpu.memory_space<vmem>>, vector<384x64xbf16>
    tpu.vector_store %arg14[%c0_44, %c0_45], %88 {strides = array<i32>} : memref<384x64xbf16, #tpu.memory_space<vmem>>, vector<384x64xbf16>,
    return
  }
}

</mosaic_0001>

<llo_original>
// kernel: tpu_custom_call.1
$region0: #{tpu_custom_call.1}
  #allocation0 [shape = 'u32[]', space=smem, size = 0x4, offset = 0x4, fixed_abs, tag = 'smem constant byte address 0x4 - core index']
  #allocation1 [shape = 'u32[144,128]{1,0:T(1,128)}', space=vmem, size = 0x12000, scoped, tag = 'internal scratch']
  %s0 = inlined_call_operand.vmem [shape: f32[384,64], index: 0, kind: input, shape index: {}]
  %s1 = inlined_call_operand.vmem [shape: bf16[64,64], index: 1, kind: input, shape index: {}]
  %s2 = inlined_call_operand.vmem [shape: f32[1,64], index: 2, kind: input, shape index: {}]
  %s3 = inlined_call_operand.vmem [shape: bf16[64,64], index: 3, kind: input, shape index: {}]
  %s4 = inlined_call_operand.vmem [shape: f32[1,64], index: 4, kind: input, shape index: {}]
  %s5 = inlined_call_operand.vmem [shape: bf16[64,64], index: 5, kind: input, shape index: {}]
  %s6 = inlined_call_operand.vmem [shape: f32[1,64], index: 6, kind: input, shape index: {}]
  %s7 = inlined_call_operand.vmem [shape: bf16[64,64], index: 7, kind: input, shape index: {}]
  %s8 = inlined_call_operand.vmem [shape: f32[1,64], index: 8, kind: input, shape index: {}]
  %s9 = inlined_call_operand.vmem [shape: bf16[64,64], index: 9, kind: input, shape index: {}]
  %s10 = inlined_call_operand.vmem [shape: f32[1,64], index: 10, kind: input, shape index: {}]
  %s11 = inlined_call_operand.vmem [shape: f32[3,64], index: 11, kind: input, shape index: {}]
  %s12 = inlined_call_operand.vmem [shape: f32[3,64], index: 12, kind: input, shape index: {}]
  %s13 = inlined_call_operand.vmem [shape: f32[384,64], index: 13, kind: output, shape index: {0}]
  %s14 = inlined_call_operand.vmem [shape: bf16[384,64], index: 14, kind: output, shape index: {1}]
  %15 = xla_tuple %s13, %s14
  %s16 = sld [smem:[#allocation0]]
  $region70: #{tpu_custom_call.1} parent=0
    _
  %s18 = ssub.s32 1, %s16
  %s19 = scalar_select 0, %s18, %s16
  // Predicated region
  $region2: #{tpu_custom_call.1} parent=0 // pred_check
    _
  $region3: #{tpu_custom_call.1} parent=0 // pred_check_branch
    %21 = sbr.rel (0) target = $region5
  $region4: #{tpu_custom_call.1} parent=0 // pred_region
    _
  $region5: #{tpu_custom_call.1} parent=0 // pred_fallthru
    _
  // Predicated region
  $region6: #{tpu_custom_call.1} parent=0 // pred_check
    _
  $region7: #{tpu_custom_call.1} parent=0 // pred_check_branch
    %23 = sbr.rel (0) target = $region9
  $region8: #{tpu_custom_call.1} parent=0 // pred_region
    _
  $region9: #{tpu_custom_call.1} parent=0 // pred_fallthru
    _
  // Predicated region
  $region10: #{tpu_custom_call.1} parent=0 // pred_check
    _
  $region11: #{tpu_custom_call.1} parent=0 // pred_check_branch
    %25 = sbr.rel (0) target = $region13
  $region12: #{tpu_custom_call.1} parent=0 // pred_region
    _
  $region13: #{tpu_custom_call.1} parent=0 // pred_fallthru
    _
  // Predicated region
  $region14: #{tpu_custom_call.1} parent=0 // pred_check
    _
  $region15: #{tpu_custom_call.1} parent=0 // pred_check_branch
    %27 = sbr.rel (0) target = $region17
  $region16: #{tpu_custom_call.1} parent=0 // pred_region
    _
  $region17: #{tpu_custom_call.1} parent=0 // pred_fallthru
    _
  // Predicated region
  $region18: #{tpu_custom_call.1} parent=0 // pred_check
    _
  $region19: #{tpu_custom_call.1} parent=0 // pred_check_branch
    %29 = sbr.rel (0) target = $region21
  $region20: #{tpu_custom_call.1} parent=0 // pred_region
    _
  $region21: #{tpu_custom_call.1} parent=0 // pred_fallthru
    _
  // Predicated region
  $region22: #{tpu_custom_call.1} parent=0 // pred_check
    _
  $region23: #{tpu_custom_call.1} parent=0 // pred_check_branch
    %31 = sbr.rel (0) target = $region25
  $region24: #{tpu_custom_call.1} parent=0 // pred_region
    _
  $region25: #{tpu_custom_call.1} parent=0 // pred_fallthru
    _
  // Predicated region
  $region26: #{tpu_custom_call.1} parent=0 // pred_check
    _
  $region27: #{tpu_custom_call.1} parent=0 // pred_check_branch
    %33 = sbr.rel (0) target = $region29
  $region28: #{tpu_custom_call.1} parent=0 // pred_region
    _
  $region29: #{tpu_custom_call.1} parent=0 // pred_fallthru
    _
  // Predicated region
  $region30: #{tpu_custom_call.1} parent=0 // pred_check
    _
  $region31: #{tpu_custom_call.1} parent=0 // pred_check_branch
    %35 = sbr.rel (0) target = $region33
  $region32: #{tpu_custom_call.1} parent=0 // pred_region
    _
  $region33: #{tpu_custom_call.1} parent=0 // pred_fallthru
    _
  // Predicated region
  $region34: #{tpu_custom_call.1} parent=0 // pred_check
    _
  $region35: #{tpu_custom_call.1} parent=0 // pred_check_branch
    %37 = sbr.rel (0) target = $region37
  $region36: #{tpu_custom_call.1} parent=0 // pred_region
    _
  $region37: #{tpu_custom_call.1} parent=0 // pred_fallthru
    _
  // Predicated region
  $region38: #{tpu_custom_call.1} parent=0 // pred_check
    _
  $region39: #{tpu_custom_call.1} parent=0 // pred_check_branch
    %39 = sbr.rel (0) target = $region41
  $region40: #{tpu_custom_call.1} parent=0 // pred_region
    _
  $region41: #{tpu_custom_call.1} parent=0 // pred_fallthru
    _
  // Predicated region
  $region42: #{tpu_custom_call.1} parent=0 // pred_check
    _
  $region43: #{tpu_custom_call.1} parent=0 // pred_check_branch
    %41 = sbr.rel (0) target = $region45
  $region44: #{tpu_custom_call.1} parent=0 // pred_region
    _
  $region45: #{tpu_custom_call.1} parent=0 // pred_fallthru
    _
  // Predicated region
  $region46: #{tpu_custom_call.1} parent=0 // pred_check
    _
  $region47: #{tpu_custom_call.1} parent=0 // pred_check_branch
    %43 = sbr.rel (0) target = $region49
  $region48: #{tpu_custom_call.1} parent=0 // pred_region
    _
  $region49: #{tpu_custom_call.1} parent=0 // pred_fallthru
    _
  // Predicated region
  $region50: #{tpu_custom_call.1} parent=0 // pred_check
    _
  $region51: #{tpu_custom_call.1} parent=0 // pred_check_branch
    %45 = sbr.rel (0) target = $region53
  $region52: #{tpu_custom_call.1} parent=0 // pred_region
    _
  $region53: #{tpu_custom_call.1} parent=0 // pred_fallthru
    _
  %v47 = vld [vmem:[%s0] sm:$0xff]
  %v48 = vld [vmem:[%s0 + $0x8] sm:$0xff]
  %v49 = vld [vmem:[%s0 + $0x10] sm:$0xff]
  %v50 = vld [vmem:[%s0 + $0x18] sm:$0xff]
  %v51 = vld [vmem:[%s0 + $0x20] sm:$0xff]
  %v52 = vld [vmem:[%s0 + $0x28] sm:$0xff]
  %v53 = vld [vmem:[%s0 + $0x30] sm:$0xff]
  %v54 = vld [vmem:[%s0 + $0x38] sm:$0xff]
  %v55 = vld [vmem:[%s0 + $0x40] sm:$0xff]
  %v56 = vld [vmem:[%s0 + $0x48] sm:$0xff]
  %v57 = vld [vmem:[%s0 + $0x50] sm:$0xff]
  %v58 = vld [vmem:[%s0 + $0x58] sm:$0xff]
  %v59 = vld [vmem:[%s0 + $0x60] sm:$0xff]
  %v60 = vld [vmem:[%s0 + $0x68] sm:$0xff]
  %v61 = vld [vmem:[%s0 + $0x70] sm:$0xff]
  %v62 = vld [vmem:[%s0 + $0x78] sm:$0xff]
  %v63 = vld [vmem:[%s0 + $0x80] sm:$0xff]
  %v64 = vld [vmem:[%s0 + $0x88] sm:$0xff]
  %v65 = vld [vmem:[%s0 + $0x90] sm:$0xff]
  %v66 = vld [vmem:[%s0 + $0x98] sm:$0xff]
  %v67 = vld [vmem:[%s0 + $0xa0] sm:$0xff]
  %v68 = vld [vmem:[%s0 + $0xa8] sm:$0xff]
  %v69 = vld [vmem:[%s0 + $0xb0] sm:$0xff]
  %v70 = vld [vmem:[%s0 + $0xb8] sm:$0xff]
  %v71 = vld [vmem:[%s0 + $0xc0] sm:$0xff]
  %v72 = vld [vmem:[%s0 + $0xc8] sm:$0xff]
  %v73 = vld [vmem:[%s0 + $0xd0] sm:$0xff]
  %v74 = vld [vmem:[%s0 + $0xd8] sm:$0xff]
  %v75 = vld [vmem:[%s0 + $0xe0] sm:$0xff]
  %v76 = vld [vmem:[%s0 + $0xe8] sm:$0xff]
  %v77 = vld [vmem:[%s0 + $0xf0] sm:$0xff]
  %v78 = vld [vmem:[%s0 + $0xf8] sm:$0xff]
  %v79 = vld [vmem:[%s0 + $0x100] sm:$0xff]
  %v80 = vld [vmem:[%s0 + $0x108] sm:$0xff]
  %v81 = vld [vmem:[%s0 + $0x110] sm:$0xff]
  %v82 = vld [vmem:[%s0 + $0x118] sm:$0xff]
  %v83 = vld [vmem:[%s0 + $0x120] sm:$0xff]
  %v84 = vld [vmem:[%s0 + $0x128] sm:$0xff]
  %v85 = vld [vmem:[%s0 + $0x130] sm:$0xff]
  %v86 = vld [vmem:[%s0 + $0x138] sm:$0xff]
  %v87 = vld [vmem:[%s0 + $0x140] sm:$0xff]
  %v88 = vld [vmem:[%s0 + $0x148] sm:$0xff]
  %v89 = vld [vmem:[%s0 + $0x150] sm:$0xff]
  %v90 = vld [vmem:[%s0 + $0x158] sm:$0xff]
  %v91 = vld [vmem:[%s0 + $0x160] sm:$0xff]
  %v92 = vld [vmem:[%s0 + $0x168] sm:$0xff]
  %v93 = vld [vmem:[%s0 + $0x170] sm:$0xff]
  %v94 = vld [vmem:[%s0 + $0x178] sm:$0xff]
  %v95 = vld [vmem:[%s1] sm:$0xf]
  %v96 = vld [vmem:[%s1 + $0x4] sm:$0xf]
  %v97 = vld [vmem:[%s1 + $0x8] sm:$0xf]
  %v98 = vld [vmem:[%s1 + $0xc] sm:$0xf]
  %v99 = vld [vmem:[%s1 + $0x10] sm:$0xf]
  %v100 = vld [vmem:[%s1 + $0x14] sm:$0xf]
  %v101 = vld [vmem:[%s1 + $0x18] sm:$0xf]
  %v102 = vld [vmem:[%s1 + $0x1c] sm:$0xf]
  %v103 = vpack.c.bf16 %v48, %v47
  %v104 = vpack.c.bf16 %v50, %v49
  %v105 = vpack.c.bf16 %v52, %v51
  %v106 = vpack.c.bf16 %v54, %v53
  %v107 = vpack.c.bf16 %v56, %v55
  %v108 = vpack.c.bf16 %v58, %v57
  %v109 = vpack.c.bf16 %v60, %v59
  %v110 = vpack.c.bf16 %v62, %v61
  %v111 = vpack.c.bf16 %v64, %v63
  %v112 = vpack.c.bf16 %v66, %v65
  %v113 = vpack.c.bf16 %v68, %v67
  %v114 = vpack.c.bf16 %v70, %v69
  %v115 = vpack.c.bf16 %v72, %v71
  %v116 = vpack.c.bf16 %v74, %v73
  %v117 = vpack.c.bf16 %v76, %v75
  %v118 = vpack.c.bf16 %v78, %v77
  %v119 = vpack.c.bf16 %v80, %v79
  %v120 = vpack.c.bf16 %v82, %v81
  %v121 = vpack.c.bf16 %v84, %v83
  %v122 = vpack.c.bf16 %v86, %v85
  %v123 = vpack.c.bf16 %v88, %v87
  %v124 = vpack.c.bf16 %v90, %v89
  %v125 = vpack.c.bf16 %v92, %v91
  %v126 = vpack.c.bf16 %v94, %v93
  %v127 = vld [vmem:[%s2] sm:$0x1]
  %v129 = vlaneseq
  %v130 = vshrl.u32 %v129, 7
  %v131 = vsub.s32 0, %v130
  %v132 = vrot.slane %v127, %v131
  %v142 = vunpack.c.l.b16 %v95
  %v143 = vunpack.c.l.b16 %v96
  %v144 = vunpack.c.l.b16 %v97
  %v145 = vunpack.c.l.b16 %v98
  %v146 = vunpack.c.l.b16 %v99
  %v147 = vunpack.c.l.b16 %v100
  %v148 = vunpack.c.l.b16 %v101
  %v149 = vunpack.c.l.b16 %v102
  %v150 = vpack.c.b16 %v143, %v142
  %v151 = vpack.c.b16 %v145, %v144
  %v152 = vpack.c.b16 %v147, %v146
  %v153 = vpack.c.b16 %v149, %v148
  %vm158 = vcmask 523264
  %v160 = vsel %vm158, %v103, 0
  %v163 = vsel %vm158, %v104, 0
  %v166 = vsel %vm158, %v105, 0
  %v169 = vsel %vm158, %v106, 0
  %v172 = vsel %vm158, %v107, 0
  %v175 = vsel %vm158, %v108, 0
  %v178 = vsel %vm158, %v109, 0
  %v181 = vsel %vm158, %v110, 0
  %v184 = vsel %vm158, %v111, 0
  %v187 = vsel %vm158, %v112, 0
  %v190 = vsel %vm158, %v113, 0
  %v193 = vsel %vm158, %v114, 0
  %v196 = vsel %vm158, %v115, 0
  %v199 = vsel %vm158, %v116, 0
  %v202 = vsel %vm158, %v117, 0
  %v205 = vsel %vm158, %v118, 0
  %v208 = vsel %vm158, %v119, 0
  %v211 = vsel %vm158, %v120, 0
  %v214 = vsel %vm158, %v121, 0
  %v217 = vsel %vm158, %v122, 0
  %v220 = vsel %vm158, %v123, 0
  %v223 = vsel %vm158, %v124, 0
  %v226 = vsel %vm158, %v125, 0
  %v229 = vsel %vm158, %v126, 0
  %231 = vmatprep.subr.bf16.mxu0 0
  %232 = vmatpush1.bf16.msra.mxu0 0
  %233 = vmatprep.subr.bf16.mxu0 0
  %234 = vmatpush1.bf16.msra.mxu0 0
  %235 = vmatprep.subr.bf16.mxu0 0
  %236 = vmatpush1.bf16.msra.mxu0 0
  %237 = vmatprep.subr.bf16.mxu0 0
  %238 = vmatpush1.bf16.msra.mxu0 0
  %239 = vmatprep.subr.bf16.mxu0 0
  %240 = vmatpush1.bf16.msra.mxu0 %v153
  %241 = vmatprep.subr.bf16.mxu0 0
  %242 = vmatpush1.bf16.msra.mxu0 %v152
  %243 = vmatprep.subr.bf16.mxu0 0
  %244 = vmatpush1.bf16.msra.mxu0 %v151
  %245 = vmatprep.subr.bf16.mxu0 0
  %246 = vmatpush1.bf16.msra.mxu0 %v150
  %247 = vmatprep.subr.bf16.mxu0 0
  %248 = vmatpush2.bf16.msra.mxu0 0
  %249 = vmatprep.subr.bf16.mxu0 0
  %250 = vmatpush2.bf16.msra.mxu0 0
  %251 = vmatprep.subr.bf16.mxu0 0
  %252 = vmatpush2.bf16.msra.mxu0 0
  %253 = vmatprep.subr.bf16.mxu0 0
  %254 = vmatpush2.bf16.msra.mxu0 0
  %255 = vmatprep.subr.bf16.mxu0 0
  %256 = vmatpush2.bf16.msra.mxu0 0
  %257 = vmatprep.subr.bf16.mxu0 0
  %258 = vmatpush2.bf16.msra.mxu0 0
  %259 = vmatprep.subr.bf16.mxu0 0
  %260 = vmatpush2.bf16.msra.mxu0 0
  %261 = vmatprep.subr.bf16.mxu0 0
  %262 = vmatpush2.bf16.msra.mxu0 0
  %263 = vmatprep.mubr.bf16.mxu0 0
  %264 = vmatmul.mubr.bf16.gmra.mxu0 %v160
  %v265 = vpop.f32.mrf.mxu0
  %v266 = vadd.f32 %v132, %v265
  %v267 = vpop.f32.mrf.mxu0
  %v268 = vpop.f32.mrf.mxu0
  %v269 = vadd.f32 %v132, %v268
  %v270 = vpop.f32.mrf.mxu0
  %271 = vmatprep.mubr.bf16.mxu0 0
  %272 = vmatmul.mubr.bf16.gmra.mxu0 %v163
  %v273 = vpop.f32.mrf.mxu0
  %v274 = vadd.f32 %v132, %v273
  %v275 = vpop.f32.mrf.mxu0
  %v276 = vpop.f32.mrf.mxu0
  %v277 = vadd.f32 %v132, %v276
  %v278 = vpop.f32.mrf.mxu0
  %279 = vmatprep.mubr.bf16.mxu0 0
  %280 = vmatmul.mubr.bf16.gmra.mxu0 %v166
  %v281 = vpop.f32.mrf.mxu0
  %v282 = vadd.f32 %v132, %v281
  %v283 = vpop.f32.mrf.mxu0
  %v284 = vpop.f32.mrf.mxu0
  %v285 = vadd.f32 %v132, %v284
  %v286 = vpop.f32.mrf.mxu0
  %287 = vmatprep.mubr.bf16.mxu0 0
  %288 = vmatmul.mubr.bf16.gmra.mxu0 %v169
  %v289 = vpop.f32.mrf.mxu0
  %v290 = vadd.f32 %v132, %v289
  %v291 = vpop.f32.mrf.mxu0
  %v292 = vpop.f32.mrf.mxu0
  %v293 = vadd.f32 %v132, %v292
  %v294 = vpop.f32.mrf.mxu0
  %295 = vmatprep.mubr.bf16.mxu0 0
  %296 = vmatmul.mubr.bf16.gmra.mxu0 %v172
  %v297 = vpop.f32.mrf.mxu0
  %v298 = vadd.f32 %v132, %v297
  %v299 = vpop.f32.mrf.mxu0
  %v300 = vpop.f32.mrf.mxu0
  %v301 = vadd.f32 %v132, %v300
  %v302 = vpop.f32.mrf.mxu0
  %303 = vmatprep.mubr.bf16.mxu0 0
  %304 = vmatmul.mubr.bf16.gmra.mxu0 %v175
  %v305 = vpop.f32.mrf.mxu0
  %v306 = vadd.f32 %v132, %v305
  %v307 = vpop.f32.mrf.mxu0
  %v308 = vpop.f32.mrf.mxu0
  %v309 = vadd.f32 %v132, %v308
  %v310 = vpop.f32.mrf.mxu0
  %311 = vmatprep.mubr.bf16.mxu0 0
  %312 = vmatmul.mubr.bf16.gmra.mxu0 %v178
  %v313 = vpop.f32.mrf.mxu0
  %v314 = vadd.f32 %v132, %v313
  %v315 = vpop.f32.mrf.mxu0
  %v316 = vpop.f32.mrf.mxu0
  %v317 = vadd.f32 %v132, %v316
  %v318 = vpop.f32.mrf.mxu0
  %319 = vmatprep.mubr.bf16.mxu0 0
  %320 = vmatmul.mubr.bf16.gmra.mxu0 %v181
  %v321 = vpop.f32.mrf.mxu0
  %v322 = vadd.f32 %v132, %v321
  %v323 = vpop.f32.mrf.mxu0
  %v324 = vpop.f32.mrf.mxu0
  %v325 = vadd.f32 %v132, %v324
  %v326 = vpop.f32.mrf.mxu0
  %327 = vmatprep.mubr.bf16.mxu0 0
  %328 = vmatmul.mubr.bf16.gmra.mxu0 %v184
  %v329 = vpop.f32.mrf.mxu0
  %v330 = vadd.f32 %v132, %v329
  %v331 = vpop.f32.mrf.mxu0
  %v332 = vpop.f32.mrf.mxu0
  %v333 = vadd.f32 %v132, %v332
  %v334 = vpop.f32.mrf.mxu0
  %335 = vmatprep.mubr.bf16.mxu0 0
  %336 = vmatmul.mubr.bf16.gmra.mxu0 %v187
  %v337 = vpop.f32.mrf.mxu0
  %v338 = vadd.f32 %v132, %v337
  %v339 = vpop.f32.mrf.mxu0
  %v340 = vpop.f32.mrf.mxu0
  %v341 = vadd.f32 %v132, %v340
  %v342 = vpop.f32.mrf.mxu0
  %343 = vmatprep.mubr.bf16.mxu0 0
  %344 = vmatmul.mubr.bf16.gmra.mxu0 %v190
  %v345 = vpop.f32.mrf.mxu0
  %v346 = vadd.f32 %v132, %v345
  %v347 = vpop.f32.mrf.mxu0
  %v348 = vpop.f32.mrf.mxu0
  %v349 = vadd.f32 %v132, %v348
  %v350 = vpop.f32.mrf.mxu0
  %351 = vmatprep.mubr.bf16.mxu0 0
  %352 = vmatmul.mubr.bf16.gmra.mxu0 %v193
  %v353 = vpop.f32.mrf.mxu0
  %v354 = vadd.f32 %v132, %v353
  %v355 = vpop.f32.mrf.mxu0
  %v356 = vpop.f32.mrf.mxu0
  %v357 = vadd.f32 %v132, %v356
  %v358 = vpop.f32.mrf.mxu0
  %359 = vmatprep.mubr.bf16.mxu0 0
  %360 = vmatmul.mubr.bf16.gmra.mxu0 %v196
  %v361 = vpop.f32.mrf.mxu0
  %v362 = vadd.f32 %v132, %v361
  %v363 = vpop.f32.mrf.mxu0
  %v364 = vpop.f32.mrf.mxu0
  %v365 = vadd.f32 %v132, %v364
  %v366 = vpop.f32.mrf.mxu0
  %367 = vmatprep.mubr.bf16.mxu0 0
  %368 = vmatmul.mubr.bf16.gmra.mxu0 %v199
  %v369 = vpop.f32.mrf.mxu0
  %v370 = vadd.f32 %v132, %v369
  %v371 = vpop.f32.mrf.mxu0
  %v372 = vpop.f32.mrf.mxu0
  %v373 = vadd.f32 %v132, %v372
  %v374 = vpop.f32.mrf.mxu0
  %375 = vmatprep.mubr.bf16.mxu0 0
  %376 = vmatmul.mubr.bf16.gmra.mxu0 %v202
  %v377 = vpop.f32.mrf.mxu0
  %v378 = vadd.f32 %v132, %v377
  %v379 = vpop.f32.mrf.mxu0
  %v380 = vpop.f32.mrf.mxu0
  %v381 = vadd.f32 %v132, %v380
  %v382 = vpop.f32.mrf.mxu0
  %383 = vmatprep.mubr.bf16.mxu0 0
  %384 = vmatmul.mubr.bf16.gmra.mxu0 %v205
  %v385 = vpop.f32.mrf.mxu0
  %v386 = vadd.f32 %v132, %v385
  %v387 = vpop.f32.mrf.mxu0
  %v388 = vpop.f32.mrf.mxu0
  %v389 = vadd.f32 %v132, %v388
  %v390 = vpop.f32.mrf.mxu0
  %391 = vmatprep.mubr.bf16.mxu0 0
  %392 = vmatmul.mubr.bf16.gmra.mxu0 %v208
  %v393 = vpop.f32.mrf.mxu0
  %v394 = vadd.f32 %v132, %v393
  %v395 = vpop.f32.mrf.mxu0
  %v396 = vpop.f32.mrf.mxu0
  %v397 = vadd.f32 %v132, %v396
  %v398 = vpop.f32.mrf.mxu0
  %399 = vmatprep.mubr.bf16.mxu0 0
  %400 = vmatmul.mubr.bf16.gmra.mxu0 %v211
  %v401 = vpop.f32.mrf.mxu0
  %v402 = vadd.f32 %v132, %v401
  %v403 = vpop.f32.mrf.mxu0
  %v404 = vpop.f32.mrf.mxu0
  %v405 = vadd.f32 %v132, %v404
  %v406 = vpop.f32.mrf.mxu0
  %407 = vmatprep.mubr.bf16.mxu0 0
  %408 = vmatmul.mubr.bf16.gmra.mxu0 %v214
  %v409 = vpop.f32.mrf.mxu0
  %v410 = vadd.f32 %v132, %v409
  %v411 = vpop.f32.mrf.mxu0
  %v412 = vpop.f32.mrf.mxu0
  %v413 = vadd.f32 %v132, %v412
  %v414 = vpop.f32.mrf.mxu0
  %415 = vmatprep.mubr.bf16.mxu0 0
  %416 = vmatmul.mubr.bf16.gmra.mxu0 %v217
  %v417 = vpop.f32.mrf.mxu0
  %v418 = vadd.f32 %v132, %v417
  %v419 = vpop.f32.mrf.mxu0
  %v420 = vpop.f32.mrf.mxu0
  %v421 = vadd.f32 %v132, %v420
  %v422 = vpop.f32.mrf.mxu0
  %423 = vmatprep.mubr.bf16.mxu0 0
  %424 = vmatmul.mubr.bf16.gmra.mxu0 %v220
  %v425 = vpop.f32.mrf.mxu0
  %v426 = vadd.f32 %v132, %v425
  %v427 = vpop.f32.mrf.mxu0
  %v428 = vpop.f32.mrf.mxu0
  %v429 = vadd.f32 %v132, %v428
  %v430 = vpop.f32.mrf.mxu0
  %431 = vmatprep.mubr.bf16.mxu0 0
  %432 = vmatmul.mubr.bf16.gmra.mxu0 %v223
  %v433 = vpop.f32.mrf.mxu0
  %v434 = vadd.f32 %v132, %v433
  %v435 = vpop.f32.mrf.mxu0
  %v436 = vpop.f32.mrf.mxu0
  %v437 = vadd.f32 %v132, %v436
  %v438 = vpop.f32.mrf.mxu0
  %439 = vmatprep.mubr.bf16.mxu0 0
  %440 = vmatmul.mubr.bf16.gmra.mxu0 %v226
  %v441 = vpop.f32.mrf.mxu0
  %v442 = vadd.f32 %v132, %v441
  %v443 = vpop.f32.mrf.mxu0
  %v444 = vpop.f32.mrf.mxu0
  %v445 = vadd.f32 %v132, %v444
  %v446 = vpop.f32.mrf.mxu0
  %447 = vmatprep.mubr.bf16.mxu0 0
  %448 = vmatmul.mubr.bf16.gmra.mxu0 %v229
  %v449 = vpop.f32.mrf.mxu0
  %v450 = vadd.f32 %v132, %v449
  %v451 = vpop.f32.mrf.mxu0
  %v452 = vpop.f32.mrf.mxu0
  %v453 = vadd.f32 %v132, %v452
  %v454 = vpop.f32.mrf.mxu0
  %455 = vdwg.mxu0
  %v456 = vmul.f32 %v266, 0.125
  %v457 = vmul.f32 %v269, 0.125
  %v458 = vmul.f32 %v274, 0.125
  %v459 = vmul.f32 %v277, 0.125
  %v460 = vmul.f32 %v282, 0.125
  %v461 = vmul.f32 %v285, 0.125
  %v462 = vmul.f32 %v290, 0.125
  %v463 = vmul.f32 %v293, 0.125
  %v464 = vmul.f32 %v298, 0.125
  %v465 = vmul.f32 %v301, 0.125
  %v466 = vmul.f32 %v306, 0.125
  %v467 = vmul.f32 %v309, 0.125
  %v468 = vmul.f32 %v314, 0.125
  %v469 = vmul.f32 %v317, 0.125
  %v470 = vmul.f32 %v322, 0.125
  %v471 = vmul.f32 %v325, 0.125
  %v472 = vmul.f32 %v330, 0.125
  %v473 = vmul.f32 %v333, 0.125
  %v474 = vmul.f32 %v338, 0.125
  %v475 = vmul.f32 %v341, 0.125
  %v476 = vmul.f32 %v346, 0.125
  %v477 = vmul.f32 %v349, 0.125
  %v478 = vmul.f32 %v354, 0.125
  %v479 = vmul.f32 %v357, 0.125
  %v480 = vmul.f32 %v362, 0.125
  %v481 = vmul.f32 %v365, 0.125
  %v482 = vmul.f32 %v370, 0.125
  %v483 = vmul.f32 %v373, 0.125
  %v484 = vmul.f32 %v378, 0.125
  %v485 = vmul.f32 %v381, 0.125
  %v486 = vmul.f32 %v386, 0.125
  %v487 = vmul.f32 %v389, 0.125
  %v488 = vmul.f32 %v394, 0.125
  %v489 = vmul.f32 %v397, 0.125
  %v490 = vmul.f32 %v402, 0.125
  %v491 = vmul.f32 %v405, 0.125
  %v492 = vmul.f32 %v410, 0.125
  %v493 = vmul.f32 %v413, 0.125
  %v494 = vmul.f32 %v418, 0.125
  %v495 = vmul.f32 %v421, 0.125
  %v496 = vmul.f32 %v426, 0.125
  %v497 = vmul.f32 %v429, 0.125
  %v498 = vmul.f32 %v434, 0.125
  %v499 = vmul.f32 %v437, 0.125
  %v500 = vmul.f32 %v442, 0.125
  %v501 = vmul.f32 %v445, 0.125
  %v502 = vmul.f32 %v450, 0.125
  %v503 = vmul.f32 %v453, 0.125
  %v504 = vld [vmem:[%s3] sm:$0xf]
  %v505 = vld [vmem:[%s3 + $0x4] sm:$0xf]
  %v506 = vld [vmem:[%s3 + $0x8] sm:$0xf]
  %v507 = vld [vmem:[%s3 + $0xc] sm:$0xf]
  %v508 = vld [vmem:[%s3 + $0x10] sm:$0xf]
  %v509 = vld [vmem:[%s3 + $0x14] sm:$0xf]
  %v510 = vld [vmem:[%s3 + $0x18] sm:$0xf]
  %v511 = vld [vmem:[%s3 + $0x1c] sm:$0xf]
  %v512 = vld [vmem:[%s4] sm:$0x1]
  %v514 = vlaneseq
  %v515 = vshrl.u32 %v514, 7
  %v516 = vsub.s32 0, %v515
  %v517 = vrot.slane %v512, %v516
  %v527 = vunpack.c.l.b16 %v504
  %v528 = vunpack.c.l.b16 %v505
  %v529 = vunpack.c.l.b16 %v506
  %v530 = vunpack.c.l.b16 %v507
  %v531 = vunpack.c.l.b16 %v508
  %v532 = vunpack.c.l.b16 %v509
  %v533 = vunpack.c.l.b16 %v510
  %v534 = vunpack.c.l.b16 %v511
  %v535 = vpack.c.b16 %v528, %v527
  %v536 = vpack.c.b16 %v530, %v529
  %v537 = vpack.c.b16 %v532, %v531
  %v538 = vpack.c.b16 %v534, %v533
  %543 = vmatprep.subr.bf16.mxu0 0
  %544 = vmatpush1.bf16.msra.mxu0 0
  %545 = vmatprep.subr.bf16.mxu0 0
  %546 = vmatpush1.bf16.msra.mxu0 0
  %547 = vmatprep.subr.bf16.mxu0 0
  %548 = vmatpush1.bf16.msra.mxu0 0
  %549 = vmatprep.subr.bf16.mxu0 0
  %550 = vmatpush1.bf16.msra.mxu0 0
  %551 = vmatprep.subr.bf16.mxu0 0
  %552 = vmatpush1.bf16.msra.mxu0 %v538
  %553 = vmatprep.subr.bf16.mxu0 0
  %554 = vmatpush1.bf16.msra.mxu0 %v537
  %555 = vmatprep.subr.bf16.mxu0 0
  %556 = vmatpush1.bf16.msra.mxu0 %v536
  %557 = vmatprep.subr.bf16.mxu0 0
  %558 = vmatpush1.bf16.msra.mxu0 %v535
  %559 = vmatprep.subr.bf16.mxu0 0
  %560 = vmatpush2.bf16.msra.mxu0 0
  %561 = vmatprep.subr.bf16.mxu0 0
  %562 = vmatpush2.bf16.msra.mxu0 0
  %563 = vmatprep.subr.bf16.mxu0 0
  %564 = vmatpush2.bf16.msra.mxu0 0
  %565 = vmatprep.subr.bf16.mxu0 0
  %566 = vmatpush2.bf16.msra.mxu0 0
  %567 = vmatprep.subr.bf16.mxu0 0
  %568 = vmatpush2.bf16.msra.mxu0 0
  %569 = vmatprep.subr.bf16.mxu0 0
  %570 = vmatpush2.bf16.msra.mxu0 0
  %571 = vmatprep.subr.bf16.mxu0 0
  %572 = vmatpush2.bf16.msra.mxu0 0
  %573 = vmatprep.subr.bf16.mxu0 0
  %574 = vmatpush2.bf16.msra.mxu0 0
  %575 = vmatprep.mubr.bf16.mxu0 0
  %576 = vmatmul.mubr.bf16.gmra.mxu0 %v160
  %v577 = vpop.f32.mrf.mxu0
  %v578 = vadd.f32 %v517, %v577
  %v579 = vpop.f32.mrf.mxu0
  %v580 = vpop.f32.mrf.mxu0
  %v581 = vadd.f32 %v517, %v580
  %v582 = vpop.f32.mrf.mxu0
  %583 = vmatprep.mubr.bf16.mxu0 0
  %584 = vmatmul.mubr.bf16.gmra.mxu0 %v163
  %v585 = vpop.f32.mrf.mxu0
  %v586 = vadd.f32 %v517, %v585
  %v587 = vpop.f32.mrf.mxu0
  %v588 = vpop.f32.mrf.mxu0
  %v589 = vadd.f32 %v517, %v588
  %v590 = vpop.f32.mrf.mxu0
  %591 = vmatprep.mubr.bf16.mxu0 0
  %592 = vmatmul.mubr.bf16.gmra.mxu0 %v166
  %v593 = vpop.f32.mrf.mxu0
  %v594 = vadd.f32 %v517, %v593
  %v595 = vpop.f32.mrf.mxu0
  %v596 = vpop.f32.mrf.mxu0
  %v597 = vadd.f32 %v517, %v596
  %v598 = vpop.f32.mrf.mxu0
  %599 = vmatprep.mubr.bf16.mxu0 0
  %600 = vmatmul.mubr.bf16.gmra.mxu0 %v169
  %v601 = vpop.f32.mrf.mxu0
  %v602 = vadd.f32 %v517, %v601
  %v603 = vpop.f32.mrf.mxu0
  %v604 = vpop.f32.mrf.mxu0
  %v605 = vadd.f32 %v517, %v604
  %v606 = vpop.f32.mrf.mxu0
  %607 = vmatprep.mubr.bf16.mxu0 0
  %608 = vmatmul.mubr.bf16.gmra.mxu0 %v172
  %v609 = vpop.f32.mrf.mxu0
  %v610 = vadd.f32 %v517, %v609
  %v611 = vpop.f32.mrf.mxu0
  %v612 = vpop.f32.mrf.mxu0
  %v613 = vadd.f32 %v517, %v612
  %v614 = vpop.f32.mrf.mxu0
  %615 = vmatprep.mubr.bf16.mxu0 0
  %616 = vmatmul.mubr.bf16.gmra.mxu0 %v175
  %v617 = vpop.f32.mrf.mxu0
  %v618 = vadd.f32 %v517, %v617
  %v619 = vpop.f32.mrf.mxu0
  %v620 = vpop.f32.mrf.mxu0
  %v621 = vadd.f32 %v517, %v620
  %v622 = vpop.f32.mrf.mxu0
  %623 = vmatprep.mubr.bf16.mxu0 0
  %624 = vmatmul.mubr.bf16.gmra.mxu0 %v178
  %v625 = vpop.f32.mrf.mxu0
  %v626 = vadd.f32 %v517, %v625
  %v627 = vpop.f32.mrf.mxu0
  %v628 = vpop.f32.mrf.mxu0
  %v629 = vadd.f32 %v517, %v628
  %v630 = vpop.f32.mrf.mxu0
  %631 = vmatprep.mubr.bf16.mxu0 0
  %632 = vmatmul.mubr.bf16.gmra.mxu0 %v181
  %v633 = vpop.f32.mrf.mxu0
  %v634 = vadd.f32 %v517, %v633
  %v635 = vpop.f32.mrf.mxu0
  %v636 = vpop.f32.mrf.mxu0
  %v637 = vadd.f32 %v517, %v636
  %v638 = vpop.f32.mrf.mxu0
  %639 = vmatprep.mubr.bf16.mxu0 0
  %640 = vmatmul.mubr.bf16.gmra.mxu0 %v184
  %v641 = vpop.f32.mrf.mxu0
  %v642 = vadd.f32 %v517, %v641
  %v643 = vpop.f32.mrf.mxu0
  %v644 = vpop.f32.mrf.mxu0
  %v645 = vadd.f32 %v517, %v644
  %v646 = vpop.f32.mrf.mxu0
  %647 = vmatprep.mubr.bf16.mxu0 0
  %648 = vmatmul.mubr.bf16.gmra.mxu0 %v187
  %v649 = vpop.f32.mrf.mxu0
  %v650 = vadd.f32 %v517, %v649
  %v651 = vpop.f32.mrf.mxu0
  %v652 = vpop.f32.mrf.mxu0
  %v653 = vadd.f32 %v517, %v652
  %v654 = vpop.f32.mrf.mxu0
  %655 = vmatprep.mubr.bf16.mxu0 0
  %656 = vmatmul.mubr.bf16.gmra.mxu0 %v190
  %v657 = vpop.f32.mrf.mxu0
  %v658 = vadd.f32 %v517, %v657
  %v659 = vpop.f32.mrf.mxu0
  %v660 = vpop.f32.mrf.mxu0
  %v661 = vadd.f32 %v517, %v660
  %v662 = vpop.f32.mrf.mxu0
  %663 = vmatprep.mubr.bf16.mxu0 0
  %664 = vmatmul.mubr.bf16.gmra.mxu0 %v193
  %v665 = vpop.f32.mrf.mxu0
  %v666 = vadd.f32 %v517, %v665
  %v667 = vpop.f32.mrf.mxu0
  %v668 = vpop.f32.mrf.mxu0
  %v669 = vadd.f32 %v517, %v668
  %v670 = vpop.f32.mrf.mxu0
  %671 = vmatprep.mubr.bf16.mxu0 0
  %672 = vmatmul.mubr.bf16.gmra.mxu0 %v196
  %v673 = vpop.f32.mrf.mxu0
  %v674 = vadd.f32 %v517, %v673
  %v675 = vpop.f32.mrf.mxu0
  %v676 = vpop.f32.mrf.mxu0
  %v677 = vadd.f32 %v517, %v676
  %v678 = vpop.f32.mrf.mxu0
  %679 = vmatprep.mubr.bf16.mxu0 0
  %680 = vmatmul.mubr.bf16.gmra.mxu0 %v199
  %v681 = vpop.f32.mrf.mxu0
  %v682 = vadd.f32 %v517, %v681
  %v683 = vpop.f32.mrf.mxu0
  %v684 = vpop.f32.mrf.mxu0
  %v685 = vadd.f32 %v517, %v684
  %v686 = vpop.f32.mrf.mxu0
  %687 = vmatprep.mubr.bf16.mxu0 0
  %688 = vmatmul.mubr.bf16.gmra.mxu0 %v202
  %v689 = vpop.f32.mrf.mxu0
  %v690 = vadd.f32 %v517, %v689
  %v691 = vpop.f32.mrf.mxu0
  %v692 = vpop.f32.mrf.mxu0
  %v693 = vadd.f32 %v517, %v692
  %v694 = vpop.f32.mrf.mxu0
  %695 = vmatprep.mubr.bf16.mxu0 0
  %696 = vmatmul.mubr.bf16.gmra.mxu0 %v205
  %v697 = vpop.f32.mrf.mxu0
  %v698 = vadd.f32 %v517, %v697
  %v699 = vpop.f32.mrf.mxu0
  %v700 = vpop.f32.mrf.mxu0
  %v701 = vadd.f32 %v517, %v700
  %v702 = vpop.f32.mrf.mxu0
  %703 = vmatprep.mubr.bf16.mxu0 0
  %704 = vmatmul.mubr.bf16.gmra.mxu0 %v208
  %v705 = vpop.f32.mrf.mxu0
  %v706 = vadd.f32 %v517, %v705
  %v707 = vpop.f32.mrf.mxu0
  %v708 = vpop.f32.mrf.mxu0
  %v709 = vadd.f32 %v517, %v708
  %v710 = vpop.f32.mrf.mxu0
  %711 = vmatprep.mubr.bf16.mxu0 0
  %712 = vmatmul.mubr.bf16.gmra.mxu0 %v211
  %v713 = vpop.f32.mrf.mxu0
  %v714 = vadd.f32 %v517, %v713
  %v715 = vpop.f32.mrf.mxu0
  %v716 = vpop.f32.mrf.mxu0
  %v717 = vadd.f32 %v517, %v716
  %v718 = vpop.f32.mrf.mxu0
  %719 = vmatprep.mubr.bf16.mxu0 0
  %720 = vmatmul.mubr.bf16.gmra.mxu0 %v214
  %v721 = vpop.f32.mrf.mxu0
  %v722 = vadd.f32 %v517, %v721
  %v723 = vpop.f32.mrf.mxu0
  %v724 = vpop.f32.mrf.mxu0
  %v725 = vadd.f32 %v517, %v724
  %v726 = vpop.f32.mrf.mxu0
  %727 = vmatprep.mubr.bf16.mxu0 0
  %728 = vmatmul.mubr.bf16.gmra.mxu0 %v217
  %v729 = vpop.f32.mrf.mxu0
  %v730 = vadd.f32 %v517, %v729
  %v731 = vpop.f32.mrf.mxu0
  %v732 = vpop.f32.mrf.mxu0
  %v733 = vadd.f32 %v517, %v732
  %v734 = vpop.f32.mrf.mxu0
  %735 = vmatprep.mubr.bf16.mxu0 0
  %736 = vmatmul.mubr.bf16.gmra.mxu0 %v220
  %v737 = vpop.f32.mrf.mxu0
  %v738 = vadd.f32 %v517, %v737
  %v739 = vpop.f32.mrf.mxu0
  %v740 = vpop.f32.mrf.mxu0
  %v741 = vadd.f32 %v517, %v740
  %v742 = vpop.f32.mrf.mxu0
  %743 = vmatprep.mubr.bf16.mxu0 0
  %744 = vmatmul.mubr.bf16.gmra.mxu0 %v223
  %v745 = vpop.f32.mrf.mxu0
  %v746 = vadd.f32 %v517, %v745
  %v747 = vpop.f32.mrf.mxu0
  %v748 = vpop.f32.mrf.mxu0
  %v749 = vadd.f32 %v517, %v748
  %v750 = vpop.f32.mrf.mxu0
  %751 = vmatprep.mubr.bf16.mxu0 0
  %752 = vmatmul.mubr.bf16.gmra.mxu0 %v226
  %v753 = vpop.f32.mrf.mxu0
  %v754 = vadd.f32 %v517, %v753
  %v755 = vpop.f32.mrf.mxu0
  %v756 = vpop.f32.mrf.mxu0
  %v757 = vadd.f32 %v517, %v756
  %v758 = vpop.f32.mrf.mxu0
  %759 = vmatprep.mubr.bf16.mxu0 0
  %760 = vmatmul.mubr.bf16.gmra.mxu0 %v229
  %v761 = vpop.f32.mrf.mxu0
  %v762 = vadd.f32 %v517, %v761
  %v763 = vpop.f32.mrf.mxu0
  %v764 = vpop.f32.mrf.mxu0
  %v765 = vadd.f32 %v517, %v764
  %v766 = vpop.f32.mrf.mxu0
  %767 = vdwg.mxu0
  %v768 = vld [vmem:[%s5] sm:$0xf]
  %v769 = vld [vmem:[%s5 + $0x4] sm:$0xf]
  %v770 = vld [vmem:[%s5 + $0x8] sm:$0xf]
  %v771 = vld [vmem:[%s5 + $0xc] sm:$0xf]
  %v772 = vld [vmem:[%s5 + $0x10] sm:$0xf]
  %v773 = vld [vmem:[%s5 + $0x14] sm:$0xf]
  %v774 = vld [vmem:[%s5 + $0x18] sm:$0xf]
  %v775 = vld [vmem:[%s5 + $0x1c] sm:$0xf]
  %v776 = vld [vmem:[%s6] sm:$0x1]
  %v778 = vlaneseq
  %v779 = vshrl.u32 %v778, 7
  %v780 = vsub.s32 0, %v779
  %v781 = vrot.slane %v776, %v780
  %v791 = vunpack.c.l.b16 %v768
  %v792 = vunpack.c.l.b16 %v769
  %v793 = vunpack.c.l.b16 %v770
  %v794 = vunpack.c.l.b16 %v771
  %v795 = vunpack.c.l.b16 %v772
  %v796 = vunpack.c.l.b16 %v773
  %v797 = vunpack.c.l.b16 %v774
  %v798 = vunpack.c.l.b16 %v775
  %v799 = vpack.c.b16 %v792, %v791
  %v800 = vpack.c.b16 %v794, %v793
  %v801 = vpack.c.b16 %v796, %v795
  %v802 = vpack.c.b16 %v798, %v797
  %807 = vmatprep.subr.bf16.mxu0 0
  %808 = vmatpush1.bf16.msra.mxu0 0
  %809 = vmatprep.subr.bf16.mxu0 0
  %810 = vmatpush1.bf16.msra.mxu0 0
  %811 = vmatprep.subr.bf16.mxu0 0
  %812 = vmatpush1.bf16.msra.mxu0 0
  %813 = vmatprep.subr.bf16.mxu0 0
  %814 = vmatpush1.bf16.msra.mxu0 0
  %815 = vmatprep.subr.bf16.mxu0 0
  %816 = vmatpush1.bf16.msra.mxu0 %v802
  %817 = vmatprep.subr.bf16.mxu0 0
  %818 = vmatpush1.bf16.msra.mxu0 %v801
  %819 = vmatprep.subr.bf16.mxu0 0
  %820 = vmatpush1.bf16.msra.mxu0 %v800
  %821 = vmatprep.subr.bf16.mxu0 0
  %822 = vmatpush1.bf16.msra.mxu0 %v799
  %823 = vmatprep.subr.bf16.mxu0 0
  %824 = vmatpush2.bf16.msra.mxu0 0
  %825 = vmatprep.subr.bf16.mxu0 0
  %826 = vmatpush2.bf16.msra.mxu0 0
  %827 = vmatprep.subr.bf16.mxu0 0
  %828 = vmatpush2.bf16.msra.mxu0 0
  %829 = vmatprep.subr.bf16.mxu0 0
  %830 = vmatpush2.bf16.msra.mxu0 0
  %831 = vmatprep.subr.bf16.mxu0 0
  %832 = vmatpush2.bf16.msra.mxu0 0
  %833 = vmatprep.subr.bf16.mxu0 0
  %834 = vmatpush2.bf16.msra.mxu0 0
  %835 = vmatprep.subr.bf16.mxu0 0
  %836 = vmatpush2.bf16.msra.mxu0 0
  %837 = vmatprep.subr.bf16.mxu0 0
  %838 = vmatpush2.bf16.msra.mxu0 0
  %839 = vmatprep.mubr.bf16.mxu0 0
  %840 = vmatmul.mubr.bf16.gmra.mxu0 %v160
  %v841 = vpop.f32.mrf.mxu0
  %v842 = vadd.f32 %v781, %v841
  %v843 = vpop.f32.mrf.mxu0
  %v844 = vpop.f32.mrf.mxu0
  %v845 = vadd.f32 %v781, %v844
  %v846 = vpop.f32.mrf.mxu0
  %847 = vmatprep.mubr.bf16.mxu0 0
  %848 = vmatmul.mubr.bf16.gmra.mxu0 %v163
  %v849 = vpop.f32.mrf.mxu0
  %v850 = vadd.f32 %v781, %v849
  %v851 = vpop.f32.mrf.mxu0
  %v852 = vpop.f32.mrf.mxu0
  %v853 = vadd.f32 %v781, %v852
  %v854 = vpop.f32.mrf.mxu0
  %855 = vmatprep.mubr.bf16.mxu0 0
  %856 = vmatmul.mubr.bf16.gmra.mxu0 %v166
  %v857 = vpop.f32.mrf.mxu0
  %v858 = vadd.f32 %v781, %v857
  %v859 = vpop.f32.mrf.mxu0
  %v860 = vpop.f32.mrf.mxu0
  %v861 = vadd.f32 %v781, %v860
  %v862 = vpop.f32.mrf.mxu0
  %863 = vmatprep.mubr.bf16.mxu0 0
  %864 = vmatmul.mubr.bf16.gmra.mxu0 %v169
  %v865 = vpop.f32.mrf.mxu0
  %v866 = vadd.f32 %v781, %v865
  %v867 = vpop.f32.mrf.mxu0
  %v868 = vpop.f32.mrf.mxu0
  %v869 = vadd.f32 %v781, %v868
  %v870 = vpop.f32.mrf.mxu0
  %871 = vmatprep.mubr.bf16.mxu0 0
  %872 = vmatmul.mubr.bf16.gmra.mxu0 %v172
  %v873 = vpop.f32.mrf.mxu0
  %v874 = vadd.f32 %v781, %v873
  %v875 = vpop.f32.mrf.mxu0
  %v876 = vpop.f32.mrf.mxu0
  %v877 = vadd.f32 %v781, %v876
  %v878 = vpop.f32.mrf.mxu0
  %879 = vmatprep.mubr.bf16.mxu0 0
  %880 = vmatmul.mubr.bf16.gmra.mxu0 %v175
  %v881 = vpop.f32.mrf.mxu0
  %v882 = vadd.f32 %v781, %v881
  %v883 = vpop.f32.mrf.mxu0
  %v884 = vpop.f32.mrf.mxu0
  %v885 = vadd.f32 %v781, %v884
  %v886 = vpop.f32.mrf.mxu0
  %887 = vmatprep.mubr.bf16.mxu0 0
  %888 = vmatmul.mubr.bf16.gmra.mxu0 %v178
  %v889 = vpop.f32.mrf.mxu0
  %v890 = vadd.f32 %v781, %v889
  %v891 = vpop.f32.mrf.mxu0
  %v892 = vpop.f32.mrf.mxu0
  %v893 = vadd.f32 %v781, %v892
  %v894 = vpop.f32.mrf.mxu0
  %895 = vmatprep.mubr.bf16.mxu0 0
  %896 = vmatmul.mubr.bf16.gmra.mxu0 %v181
  %v897 = vpop.f32.mrf.mxu0
  %v898 = vadd.f32 %v781, %v897
  %v899 = vpop.f32.mrf.mxu0
  %v900 = vpop.f32.mrf.mxu0
  %v901 = vadd.f32 %v781, %v900
  %v902 = vpop.f32.mrf.mxu0
  %903 = vmatprep.mubr.bf16.mxu0 0
  %904 = vmatmul.mubr.bf16.gmra.mxu0 %v184
  %v905 = vpop.f32.mrf.mxu0
  %v906 = vadd.f32 %v781, %v905
  %v907 = vpop.f32.mrf.mxu0
  %v908 = vpop.f32.mrf.mxu0
  %v909 = vadd.f32 %v781, %v908
  %v910 = vpop.f32.mrf.mxu0
  %911 = vmatprep.mubr.bf16.mxu0 0
  %912 = vmatmul.mubr.bf16.gmra.mxu0 %v187
  %v913 = vpop.f32.mrf.mxu0
  %v914 = vadd.f32 %v781, %v913
  %v915 = vpop.f32.mrf.mxu0
  %v916 = vpop.f32.mrf.mxu0
  %v917 = vadd.f32 %v781, %v916
  %v918 = vpop.f32.mrf.mxu0
  %919 = vmatprep.mubr.bf16.mxu0 0
  %920 = vmatmul.mubr.bf16.gmra.mxu0 %v190
  %v921 = vpop.f32.mrf.mxu0
  %v922 = vadd.f32 %v781, %v921
  %v923 = vpop.f32.mrf.mxu0
  %v924 = vpop.f32.mrf.mxu0
  %v925 = vadd.f32 %v781, %v924
  %v926 = vpop.f32.mrf.mxu0
  %927 = vmatprep.mubr.bf16.mxu0 0
  %928 = vmatmul.mubr.bf16.gmra.mxu0 %v193
  %v929 = vpop.f32.mrf.mxu0
  %v930 = vadd.f32 %v781, %v929
  %v931 = vpop.f32.mrf.mxu0
  %v932 = vpop.f32.mrf.mxu0
  %v933 = vadd.f32 %v781, %v932
  %v934 = vpop.f32.mrf.mxu0
  %935 = vmatprep.mubr.bf16.mxu0 0
  %936 = vmatmul.mubr.bf16.gmra.mxu0 %v196
  %v937 = vpop.f32.mrf.mxu0
  %v938 = vadd.f32 %v781, %v937
  %v939 = vpop.f32.mrf.mxu0
  %v940 = vpop.f32.mrf.mxu0
  %v941 = vadd.f32 %v781, %v940
  %v942 = vpop.f32.mrf.mxu0
  %943 = vmatprep.mubr.bf16.mxu0 0
  %944 = vmatmul.mubr.bf16.gmra.mxu0 %v199
  %v945 = vpop.f32.mrf.mxu0
  %v946 = vadd.f32 %v781, %v945
  %v947 = vpop.f32.mrf.mxu0
  %v948 = vpop.f32.mrf.mxu0
  %v949 = vadd.f32 %v781, %v948
  %v950 = vpop.f32.mrf.mxu0
  %951 = vmatprep.mubr.bf16.mxu0 0
  %952 = vmatmul.mubr.bf16.gmra.mxu0 %v202
  %v953 = vpop.f32.mrf.mxu0
  %v954 = vadd.f32 %v781, %v953
  %v955 = vpop.f32.mrf.mxu0
  %v956 = vpop.f32.mrf.mxu0
  %v957 = vadd.f32 %v781, %v956
  %v958 = vpop.f32.mrf.mxu0
  %959 = vmatprep.mubr.bf16.mxu0 0
  %960 = vmatmul.mubr.bf16.gmra.mxu0 %v205
  %v961 = vpop.f32.mrf.mxu0
  %v962 = vadd.f32 %v781, %v961
  %v963 = vpop.f32.mrf.mxu0
  %v964 = vpop.f32.mrf.mxu0
  %v965 = vadd.f32 %v781, %v964
  %v966 = vpop.f32.mrf.mxu0
  %967 = vmatprep.mubr.bf16.mxu0 0
  %968 = vmatmul.mubr.bf16.gmra.mxu0 %v208
  %v969 = vpop.f32.mrf.mxu0
  %v970 = vadd.f32 %v781, %v969
  %v971 = vpop.f32.mrf.mxu0
  %v972 = vpop.f32.mrf.mxu0
  %v973 = vadd.f32 %v781, %v972
  %v974 = vpop.f32.mrf.mxu0
  %975 = vmatprep.mubr.bf16.mxu0 0
  %976 = vmatmul.mubr.bf16.gmra.mxu0 %v211
  %v977 = vpop.f32.mrf.mxu0
  %v978 = vadd.f32 %v781, %v977
  %v979 = vpop.f32.mrf.mxu0
  %v980 = vpop.f32.mrf.mxu0
  %v981 = vadd.f32 %v781, %v980
  %v982 = vpop.f32.mrf.mxu0
  %983 = vmatprep.mubr.bf16.mxu0 0
  %984 = vmatmul.mubr.bf16.gmra.mxu0 %v214
  %v985 = vpop.f32.mrf.mxu0
  %v986 = vadd.f32 %v781, %v985
  %v987 = vpop.f32.mrf.mxu0
  %v988 = vpop.f32.mrf.mxu0
  %v989 = vadd.f32 %v781, %v988
  %v990 = vpop.f32.mrf.mxu0
  %991 = vmatprep.mubr.bf16.mxu0 0
  %992 = vmatmul.mubr.bf16.gmra.mxu0 %v217
  %v993 = vpop.f32.mrf.mxu0
  %v994 = vadd.f32 %v781, %v993
  %v995 = vpop.f32.mrf.mxu0
  %v996 = vpop.f32.mrf.mxu0
  %v997 = vadd.f32 %v781, %v996
  %v998 = vpop.f32.mrf.mxu0
  %999 = vmatprep.mubr.bf16.mxu0 0
  %1000 = vmatmul.mubr.bf16.gmra.mxu0 %v220
  %v1001 = vpop.f32.mrf.mxu0
  %v1002 = vadd.f32 %v781, %v1001
  %v1003 = vpop.f32.mrf.mxu0
  %v1004 = vpop.f32.mrf.mxu0
  %v1005 = vadd.f32 %v781, %v1004
  %v1006 = vpop.f32.mrf.mxu0
  %1007 = vmatprep.mubr.bf16.mxu0 0
  %1008 = vmatmul.mubr.bf16.gmra.mxu0 %v223
  %v1009 = vpop.f32.mrf.mxu0
  %v1010 = vadd.f32 %v781, %v1009
  %v1011 = vpop.f32.mrf.mxu0
  %v1012 = vpop.f32.mrf.mxu0
  %v1013 = vadd.f32 %v781, %v1012
  %v1014 = vpop.f32.mrf.mxu0
  %1015 = vmatprep.mubr.bf16.mxu0 0
  %1016 = vmatmul.mubr.bf16.gmra.mxu0 %v226
  %v1017 = vpop.f32.mrf.mxu0
  %v1018 = vadd.f32 %v781, %v1017
  %v1019 = vpop.f32.mrf.mxu0
  %v1020 = vpop.f32.mrf.mxu0
  %v1021 = vadd.f32 %v781, %v1020
  %v1022 = vpop.f32.mrf.mxu0
  %1023 = vmatprep.mubr.bf16.mxu0 0
  %1024 = vmatmul.mubr.bf16.gmra.mxu0 %v229
  %v1025 = vpop.f32.mrf.mxu0
  %v1026 = vadd.f32 %v781, %v1025
  %v1027 = vpop.f32.mrf.mxu0
  %v1028 = vpop.f32.mrf.mxu0
  %v1029 = vadd.f32 %v781, %v1028
  %v1030 = vpop.f32.mrf.mxu0
  %1031 = vdwg.mxu0
  %v1032 = vpack.c.bf16 %v457, %v456
  %v1033 = vpack.c.bf16 %v459, %v458
  %v1034 = vpack.c.bf16 %v461, %v460
  %v1035 = vpack.c.bf16 %v463, %v462
  %v1036 = vpack.c.bf16 %v465, %v464
  %v1037 = vpack.c.bf16 %v467, %v466
  %v1038 = vpack.c.bf16 %v469, %v468
  %v1039 = vpack.c.bf16 %v471, %v470
  %v1040 = vpack.c.bf16 %v473, %v472
  %v1041 = vpack.c.bf16 %v475, %v474
  %v1042 = vpack.c.bf16 %v477, %v476
  %v1043 = vpack.c.bf16 %v479, %v478
  %v1044 = vpack.c.bf16 %v481, %v480
  %v1045 = vpack.c.bf16 %v483, %v482
  %v1046 = vpack.c.bf16 %v485, %v484
  %v1047 = vpack.c.bf16 %v487, %v486
  %v1048 = vpack.c.bf16 %v489, %v488
  %v1049 = vpack.c.bf16 %v491, %v490
  %v1050 = vpack.c.bf16 %v493, %v492
  %v1051 = vpack.c.bf16 %v495, %v494
  %v1052 = vpack.c.bf16 %v497, %v496
  %v1053 = vpack.c.bf16 %v499, %v498
  %v1054 = vpack.c.bf16 %v501, %v500
  %v1055 = vpack.c.bf16 %v503, %v502
  %v1056 = vpack.c.bf16 %v581, %v578
  %v1057 = vpack.c.bf16 %v589, %v586
  %v1058 = vpack.c.bf16 %v597, %v594
  %v1059 = vpack.c.bf16 %v605, %v602
  %v1060 = vpack.c.bf16 %v613, %v610
  %v1061 = vpack.c.bf16 %v621, %v618
  %v1062 = vpack.c.bf16 %v629, %v626
  %v1063 = vpack.c.bf16 %v637, %v634
  %v1064 = vpack.c.bf16 %v645, %v642
  %v1065 = vpack.c.bf16 %v653, %v650
  %v1066 = vpack.c.bf16 %v661, %v658
  %v1067 = vpack.c.bf16 %v669, %v666
  %v1068 = vpack.c.bf16 %v677, %v674
  %v1069 = vpack.c.bf16 %v685, %v682
  %v1070 = vpack.c.bf16 %v693, %v690
  %v1071 = vpack.c.bf16 %v701, %v698
  %v1072 = vpack.c.bf16 %v709, %v706
  %v1073 = vpack.c.bf16 %v717, %v714
  %v1074 = vpack.c.bf16 %v725, %v722
  %v1075 = vpack.c.bf16 %v733, %v730
  %v1076 = vpack.c.bf16 %v741, %v738
  %v1077 = vpack.c.bf16 %v749, %v746
  %v1078 = vpack.c.bf16 %v757, %v754
  %v1079 = vpack.c.bf16 %v765, %v762
  %v1080 = vlaneseq
  %v1081 = vand.u32 %v1080, 127
  %v1082 = vadd.s32 %v1081, 128
  %v1083 = vadd.s32 %v1081, 256
  %vm1084 = vcmp.lt.s32.totalorder %v1081, 313
  %vm1085 = vcmp.lt.s32.totalorder %v1082, 313
  %vm1086 = vcmp.lt.s32.totalorder %v1083, 313
  %v1087 = vsel %vm1084, 0.0, -1e+30
  %v1088 = vsel %vm1085, 0.0, -1e+30
  %v1089 = vsel %vm1086, 0.0, -1e+30
  %v1091 = vsel %vm158, %v1032, 0
  %v1094 = vsel %vm158, %v1033, 0
  %v1097 = vsel %vm158, %v1034, 0
  %v1100 = vsel %vm158, %v1035, 0
  %v1103 = vsel %vm158, %v1036, 0
  %v1106 = vsel %vm158, %v1037, 0
  %v1109 = vsel %vm158, %v1038, 0
  %v1112 = vsel %vm158, %v1039, 0
  %v1115 = vsel %vm158, %v1040, 0
  %v1118 = vsel %vm158, %v1041, 0
  %v1121 = vsel %vm158, %v1042, 0
  %v1124 = vsel %vm158, %v1043, 0
  %v1127 = vsel %vm158, %v1044, 0
  %v1130 = vsel %vm158, %v1045, 0
  %v1133 = vsel %vm158, %v1046, 0
  %v1136 = vsel %vm158, %v1047, 0
  %v1139 = vsel %vm158, %v1048, 0
  %v1142 = vsel %vm158, %v1049, 0
  %v1145 = vsel %vm158, %v1050, 0
  %v1148 = vsel %vm158, %v1051, 0
  %v1151 = vsel %vm158, %v1052, 0
  %v1154 = vsel %vm158, %v1053, 0
  %v1157 = vsel %vm158, %v1054, 0
  %v1160 = vsel %vm158, %v1055, 0
  %v1163 = vsel %vm158, %v1056, 0
  %v1166 = vsel %vm158, %v1057, 0
  %v1169 = vsel %vm158, %v1058, 0
  %v1172 = vsel %vm158, %v1059, 0
  %v1175 = vsel %vm158, %v1060, 0
  %v1178 = vsel %vm158, %v1061, 0
  %v1181 = vsel %vm158, %v1062, 0
  %v1184 = vsel %vm158, %v1063, 0
  %v1187 = vsel %vm158, %v1064, 0
  %v1190 = vsel %vm158, %v1065, 0
  %v1193 = vsel %vm158, %v1066, 0
  %v1196 = vsel %vm158, %v1067, 0
  %v1199 = vsel %vm158, %v1068, 0
  %v1202 = vsel %vm158, %v1069, 0
  %v1205 = vsel %vm158, %v1070, 0
  %v1208 = vsel %vm158, %v1071, 0
  %v1211 = vsel %vm158, %v1072, 0
  %v1214 = vsel %vm158, %v1073, 0
  %v1217 = vsel %vm158, %v1074, 0
  %v1220 = vsel %vm158, %v1075, 0
  %v1223 = vsel %vm158, %v1076, 0
  %v1226 = vsel %vm158, %v1077, 0
  %v1229 = vsel %vm158, %v1078, 0
  %v1232 = vsel %vm158, %v1079, 0
  %1234 = vmatprep.subr.bf16.mxu0 0
  %1235 = vmatpush1.bf16.xpose.msra.mxu0 %v1184
  %1236 = vmatprep.subr.bf16.mxu0 0
  %1237 = vmatpush1.bf16.xpose.msra.mxu0 %v1181
  %1238 = vmatprep.subr.bf16.mxu0 0
  %1239 = vmatpush1.bf16.xpose.msra.mxu0 %v1178
  %1240 = vmatprep.subr.bf16.mxu0 0
  %1241 = vmatpush1.bf16.xpose.msra.mxu0 %v1175
  %1242 = vmatprep.subr.bf16.mxu0 0
  %1243 = vmatpush1.bf16.xpose.msra.mxu0 %v1172
  %1244 = vmatprep.subr.bf16.mxu0 0
  %1245 = vmatpush1.bf16.xpose.msra.mxu0 %v1169
  %1246 = vmatprep.subr.bf16.mxu0 0
  %1247 = vmatpush1.bf16.xpose.msra.mxu0 %v1166
  %1248 = vmatprep.subr.bf16.mxu0 0
  %1249 = vmatpush1.bf16.xpose.msra.mxu0 %v1163
  %1250 = vmatprep.subr.bf16.mxu0 0
  %1251 = vmatpush2.bf16.xpose.msra.mxu0 %v1208
  %1252 = vmatprep.subr.bf16.mxu0 0
  %1253 = vmatpush2.bf16.xpose.msra.mxu0 %v1205
  %1254 = vmatprep.subr.bf16.mxu0 0
  %1255 = vmatpush2.bf16.xpose.msra.mxu0 %v1202
  %1256 = vmatprep.subr.bf16.mxu0 0
  %1257 = vmatpush2.bf16.xpose.msra.mxu0 %v1199
  %1258 = vmatprep.subr.bf16.mxu0 0
  %1259 = vmatpush2.bf16.xpose.msra.mxu0 %v1196
  %1260 = vmatprep.subr.bf16.mxu0 0
  %1261 = vmatpush2.bf16.xpose.msra.mxu0 %v1193
  %1262 = vmatprep.subr.bf16.mxu0 0
  %1263 = vmatpush2.bf16.xpose.msra.mxu0 %v1190
  %1264 = vmatprep.subr.bf16.mxu0 0
  %1265 = vmatpush2.bf16.xpose.msra.mxu0 %v1187
  %1266 = vmatprep.mubr.bf16.mxu0 0
  %1267 = vmatmul.mubr.bf16.gmra.mxu0 %v1091
  %v1268 = vpop.f32.mrf.mxu0
  %v1269 = vadd.f32 %v1087, %v1268
  %v1270 = vpop.f32.mrf.mxu0
  %v1271 = vadd.f32 %v1088, %v1270
  %v1272 = vpop.f32.mrf.mxu0
  %v1273 = vadd.f32 %v1087, %v1272
  %v1274 = vpop.f32.mrf.mxu0
  %v1275 = vadd.f32 %v1088, %v1274
  %1276 = vmatprep.mubr.bf16.mxu0 0
  %1277 = vmatmul.mubr.bf16.gmra.mxu0 %v1094
  %v1278 = vpop.f32.mrf.mxu0
  %v1279 = vadd.f32 %v1087, %v1278
  %v1280 = vpop.f32.mrf.mxu0
  %v1281 = vadd.f32 %v1088, %v1280
  %v1282 = vpop.f32.mrf.mxu0
  %v1283 = vadd.f32 %v1087, %v1282
  %v1284 = vpop.f32.mrf.mxu0
  %v1285 = vadd.f32 %v1088, %v1284
  %1286 = vmatprep.mubr.bf16.mxu0 0
  %1287 = vmatmul.mubr.bf16.gmra.mxu0 %v1097
  %v1288 = vpop.f32.mrf.mxu0
  %v1289 = vadd.f32 %v1087, %v1288
  %v1290 = vpop.f32.mrf.mxu0
  %v1291 = vadd.f32 %v1088, %v1290
  %v1292 = vpop.f32.mrf.mxu0
  %v1293 = vadd.f32 %v1087, %v1292
  %v1294 = vpop.f32.mrf.mxu0
  %v1295 = vadd.f32 %v1088, %v1294
  %1296 = vmatprep.mubr.bf16.mxu0 0
  %1297 = vmatmul.mubr.bf16.gmra.mxu0 %v1100
  %v1298 = vpop.f32.mrf.mxu0
  %v1299 = vadd.f32 %v1087, %v1298
  %v1300 = vpop.f32.mrf.mxu0
  %v1301 = vadd.f32 %v1088, %v1300
  %v1302 = vpop.f32.mrf.mxu0
  %v1303 = vadd.f32 %v1087, %v1302
  %v1304 = vpop.f32.mrf.mxu0
  %v1305 = vadd.f32 %v1088, %v1304
  %1306 = vmatprep.mubr.bf16.mxu0 0
  %1307 = vmatmul.mubr.bf16.gmra.mxu0 %v1103
  %v1308 = vpop.f32.mrf.mxu0
  %v1309 = vadd.f32 %v1087, %v1308
  %v1310 = vpop.f32.mrf.mxu0
  %v1311 = vadd.f32 %v1088, %v1310
  %v1312 = vpop.f32.mrf.mxu0
  %v1313 = vadd.f32 %v1087, %v1312
  %v1314 = vpop.f32.mrf.mxu0
  %v1315 = vadd.f32 %v1088, %v1314
  %1316 = vmatprep.mubr.bf16.mxu0 0
  %1317 = vmatmul.mubr.bf16.gmra.mxu0 %v1106
  %v1318 = vpop.f32.mrf.mxu0
  %v1319 = vadd.f32 %v1087, %v1318
  %v1320 = vpop.f32.mrf.mxu0
  %v1321 = vadd.f32 %v1088, %v1320
  %v1322 = vpop.f32.mrf.mxu0
  %v1323 = vadd.f32 %v1087, %v1322
  %v1324 = vpop.f32.mrf.mxu0
  %v1325 = vadd.f32 %v1088, %v1324
  %1326 = vmatprep.mubr.bf16.mxu0 0
  %1327 = vmatmul.mubr.bf16.gmra.mxu0 %v1109
  %v1328 = vpop.f32.mrf.mxu0
  %v1329 = vadd.f32 %v1087, %v1328
  %v1330 = vpop.f32.mrf.mxu0
  %v1331 = vadd.f32 %v1088, %v1330
  %v1332 = vpop.f32.mrf.mxu0
  %v1333 = vadd.f32 %v1087, %v1332
  %v1334 = vpop.f32.mrf.mxu0
  %v1335 = vadd.f32 %v1088, %v1334
  %1336 = vmatprep.mubr.bf16.mxu0 0
  %1337 = vmatmul.mubr.bf16.gmra.mxu0 %v1112
  %v1338 = vpop.f32.mrf.mxu0
  %v1339 = vadd.f32 %v1087, %v1338
  %v1340 = vpop.f32.mrf.mxu0
  %v1341 = vadd.f32 %v1088, %v1340
  %v1342 = vpop.f32.mrf.mxu0
  %v1343 = vadd.f32 %v1087, %v1342
  %v1344 = vpop.f32.mrf.mxu0
  %v1345 = vadd.f32 %v1088, %v1344
  %1346 = vmatprep.mubr.bf16.mxu0 0
  %1347 = vmatmul.mubr.bf16.gmra.mxu0 %v1115
  %v1348 = vpop.f32.mrf.mxu0
  %v1349 = vadd.f32 %v1087, %v1348
  %v1350 = vpop.f32.mrf.mxu0
  %v1351 = vadd.f32 %v1088, %v1350
  %v1352 = vpop.f32.mrf.mxu0
  %v1353 = vadd.f32 %v1087, %v1352
  %v1354 = vpop.f32.mrf.mxu0
  %v1355 = vadd.f32 %v1088, %v1354
  %1356 = vmatprep.mubr.bf16.mxu0 0
  %1357 = vmatmul.mubr.bf16.gmra.mxu0 %v1118
  %v1358 = vpop.f32.mrf.mxu0
  %v1359 = vadd.f32 %v1087, %v1358
  %v1360 = vpop.f32.mrf.mxu0
  %v1361 = vadd.f32 %v1088, %v1360
  %v1362 = vpop.f32.mrf.mxu0
  %v1363 = vadd.f32 %v1087, %v1362
  %v1364 = vpop.f32.mrf.mxu0
  %v1365 = vadd.f32 %v1088, %v1364
  %1366 = vmatprep.mubr.bf16.mxu0 0
  %1367 = vmatmul.mubr.bf16.gmra.mxu0 %v1121
  %v1368 = vpop.f32.mrf.mxu0
  %v1369 = vadd.f32 %v1087, %v1368
  %v1370 = vpop.f32.mrf.mxu0
  %v1371 = vadd.f32 %v1088, %v1370
  %v1372 = vpop.f32.mrf.mxu0
  %v1373 = vadd.f32 %v1087, %v1372
  %v1374 = vpop.f32.mrf.mxu0
  %v1375 = vadd.f32 %v1088, %v1374
  %1376 = vmatprep.mubr.bf16.mxu0 0
  %1377 = vmatmul.mubr.bf16.gmra.mxu0 %v1124
  %v1378 = vpop.f32.mrf.mxu0
  %v1379 = vadd.f32 %v1087, %v1378
  %v1380 = vpop.f32.mrf.mxu0
  %v1381 = vadd.f32 %v1088, %v1380
  %v1382 = vpop.f32.mrf.mxu0
  %v1383 = vadd.f32 %v1087, %v1382
  %v1384 = vpop.f32.mrf.mxu0
  %v1385 = vadd.f32 %v1088, %v1384
  %1386 = vmatprep.mubr.bf16.mxu0 0
  %1387 = vmatmul.mubr.bf16.gmra.mxu0 %v1127
  %v1388 = vpop.f32.mrf.mxu0
  %v1389 = vadd.f32 %v1087, %v1388
  %v1390 = vpop.f32.mrf.mxu0
  %v1391 = vadd.f32 %v1088, %v1390
  %v1392 = vpop.f32.mrf.mxu0
  %v1393 = vadd.f32 %v1087, %v1392
  %v1394 = vpop.f32.mrf.mxu0
  %v1395 = vadd.f32 %v1088, %v1394
  %1396 = vmatprep.mubr.bf16.mxu0 0
  %1397 = vmatmul.mubr.bf16.gmra.mxu0 %v1130
  %v1398 = vpop.f32.mrf.mxu0
  %v1399 = vadd.f32 %v1087, %v1398
  %v1400 = vpop.f32.mrf.mxu0
  %v1401 = vadd.f32 %v1088, %v1400
  %v1402 = vpop.f32.mrf.mxu0
  %v1403 = vadd.f32 %v1087, %v1402
  %v1404 = vpop.f32.mrf.mxu0
  %v1405 = vadd.f32 %v1088, %v1404
  %1406 = vmatprep.mubr.bf16.mxu0 0
  %1407 = vmatmul.mubr.bf16.gmra.mxu0 %v1133
  %v1408 = vpop.f32.mrf.mxu0
  %v1409 = vadd.f32 %v1087, %v1408
  %v1410 = vpop.f32.mrf.mxu0
  %v1411 = vadd.f32 %v1088, %v1410
  %v1412 = vpop.f32.mrf.mxu0
  %v1413 = vadd.f32 %v1087, %v1412
  %v1414 = vpop.f32.mrf.mxu0
  %v1415 = vadd.f32 %v1088, %v1414
  %1416 = vmatprep.mubr.bf16.mxu0 0
  %1417 = vmatmul.mubr.bf16.gmra.mxu0 %v1136
  %v1418 = vpop.f32.mrf.mxu0
  %v1419 = vadd.f32 %v1087, %v1418
  %v1420 = vpop.f32.mrf.mxu0
  %v1421 = vadd.f32 %v1088, %v1420
  %v1422 = vpop.f32.mrf.mxu0
  %v1423 = vadd.f32 %v1087, %v1422
  %v1424 = vpop.f32.mrf.mxu0
  %v1425 = vadd.f32 %v1088, %v1424
  %1426 = vmatprep.mubr.bf16.mxu0 0
  %1427 = vmatmul.mubr.bf16.gmra.mxu0 %v1139
  %v1428 = vpop.f32.mrf.mxu0
  %v1429 = vadd.f32 %v1087, %v1428
  %v1430 = vpop.f32.mrf.mxu0
  %v1431 = vadd.f32 %v1088, %v1430
  %v1432 = vpop.f32.mrf.mxu0
  %v1433 = vadd.f32 %v1087, %v1432
  %v1434 = vpop.f32.mrf.mxu0
  %v1435 = vadd.f32 %v1088, %v1434
  %1436 = vmatprep.mubr.bf16.mxu0 0
  %1437 = vmatmul.mubr.bf16.gmra.mxu0 %v1142
  %v1438 = vpop.f32.mrf.mxu0
  %v1439 = vadd.f32 %v1087, %v1438
  %v1440 = vpop.f32.mrf.mxu0
  %v1441 = vadd.f32 %v1088, %v1440
  %v1442 = vpop.f32.mrf.mxu0
  %v1443 = vadd.f32 %v1087, %v1442
  %v1444 = vpop.f32.mrf.mxu0
  %v1445 = vadd.f32 %v1088, %v1444
  %1446 = vmatprep.mubr.bf16.mxu0 0
  %1447 = vmatmul.mubr.bf16.gmra.mxu0 %v1145
  %v1448 = vpop.f32.mrf.mxu0
  %v1449 = vadd.f32 %v1087, %v1448
  %v1450 = vpop.f32.mrf.mxu0
  %v1451 = vadd.f32 %v1088, %v1450
  %v1452 = vpop.f32.mrf.mxu0
  %v1453 = vadd.f32 %v1087, %v1452
  %v1454 = vpop.f32.mrf.mxu0
  %v1455 = vadd.f32 %v1088, %v1454
  %1456 = vmatprep.mubr.bf16.mxu0 0
  %1457 = vmatmul.mubr.bf16.gmra.mxu0 %v1148
  %v1458 = vpop.f32.mrf.mxu0
  %v1459 = vadd.f32 %v1087, %v1458
  %v1460 = vpop.f32.mrf.mxu0
  %v1461 = vadd.f32 %v1088, %v1460
  %v1462 = vpop.f32.mrf.mxu0
  %v1463 = vadd.f32 %v1087, %v1462
  %v1464 = vpop.f32.mrf.mxu0
  %v1465 = vadd.f32 %v1088, %v1464
  %1466 = vmatprep.mubr.bf16.mxu0 0
  %1467 = vmatmul.mubr.bf16.gmra.mxu0 %v1151
  %v1468 = vpop.f32.mrf.mxu0
  %v1469 = vadd.f32 %v1087, %v1468
  %v1470 = vpop.f32.mrf.mxu0
  %v1471 = vadd.f32 %v1088, %v1470
  %v1472 = vpop.f32.mrf.mxu0
  %v1473 = vadd.f32 %v1087, %v1472
  %v1474 = vpop.f32.mrf.mxu0
  %v1475 = vadd.f32 %v1088, %v1474
  %1476 = vmatprep.mubr.bf16.mxu0 0
  %1477 = vmatmul.mubr.bf16.gmra.mxu0 %v1154
  %v1478 = vpop.f32.mrf.mxu0
  %v1479 = vadd.f32 %v1087, %v1478
  %v1480 = vpop.f32.mrf.mxu0
  %v1481 = vadd.f32 %v1088, %v1480
  %v1482 = vpop.f32.mrf.mxu0
  %v1483 = vadd.f32 %v1087, %v1482
  %v1484 = vpop.f32.mrf.mxu0
  %v1485 = vadd.f32 %v1088, %v1484
  %1486 = vmatprep.mubr.bf16.mxu0 0
  %1487 = vmatmul.mubr.bf16.gmra.mxu0 %v1157
  %v1488 = vpop.f32.mrf.mxu0
  %v1489 = vadd.f32 %v1087, %v1488
  %v1490 = vpop.f32.mrf.mxu0
  %v1491 = vadd.f32 %v1088, %v1490
  %v1492 = vpop.f32.mrf.mxu0
  %v1493 = vadd.f32 %v1087, %v1492
  %v1494 = vpop.f32.mrf.mxu0
  %v1495 = vadd.f32 %v1088, %v1494
  %1496 = vmatprep.mubr.bf16.mxu0 0
  %1497 = vmatmul.mubr.bf16.gmra.mxu0 %v1160
  %v1498 = vpop.f32.mrf.mxu0
  %v1499 = vadd.f32 %v1087, %v1498
  %v1500 = vpop.f32.mrf.mxu0
  %v1501 = vadd.f32 %v1088, %v1500
  %v1502 = vpop.f32.mrf.mxu0
  %v1503 = vadd.f32 %v1087, %v1502
  %v1504 = vpop.f32.mrf.mxu0
  %v1505 = vadd.f32 %v1088, %v1504
  %1506 = vdwg.mxu0
  %1507 = vmatprep.subr.bf16.mxu0 0
  %1508 = vmatpush1.bf16.xpose.msra.mxu0 %v1232
  %1509 = vmatprep.subr.bf16.mxu0 0
  %1510 = vmatpush1.bf16.xpose.msra.mxu0 %v1229
  %1511 = vmatprep.subr.bf16.mxu0 0
  %1512 = vmatpush1.bf16.xpose.msra.mxu0 %v1226
  %1513 = vmatprep.subr.bf16.mxu0 0
  %1514 = vmatpush1.bf16.xpose.msra.mxu0 %v1223
  %1515 = vmatprep.subr.bf16.mxu0 0
  %1516 = vmatpush1.bf16.xpose.msra.mxu0 %v1220
  %1517 = vmatprep.subr.bf16.mxu0 0
  %1518 = vmatpush1.bf16.xpose.msra.mxu0 %v1217
  %1519 = vmatprep.subr.bf16.mxu0 0
  %1520 = vmatpush1.bf16.xpose.msra.mxu0 %v1214
  %1521 = vmatprep.subr.bf16.mxu0 0
  %1522 = vmatpush1.bf16.xpose.msra.mxu0 %v1211
  %1523 = vmatprep.subr.bf16.mxu0 0
  %1524 = vmatpush2.bf16.xpose.msra.mxu0 0
  %1525 = vmatprep.subr.bf16.mxu0 0
  %1526 = vmatpush2.bf16.xpose.msra.mxu0 0
  %1527 = vmatprep.subr.bf16.mxu0 0
  %1528 = vmatpush2.bf16.xpose.msra.mxu0 0
  %1529 = vmatprep.subr.bf16.mxu0 0
  %1530 = vmatpush2.bf16.xpose.msra.mxu0 0
  %1531 = vmatprep.subr.bf16.mxu0 0
  %1532 = vmatpush2.bf16.xpose.msra.mxu0 0
  %1533 = vmatprep.subr.bf16.mxu0 0
  %1534 = vmatpush2.bf16.xpose.msra.mxu0 0
  %1535 = vmatprep.subr.bf16.mxu0 0
  %1536 = vmatpush2.bf16.xpose.msra.mxu0 0
  %1537 = vmatprep.subr.bf16.mxu0 0
  %1538 = vmatpush2.bf16.xpose.msra.mxu0 0
  %1539 = vmatprep.mubr.bf16.mxu0 0
  %1540 = vmatmul.mubr.bf16.gmra.mxu0 %v1091
  %v1541 = vpop.f32.mrf.mxu0
  %v1542 = vadd.f32 %v1089, %v1541
  %v1543 = vpop.f32.mrf.mxu0
  %v1544 = vpop.f32.mrf.mxu0
  %v1545 = vadd.f32 %v1089, %v1544
  %v1546 = vpop.f32.mrf.mxu0
  %1547 = vmatprep.mubr.bf16.mxu0 0
  %1548 = vmatmul.mubr.bf16.gmra.mxu0 %v1094
  %v1549 = vpop.f32.mrf.mxu0
  %v1550 = vadd.f32 %v1089, %v1549
  %v1551 = vpop.f32.mrf.mxu0
  %v1552 = vpop.f32.mrf.mxu0
  %v1553 = vadd.f32 %v1089, %v1552
  %v1554 = vpop.f32.mrf.mxu0
  %1555 = vmatprep.mubr.bf16.mxu0 0
  %1556 = vmatmul.mubr.bf16.gmra.mxu0 %v1097
  %v1557 = vpop.f32.mrf.mxu0
  %v1558 = vadd.f32 %v1089, %v1557
  %v1559 = vpop.f32.mrf.mxu0
  %v1560 = vpop.f32.mrf.mxu0
  %v1561 = vadd.f32 %v1089, %v1560
  %v1562 = vpop.f32.mrf.mxu0
  %1563 = vmatprep.mubr.bf16.mxu0 0
  %1564 = vmatmul.mubr.bf16.gmra.mxu0 %v1100
  %v1565 = vpop.f32.mrf.mxu0
  %v1566 = vadd.f32 %v1089, %v1565
  %v1567 = vpop.f32.mrf.mxu0
  %v1568 = vpop.f32.mrf.mxu0
  %v1569 = vadd.f32 %v1089, %v1568
  %v1570 = vpop.f32.mrf.mxu0
  %1571 = vmatprep.mubr.bf16.mxu0 0
  %1572 = vmatmul.mubr.bf16.gmra.mxu0 %v1103
  %v1573 = vpop.f32.mrf.mxu0
  %v1574 = vadd.f32 %v1089, %v1573
  %v1575 = vpop.f32.mrf.mxu0
  %v1576 = vpop.f32.mrf.mxu0
  %v1577 = vadd.f32 %v1089, %v1576
  %v1578 = vpop.f32.mrf.mxu0
  %1579 = vmatprep.mubr.bf16.mxu0 0
  %1580 = vmatmul.mubr.bf16.gmra.mxu0 %v1106
  %v1581 = vpop.f32.mrf.mxu0
  %v1582 = vadd.f32 %v1089, %v1581
  %v1583 = vpop.f32.mrf.mxu0
  %v1584 = vpop.f32.mrf.mxu0
  %v1585 = vadd.f32 %v1089, %v1584
  %v1586 = vpop.f32.mrf.mxu0
  %1587 = vmatprep.mubr.bf16.mxu0 0
  %1588 = vmatmul.mubr.bf16.gmra.mxu0 %v1109
  %v1589 = vpop.f32.mrf.mxu0
  %v1590 = vadd.f32 %v1089, %v1589
  %v1591 = vpop.f32.mrf.mxu0
  %v1592 = vpop.f32.mrf.mxu0
  %v1593 = vadd.f32 %v1089, %v1592
  %v1594 = vpop.f32.mrf.mxu0
  %1595 = vmatprep.mubr.bf16.mxu0 0
  %1596 = vmatmul.mubr.bf16.gmra.mxu0 %v1112
  %v1597 = vpop.f32.mrf.mxu0
  %v1598 = vadd.f32 %v1089, %v1597
  %v1599 = vpop.f32.mrf.mxu0
  %v1600 = vpop.f32.mrf.mxu0
  %v1601 = vadd.f32 %v1089, %v1600
  %v1602 = vpop.f32.mrf.mxu0
  %1603 = vmatprep.mubr.bf16.mxu0 0
  %1604 = vmatmul.mubr.bf16.gmra.mxu0 %v1115
  %v1605 = vpop.f32.mrf.mxu0
  %v1606 = vadd.f32 %v1089, %v1605
  %v1607 = vpop.f32.mrf.mxu0
  %v1608 = vpop.f32.mrf.mxu0
  %v1609 = vadd.f32 %v1089, %v1608
  %v1610 = vpop.f32.mrf.mxu0
  %1611 = vmatprep.mubr.bf16.mxu0 0
  %1612 = vmatmul.mubr.bf16.gmra.mxu0 %v1118
  %v1613 = vpop.f32.mrf.mxu0
  %v1614 = vadd.f32 %v1089, %v1613
  %v1615 = vpop.f32.mrf.mxu0
  %v1616 = vpop.f32.mrf.mxu0
  %v1617 = vadd.f32 %v1089, %v1616
  %v1618 = vpop.f32.mrf.mxu0
  %1619 = vmatprep.mubr.bf16.mxu0 0
  %1620 = vmatmul.mubr.bf16.gmra.mxu0 %v1121
  %v1621 = vpop.f32.mrf.mxu0
  %v1622 = vadd.f32 %v1089, %v1621
  %v1623 = vpop.f32.mrf.mxu0
  %v1624 = vpop.f32.mrf.mxu0
  %v1625 = vadd.f32 %v1089, %v1624
  %v1626 = vpop.f32.mrf.mxu0
  %1627 = vmatprep.mubr.bf16.mxu0 0
  %1628 = vmatmul.mubr.bf16.gmra.mxu0 %v1124
  %v1629 = vpop.f32.mrf.mxu0
  %v1630 = vadd.f32 %v1089, %v1629
  %v1631 = vpop.f32.mrf.mxu0
  %v1632 = vpop.f32.mrf.mxu0
  %v1633 = vadd.f32 %v1089, %v1632
  %v1634 = vpop.f32.mrf.mxu0
  %1635 = vmatprep.mubr.bf16.mxu0 0
  %1636 = vmatmul.mubr.bf16.gmra.mxu0 %v1127
  %v1637 = vpop.f32.mrf.mxu0
  %v1638 = vadd.f32 %v1089, %v1637
  %v1639 = vpop.f32.mrf.mxu0
  %v1640 = vpop.f32.mrf.mxu0
  %v1641 = vadd.f32 %v1089, %v1640
  %v1642 = vpop.f32.mrf.mxu0
  %1643 = vmatprep.mubr.bf16.mxu0 0
  %1644 = vmatmul.mubr.bf16.gmra.mxu0 %v1130
  %v1645 = vpop.f32.mrf.mxu0
  %v1646 = vadd.f32 %v1089, %v1645
  %v1647 = vpop.f32.mrf.mxu0
  %v1648 = vpop.f32.mrf.mxu0
  %v1649 = vadd.f32 %v1089, %v1648
  %v1650 = vpop.f32.mrf.mxu0
  %1651 = vmatprep.mubr.bf16.mxu0 0
  %1652 = vmatmul.mubr.bf16.gmra.mxu0 %v1133
  %v1653 = vpop.f32.mrf.mxu0
  %v1654 = vadd.f32 %v1089, %v1653
  %v1655 = vpop.f32.mrf.mxu0
  %v1656 = vpop.f32.mrf.mxu0
  %v1657 = vadd.f32 %v1089, %v1656
  %v1658 = vpop.f32.mrf.mxu0
  %1659 = vmatprep.mubr.bf16.mxu0 0
  %1660 = vmatmul.mubr.bf16.gmra.mxu0 %v1136
  %v1661 = vpop.f32.mrf.mxu0
  %v1662 = vadd.f32 %v1089, %v1661
  %v1663 = vpop.f32.mrf.mxu0
  %v1664 = vpop.f32.mrf.mxu0
  %v1665 = vadd.f32 %v1089, %v1664
  %v1666 = vpop.f32.mrf.mxu0
  %1667 = vmatprep.mubr.bf16.mxu0 0
  %1668 = vmatmul.mubr.bf16.gmra.mxu0 %v1139
  %v1669 = vpop.f32.mrf.mxu0
  %v1670 = vadd.f32 %v1089, %v1669
  %v1671 = vpop.f32.mrf.mxu0
  %v1672 = vpop.f32.mrf.mxu0
  %v1673 = vadd.f32 %v1089, %v1672
  %v1674 = vpop.f32.mrf.mxu0
  %1675 = vmatprep.mubr.bf16.mxu0 0
  %1676 = vmatmul.mubr.bf16.gmra.mxu0 %v1142
  %v1677 = vpop.f32.mrf.mxu0
  %v1678 = vadd.f32 %v1089, %v1677
  %v1679 = vpop.f32.mrf.mxu0
  %v1680 = vpop.f32.mrf.mxu0
  %v1681 = vadd.f32 %v1089, %v1680
  %v1682 = vpop.f32.mrf.mxu0
  %1683 = vmatprep.mubr.bf16.mxu0 0
  %1684 = vmatmul.mubr.bf16.gmra.mxu0 %v1145
  %v1685 = vpop.f32.mrf.mxu0
  %v1686 = vadd.f32 %v1089, %v1685
  %v1687 = vpop.f32.mrf.mxu0
  %v1688 = vpop.f32.mrf.mxu0
  %v1689 = vadd.f32 %v1089, %v1688
  %v1690 = vpop.f32.mrf.mxu0
  %1691 = vmatprep.mubr.bf16.mxu0 0
  %1692 = vmatmul.mubr.bf16.gmra.mxu0 %v1148
  %v1693 = vpop.f32.mrf.mxu0
  %v1694 = vadd.f32 %v1089, %v1693
  %v1695 = vpop.f32.mrf.mxu0
  %v1696 = vpop.f32.mrf.mxu0
  %v1697 = vadd.f32 %v1089, %v1696
  %v1698 = vpop.f32.mrf.mxu0
  %1699 = vmatprep.mubr.bf16.mxu0 0
  %1700 = vmatmul.mubr.bf16.gmra.mxu0 %v1151
  %v1701 = vpop.f32.mrf.mxu0
  %v1702 = vadd.f32 %v1089, %v1701
  %v1703 = vpop.f32.mrf.mxu0
  %v1704 = vpop.f32.mrf.mxu0
  %v1705 = vadd.f32 %v1089, %v1704
  %v1706 = vpop.f32.mrf.mxu0
  %1707 = vmatprep.mubr.bf16.mxu0 0
  %1708 = vmatmul.mubr.bf16.gmra.mxu0 %v1154
  %v1709 = vpop.f32.mrf.mxu0
  %v1710 = vadd.f32 %v1089, %v1709
  %v1711 = vpop.f32.mrf.mxu0
  %v1712 = vpop.f32.mrf.mxu0
  %v1713 = vadd.f32 %v1089, %v1712
  %v1714 = vpop.f32.mrf.mxu0
  %1715 = vmatprep.mubr.bf16.mxu0 0
  %1716 = vmatmul.mubr.bf16.gmra.mxu0 %v1157
  %v1717 = vpop.f32.mrf.mxu0
  %v1718 = vadd.f32 %v1089, %v1717
  %v1719 = vpop.f32.mrf.mxu0
  %v1720 = vpop.f32.mrf.mxu0
  %v1721 = vadd.f32 %v1089, %v1720
  %v1722 = vpop.f32.mrf.mxu0
  %1723 = vmatprep.mubr.bf16.mxu0 0
  %1724 = vmatmul.mubr.bf16.gmra.mxu0 %v1160
  %v1725 = vpop.f32.mrf.mxu0
  %v1726 = vadd.f32 %v1089, %v1725
  %v1727 = vpop.f32.mrf.mxu0
  %v1728 = vpop.f32.mrf.mxu0
  %v1729 = vadd.f32 %v1089, %v1728
  %v1730 = vpop.f32.mrf.mxu0
  %1731 = vdwg.mxu0
  %v1732 = vmax.f32 %v1269, %v1271
  %v1733 = vmax.f32 %v1732, %v1542
  %1734 = vmax.xlane.f32.xlu0 %v1733
  %v1735 = vpop.xlane.xlu0 %1734
  %v1736 = vmax.f32 %v1273, %v1275
  %v1737 = vmax.f32 %v1736, %v1545
  %1738 = vmax.xlane.f32.xlu0 %v1737
  %v1739 = vpop.xlane.xlu0 %1738
  %v1740 = vmax.f32 %v1279, %v1281
  %v1741 = vmax.f32 %v1740, %v1550
  %1742 = vmax.xlane.f32.xlu0 %v1741
  %v1743 = vpop.xlane.xlu0 %1742
  %v1744 = vmax.f32 %v1283, %v1285
  %v1745 = vmax.f32 %v1744, %v1553
  %1746 = vmax.xlane.f32.xlu0 %v1745
  %v1747 = vpop.xlane.xlu0 %1746
  %v1748 = vmax.f32 %v1289, %v1291
  %v1749 = vmax.f32 %v1748, %v1558
  %1750 = vmax.xlane.f32.xlu0 %v1749
  %v1751 = vpop.xlane.xlu0 %1750
  %v1752 = vmax.f32 %v1293, %v1295
  %v1753 = vmax.f32 %v1752, %v1561
  %1754 = vmax.xlane.f32.xlu0 %v1753
  %v1755 = vpop.xlane.xlu0 %1754
  %v1756 = vmax.f32 %v1299, %v1301
  %v1757 = vmax.f32 %v1756, %v1566
  %1758 = vmax.xlane.f32.xlu0 %v1757
  %v1759 = vpop.xlane.xlu0 %1758
  %v1760 = vmax.f32 %v1303, %v1305
  %v1761 = vmax.f32 %v1760, %v1569
  %1762 = vmax.xlane.f32.xlu0 %v1761
  %v1763 = vpop.xlane.xlu0 %1762
  %v1764 = vmax.f32 %v1309, %v1311
  %v1765 = vmax.f32 %v1764, %v1574
  %1766 = vmax.xlane.f32.xlu0 %v1765
  %v1767 = vpop.xlane.xlu0 %1766
  %v1768 = vmax.f32 %v1313, %v1315
  %v1769 = vmax.f32 %v1768, %v1577
  %1770 = vmax.xlane.f32.xlu0 %v1769
  %v1771 = vpop.xlane.xlu0 %1770
  %v1772 = vmax.f32 %v1319, %v1321
  %v1773 = vmax.f32 %v1772, %v1582
  %1774 = vmax.xlane.f32.xlu0 %v1773
  %v1775 = vpop.xlane.xlu0 %1774
  %v1776 = vmax.f32 %v1323, %v1325
  %v1777 = vmax.f32 %v1776, %v1585
  %1778 = vmax.xlane.f32.xlu0 %v1777
  %v1779 = vpop.xlane.xlu0 %1778
  %v1780 = vmax.f32 %v1329, %v1331
  %v1781 = vmax.f32 %v1780, %v1590
  %1782 = vmax.xlane.f32.xlu0 %v1781
  %v1783 = vpop.xlane.xlu0 %1782
  %v1784 = vmax.f32 %v1333, %v1335
  %v1785 = vmax.f32 %v1784, %v1593
  %1786 = vmax.xlane.f32.xlu0 %v1785
  %v1787 = vpop.xlane.xlu0 %1786
  %v1788 = vmax.f32 %v1339, %v1341
  %v1789 = vmax.f32 %v1788, %v1598
  %1790 = vmax.xlane.f32.xlu0 %v1789
  %v1791 = vpop.xlane.xlu0 %1790
  %v1792 = vmax.f32 %v1343, %v1345
  %v1793 = vmax.f32 %v1792, %v1601
  %1794 = vmax.xlane.f32.xlu0 %v1793
  %v1795 = vpop.xlane.xlu0 %1794
  %v1796 = vmax.f32 %v1349, %v1351
  %v1797 = vmax.f32 %v1796, %v1606
  %1798 = vmax.xlane.f32.xlu0 %v1797
  %v1799 = vpop.xlane.xlu0 %1798
  %v1800 = vmax.f32 %v1353, %v1355
  %v1801 = vmax.f32 %v1800, %v1609
  %1802 = vmax.xlane.f32.xlu0 %v1801
  %v1803 = vpop.xlane.xlu0 %1802
  %v1804 = vmax.f32 %v1359, %v1361
  %v1805 = vmax.f32 %v1804, %v1614
  %1806 = vmax.xlane.f32.xlu0 %v1805
  %v1807 = vpop.xlane.xlu0 %1806
  %v1808 = vmax.f32 %v1363, %v1365
  %v1809 = vmax.f32 %v1808, %v1617
  %1810 = vmax.xlane.f32.xlu0 %v1809
  %v1811 = vpop.xlane.xlu0 %1810
  %v1812 = vmax.f32 %v1369, %v1371
  %v1813 = vmax.f32 %v1812, %v1622
  %1814 = vmax.xlane.f32.xlu0 %v1813
  %v1815 = vpop.xlane.xlu0 %1814
  %v1816 = vmax.f32 %v1373, %v1375
  %v1817 = vmax.f32 %v1816, %v1625
  %1818 = vmax.xlane.f32.xlu0 %v1817
  %v1819 = vpop.xlane.xlu0 %1818
  %v1820 = vmax.f32 %v1379, %v1381
  %v1821 = vmax.f32 %v1820, %v1630
  %1822 = vmax.xlane.f32.xlu0 %v1821
  %v1823 = vpop.xlane.xlu0 %1822
  %v1824 = vmax.f32 %v1383, %v1385
  %v1825 = vmax.f32 %v1824, %v1633
  %1826 = vmax.xlane.f32.xlu0 %v1825
  %v1827 = vpop.xlane.xlu0 %1826
  %v1828 = vmax.f32 %v1389, %v1391
  %v1829 = vmax.f32 %v1828, %v1638
  %1830 = vmax.xlane.f32.xlu0 %v1829
  %v1831 = vpop.xlane.xlu0 %1830
  %v1832 = vmax.f32 %v1393, %v1395
  %v1833 = vmax.f32 %v1832, %v1641
  %1834 = vmax.xlane.f32.xlu0 %v1833
  %v1835 = vpop.xlane.xlu0 %1834
  %v1836 = vmax.f32 %v1399, %v1401
  %v1837 = vmax.f32 %v1836, %v1646
  %1838 = vmax.xlane.f32.xlu0 %v1837
  %v1839 = vpop.xlane.xlu0 %1838
  %v1840 = vmax.f32 %v1403, %v1405
  %v1841 = vmax.f32 %v1840, %v1649
  %1842 = vmax.xlane.f32.xlu0 %v1841
  %v1843 = vpop.xlane.xlu0 %1842
  %v1844 = vmax.f32 %v1409, %v1411
  %v1845 = vmax.f32 %v1844, %v1654
  %1846 = vmax.xlane.f32.xlu0 %v1845
  %v1847 = vpop.xlane.xlu0 %1846
  %v1848 = vmax.f32 %v1413, %v1415
  %v1849 = vmax.f32 %v1848, %v1657
  %1850 = vmax.xlane.f32.xlu0 %v1849
  %v1851 = vpop.xlane.xlu0 %1850
  %v1852 = vmax.f32 %v1419, %v1421
  %v1853 = vmax.f32 %v1852, %v1662
  %1854 = vmax.xlane.f32.xlu0 %v1853
  %v1855 = vpop.xlane.xlu0 %1854
  %v1856 = vmax.f32 %v1423, %v1425
  %v1857 = vmax.f32 %v1856, %v1665
  %1858 = vmax.xlane.f32.xlu0 %v1857
  %v1859 = vpop.xlane.xlu0 %1858
  %v1860 = vmax.f32 %v1429, %v1431
  %v1861 = vmax.f32 %v1860, %v1670
  %1862 = vmax.xlane.f32.xlu0 %v1861
  %v1863 = vpop.xlane.xlu0 %1862
  %v1864 = vmax.f32 %v1433, %v1435
  %v1865 = vmax.f32 %v1864, %v1673
  %1866 = vmax.xlane.f32.xlu0 %v1865
  %v1867 = vpop.xlane.xlu0 %1866
  %v1868 = vmax.f32 %v1439, %v1441
  %v1869 = vmax.f32 %v1868, %v1678
  %1870 = vmax.xlane.f32.xlu0 %v1869
  %v1871 = vpop.xlane.xlu0 %1870
  %v1872 = vmax.f32 %v1443, %v1445
  %v1873 = vmax.f32 %v1872, %v1681
  %1874 = vmax.xlane.f32.xlu0 %v1873
  %v1875 = vpop.xlane.xlu0 %1874
  %v1876 = vmax.f32 %v1449, %v1451
  %v1877 = vmax.f32 %v1876, %v1686
  %1878 = vmax.xlane.f32.xlu0 %v1877
  %v1879 = vpop.xlane.xlu0 %1878
  %v1880 = vmax.f32 %v1453, %v1455
  %v1881 = vmax.f32 %v1880, %v1689
  %1882 = vmax.xlane.f32.xlu0 %v1881
  %v1883 = vpop.xlane.xlu0 %1882
  %v1884 = vmax.f32 %v1459, %v1461
  %v1885 = vmax.f32 %v1884, %v1694
  %1886 = vmax.xlane.f32.xlu0 %v1885
  %v1887 = vpop.xlane.xlu0 %1886
  %v1888 = vmax.f32 %v1463, %v1465
  %v1889 = vmax.f32 %v1888, %v1697
  %1890 = vmax.xlane.f32.xlu0 %v1889
  %v1891 = vpop.xlane.xlu0 %1890
  %v1892 = vmax.f32 %v1469, %v1471
  %v1893 = vmax.f32 %v1892, %v1702
  %1894 = vmax.xlane.f32.xlu0 %v1893
  %v1895 = vpop.xlane.xlu0 %1894
  %v1896 = vmax.f32 %v1473, %v1475
  %v1897 = vmax.f32 %v1896, %v1705
  %1898 = vmax.xlane.f32.xlu0 %v1897
  %v1899 = vpop.xlane.xlu0 %1898
  %v1900 = vmax.f32 %v1479, %v1481
  %v1901 = vmax.f32 %v1900, %v1710
  %1902 = vmax.xlane.f32.xlu0 %v1901
  %v1903 = vpop.xlane.xlu0 %1902
  %v1904 = vmax.f32 %v1483, %v1485
  %v1905 = vmax.f32 %v1904, %v1713
  %1906 = vmax.xlane.f32.xlu0 %v1905
  %v1907 = vpop.xlane.xlu0 %1906
  %v1908 = vmax.f32 %v1489, %v1491
  %v1909 = vmax.f32 %v1908, %v1718
  %1910 = vmax.xlane.f32.xlu0 %v1909
  %v1911 = vpop.xlane.xlu0 %1910
  %v1912 = vmax.f32 %v1493, %v1495
  %v1913 = vmax.f32 %v1912, %v1721
  %1914 = vmax.xlane.f32.xlu0 %v1913
  %v1915 = vpop.xlane.xlu0 %1914
  %v1916 = vmax.f32 %v1499, %v1501
  %v1917 = vmax.f32 %v1916, %v1726
  %1918 = vmax.xlane.f32.xlu0 %v1917
  %v1919 = vpop.xlane.xlu0 %1918
  %v1920 = vmax.f32 %v1503, %v1505
  %v1921 = vmax.f32 %v1920, %v1729
  %1922 = vmax.xlane.f32.xlu0 %v1921
  %v1923 = vpop.xlane.xlu0 %1922
  %v1924 = vsub.f32 %v1269, %v1735
  %v1925 = vsub.f32 %v1271, %v1735
  %v1926 = vsub.f32 %v1542, %v1735
  %v1927 = vsub.f32 %v1273, %v1739
  %v1928 = vsub.f32 %v1275, %v1739
  %v1929 = vsub.f32 %v1545, %v1739
  %v1930 = vsub.f32 %v1279, %v1743
  %v1931 = vsub.f32 %v1281, %v1743
  %v1932 = vsub.f32 %v1550, %v1743
  %v1933 = vsub.f32 %v1283, %v1747
  %v1934 = vsub.f32 %v1285, %v1747
  %v1935 = vsub.f32 %v1553, %v1747
  %v1936 = vsub.f32 %v1289, %v1751
  %v1937 = vsub.f32 %v1291, %v1751
  %v1938 = vsub.f32 %v1558, %v1751
  %v1939 = vsub.f32 %v1293, %v1755
  %v1940 = vsub.f32 %v1295, %v1755
  %v1941 = vsub.f32 %v1561, %v1755
  %v1942 = vsub.f32 %v1299, %v1759
  %v1943 = vsub.f32 %v1301, %v1759
  %v1944 = vsub.f32 %v1566, %v1759
  %v1945 = vsub.f32 %v1303, %v1763
  %v1946 = vsub.f32 %v1305, %v1763
  %v1947 = vsub.f32 %v1569, %v1763
  %v1948 = vsub.f32 %v1309, %v1767
  %v1949 = vsub.f32 %v1311, %v1767
  %v1950 = vsub.f32 %v1574, %v1767
  %v1951 = vsub.f32 %v1313, %v1771
  %v1952 = vsub.f32 %v1315, %v1771
  %v1953 = vsub.f32 %v1577, %v1771
  %v1954 = vsub.f32 %v1319, %v1775
  %v1955 = vsub.f32 %v1321, %v1775
  %v1956 = vsub.f32 %v1582, %v1775
  %v1957 = vsub.f32 %v1323, %v1779
  %v1958 = vsub.f32 %v1325, %v1779
  %v1959 = vsub.f32 %v1585, %v1779
  %v1960 = vsub.f32 %v1329, %v1783
  %v1961 = vsub.f32 %v1331, %v1783
  %v1962 = vsub.f32 %v1590, %v1783
  %v1963 = vsub.f32 %v1333, %v1787
  %v1964 = vsub.f32 %v1335, %v1787
  %v1965 = vsub.f32 %v1593, %v1787
  %v1966 = vsub.f32 %v1339, %v1791
  %v1967 = vsub.f32 %v1341, %v1791
  %v1968 = vsub.f32 %v1598, %v1791
  %v1969 = vsub.f32 %v1343, %v1795
  %v1970 = vsub.f32 %v1345, %v1795
  %v1971 = vsub.f32 %v1601, %v1795
  %v1972 = vsub.f32 %v1349, %v1799
  %v1973 = vsub.f32 %v1351, %v1799
  %v1974 = vsub.f32 %v1606, %v1799
  %v1975 = vsub.f32 %v1353, %v1803
  %v1976 = vsub.f32 %v1355, %v1803
  %v1977 = vsub.f32 %v1609, %v1803
  %v1978 = vsub.f32 %v1359, %v1807
  %v1979 = vsub.f32 %v1361, %v1807
  %v1980 = vsub.f32 %v1614, %v1807
  %v1981 = vsub.f32 %v1363, %v1811
  %v1982 = vsub.f32 %v1365, %v1811
  %v1983 = vsub.f32 %v1617, %v1811
  %v1984 = vsub.f32 %v1369, %v1815
  %v1985 = vsub.f32 %v1371, %v1815
  %v1986 = vsub.f32 %v1622, %v1815
  %v1987 = vsub.f32 %v1373, %v1819
  %v1988 = vsub.f32 %v1375, %v1819
  %v1989 = vsub.f32 %v1625, %v1819
  %v1990 = vsub.f32 %v1379, %v1823
  %v1991 = vsub.f32 %v1381, %v1823
  %v1992 = vsub.f32 %v1630, %v1823
  %v1993 = vsub.f32 %v1383, %v1827
  %v1994 = vsub.f32 %v1385, %v1827
  %v1995 = vsub.f32 %v1633, %v1827
  %v1996 = vsub.f32 %v1389, %v1831
  %v1997 = vsub.f32 %v1391, %v1831
  %v1998 = vsub.f32 %v1638, %v1831
  %v1999 = vsub.f32 %v1393, %v1835
  %v2000 = vsub.f32 %v1395, %v1835
  %v2001 = vsub.f32 %v1641, %v1835
  %v2002 = vsub.f32 %v1399, %v1839
  %v2003 = vsub.f32 %v1401, %v1839
  %v2004 = vsub.f32 %v1646, %v1839
  %v2005 = vsub.f32 %v1403, %v1843
  %v2006 = vsub.f32 %v1405, %v1843
  %v2007 = vsub.f32 %v1649, %v1843
  %v2008 = vsub.f32 %v1409, %v1847
  %v2009 = vsub.f32 %v1411, %v1847
  %v2010 = vsub.f32 %v1654, %v1847
  %v2011 = vsub.f32 %v1413, %v1851
  %v2012 = vsub.f32 %v1415, %v1851
  %v2013 = vsub.f32 %v1657, %v1851
  %v2014 = vsub.f32 %v1419, %v1855
  %v2015 = vsub.f32 %v1421, %v1855
  %v2016 = vsub.f32 %v1662, %v1855
  %v2017 = vsub.f32 %v1423, %v1859
  %v2018 = vsub.f32 %v1425, %v1859
  %v2019 = vsub.f32 %v1665, %v1859
  %v2020 = vsub.f32 %v1429, %v1863
  %v2021 = vsub.f32 %v1431, %v1863
  %v2022 = vsub.f32 %v1670, %v1863
  %v2023 = vsub.f32 %v1433, %v1867
  %v2024 = vsub.f32 %v1435, %v1867
  %v2025 = vsub.f32 %v1673, %v1867
  %v2026 = vsub.f32 %v1439, %v1871
  %v2027 = vsub.f32 %v1441, %v1871
  %v2028 = vsub.f32 %v1678, %v1871
  %v2029 = vsub.f32 %v1443, %v1875
  %v2030 = vsub.f32 %v1445, %v1875
  %v2031 = vsub.f32 %v1681, %v1875
  %v2032 = vsub.f32 %v1449, %v1879
  %v2033 = vsub.f32 %v1451, %v1879
  %v2034 = vsub.f32 %v1686, %v1879
  %v2035 = vsub.f32 %v1453, %v1883
  %v2036 = vsub.f32 %v1455, %v1883
  %v2037 = vsub.f32 %v1689, %v1883
  %v2038 = vsub.f32 %v1459, %v1887
  %v2039 = vsub.f32 %v1461, %v1887
  %v2040 = vsub.f32 %v1694, %v1887
  %v2041 = vsub.f32 %v1463, %v1891
  %v2042 = vsub.f32 %v1465, %v1891
  %v2043 = vsub.f32 %v1697, %v1891
  %v2044 = vsub.f32 %v1469, %v1895
  %v2045 = vsub.f32 %v1471, %v1895
  %v2046 = vsub.f32 %v1702, %v1895
  %v2047 = vsub.f32 %v1473, %v1899
  %v2048 = vsub.f32 %v1475, %v1899
  %v2049 = vsub.f32 %v1705, %v1899
  %v2050 = vsub.f32 %v1479, %v1903
  %v2051 = vsub.f32 %v1481, %v1903
  %v2052 = vsub.f32 %v1710, %v1903
  %v2053 = vsub.f32 %v1483, %v1907
  %v2054 = vsub.f32 %v1485, %v1907
  %v2055 = vsub.f32 %v1713, %v1907
  %v2056 = vsub.f32 %v1489, %v1911
  %v2057 = vsub.f32 %v1491, %v1911
  %v2058 = vsub.f32 %v1718, %v1911
  %v2059 = vsub.f32 %v1493, %v1915
  %v2060 = vsub.f32 %v1495, %v1915
  %v2061 = vsub.f32 %v1721, %v1915
  %v2062 = vsub.f32 %v1499, %v1919
  %v2063 = vsub.f32 %v1501, %v1919
  %v2064 = vsub.f32 %v1726, %v1919
  %v2065 = vsub.f32 %v1503, %v1923
  %v2066 = vsub.f32 %v1505, %v1923
  %v2067 = vsub.f32 %v1729, %v1923
  %v2068 = vmul.f32 %v1924, 1.442695
  %v2069 = vpow.pop %v2068
  %v2070 = vmul.f32 %v1925, 1.442695
  %v2071 = vpow.pop %v2070
  %v2072 = vmul.f32 %v1926, 1.442695
  %v2073 = vpow.pop %v2072
  %v2074 = vmul.f32 %v1927, 1.442695
  %v2075 = vpow.pop %v2074
  %v2076 = vmul.f32 %v1928, 1.442695
  %v2077 = vpow.pop %v2076
  %v2078 = vmul.f32 %v1929, 1.442695
  %v2079 = vpow.pop %v2078
  %v2080 = vmul.f32 %v1930, 1.442695
  %v2081 = vpow.pop %v2080
  %v2082 = vmul.f32 %v1931, 1.442695
  %v2083 = vpow.pop %v2082
  %v2084 = vmul.f32 %v1932, 1.442695
  %v2085 = vpow.pop %v2084
  %v2086 = vmul.f32 %v1933, 1.442695
  %v2087 = vpow.pop %v2086
  %v2088 = vmul.f32 %v1934, 1.442695
  %v2089 = vpow.pop %v2088
  %v2090 = vmul.f32 %v1935, 1.442695
  %v2091 = vpow.pop %v2090
  %v2092 = vmul.f32 %v1936, 1.442695
  %v2093 = vpow.pop %v2092
  %v2094 = vmul.f32 %v1937, 1.442695
  %v2095 = vpow.pop %v2094
  %v2096 = vmul.f32 %v1938, 1.442695
  %v2097 = vpow.pop %v2096
  %v2098 = vmul.f32 %v1939, 1.442695
  %v2099 = vpow.pop %v2098
  %v2100 = vmul.f32 %v1940, 1.442695
  %v2101 = vpow.pop %v2100
  %v2102 = vmul.f32 %v1941, 1.442695
  %v2103 = vpow.pop %v2102
  %v2104 = vmul.f32 %v1942, 1.442695
  %v2105 = vpow.pop %v2104
  %v2106 = vmul.f32 %v1943, 1.442695
  %v2107 = vpow.pop %v2106
  %v2108 = vmul.f32 %v1944, 1.442695
  %v2109 = vpow.pop %v2108
  %v2110 = vmul.f32 %v1945, 1.442695
  %v2111 = vpow.pop %v2110
  %v2112 = vmul.f32 %v1946, 1.442695
  %v2113 = vpow.pop %v2112
  %v2114 = vmul.f32 %v1947, 1.442695
  %v2115 = vpow.pop %v2114
  %v2116 = vmul.f32 %v1948, 1.442695
  %v2117 = vpow.pop %v2116
  %v2118 = vmul.f32 %v1949, 1.442695
  %v2119 = vpow.pop %v2118
  %v2120 = vmul.f32 %v1950, 1.442695
  %v2121 = vpow.pop %v2120
  %v2122 = vmul.f32 %v1951, 1.442695
  %v2123 = vpow.pop %v2122
  %v2124 = vmul.f32 %v1952, 1.442695
  %v2125 = vpow.pop %v2124
  %v2126 = vmul.f32 %v1953, 1.442695
  %v2127 = vpow.pop %v2126
  %v2128 = vmul.f32 %v1954, 1.442695
  %v2129 = vpow.pop %v2128
  %v2130 = vmul.f32 %v1955, 1.442695
  %v2131 = vpow.pop %v2130
  %v2132 = vmul.f32 %v1956, 1.442695
  %v2133 = vpow.pop %v2132
  %v2134 = vmul.f32 %v1957, 1.442695
  %v2135 = vpow.pop %v2134
  %v2136 = vmul.f32 %v1958, 1.442695
  %v2137 = vpow.pop %v2136
  %v2138 = vmul.f32 %v1959, 1.442695
  %v2139 = vpow.pop %v2138
  %v2140 = vmul.f32 %v1960, 1.442695
  %v2141 = vpow.pop %v2140
  %v2142 = vmul.f32 %v1961, 1.442695
  %v2143 = vpow.pop %v2142
  %v2144 = vmul.f32 %v1962, 1.442695
  %v2145 = vpow.pop %v2144
  %v2146 = vmul.f32 %v1963, 1.442695
  %v2147 = vpow.pop %v2146
  %v2148 = vmul.f32 %v1964, 1.442695
  %v2149 = vpow.pop %v2148
  %v2150 = vmul.f32 %v1965, 1.442695
  %v2151 = vpow.pop %v2150
  %v2152 = vmul.f32 %v1966, 1.442695
  %v2153 = vpow.pop %v2152
  %v2154 = vmul.f32 %v1967, 1.442695
  %v2155 = vpow.pop %v2154
  %v2156 = vmul.f32 %v1968, 1.442695
  %v2157 = vpow.pop %v2156
  %v2158 = vmul.f32 %v1969, 1.442695
  %v2159 = vpow.pop %v2158
  %v2160 = vmul.f32 %v1970, 1.442695
  %v2161 = vpow.pop %v2160
  %v2162 = vmul.f32 %v1971, 1.442695
  %v2163 = vpow.pop %v2162
  %v2164 = vmul.f32 %v1972, 1.442695
  %v2165 = vpow.pop %v2164
  %v2166 = vmul.f32 %v1973, 1.442695
  %v2167 = vpow.pop %v2166
  %v2168 = vmul.f32 %v1974, 1.442695
  %v2169 = vpow.pop %v2168
  %v2170 = vmul.f32 %v1975, 1.442695
  %v2171 = vpow.pop %v2170
  %v2172 = vmul.f32 %v1976, 1.442695
  %v2173 = vpow.pop %v2172
  %v2174 = vmul.f32 %v1977, 1.442695
  %v2175 = vpow.pop %v2174
  %v2176 = vmul.f32 %v1978, 1.442695
  %v2177 = vpow.pop %v2176
  %v2178 = vmul.f32 %v1979, 1.442695
  %v2179 = vpow.pop %v2178
  %v2180 = vmul.f32 %v1980, 1.442695
  %v2181 = vpow.pop %v2180
  %v2182 = vmul.f32 %v1981, 1.442695
  %v2183 = vpow.pop %v2182
  %v2184 = vmul.f32 %v1982, 1.442695
  %v2185 = vpow.pop %v2184
  %v2186 = vmul.f32 %v1983, 1.442695
  %v2187 = vpow.pop %v2186
  %v2188 = vmul.f32 %v1984, 1.442695
  %v2189 = vpow.pop %v2188
  %v2190 = vmul.f32 %v1985, 1.442695
  %v2191 = vpow.pop %v2190
  %v2192 = vmul.f32 %v1986, 1.442695
  %v2193 = vpow.pop %v2192
  %v2194 = vmul.f32 %v1987, 1.442695
  %v2195 = vpow.pop %v2194
  %v2196 = vmul.f32 %v1988, 1.442695
  %v2197 = vpow.pop %v2196
  %v2198 = vmul.f32 %v1989, 1.442695
  %v2199 = vpow.pop %v2198
  %v2200 = vmul.f32 %v1990, 1.442695
  %v2201 = vpow.pop %v2200
  %v2202 = vmul.f32 %v1991, 1.442695
  %v2203 = vpow.pop %v2202
  %v2204 = vmul.f32 %v1992, 1.442695
  %v2205 = vpow.pop %v2204
  %v2206 = vmul.f32 %v1993, 1.442695
  %v2207 = vpow.pop %v2206
  %v2208 = vmul.f32 %v1994, 1.442695
  %v2209 = vpow.pop %v2208
  %v2210 = vmul.f32 %v1995, 1.442695
  %v2211 = vpow.pop %v2210
  %v2212 = vmul.f32 %v1996, 1.442695
  %v2213 = vpow.pop %v2212
  %v2214 = vmul.f32 %v1997, 1.442695
  %v2215 = vpow.pop %v2214
  %v2216 = vmul.f32 %v1998, 1.442695
  %v2217 = vpow.pop %v2216
  %v2218 = vmul.f32 %v1999, 1.442695
  %v2219 = vpow.pop %v2218
  %v2220 = vmul.f32 %v2000, 1.442695
  %v2221 = vpow.pop %v2220
  %v2222 = vmul.f32 %v2001, 1.442695
  %v2223 = vpow.pop %v2222
  %v2224 = vmul.f32 %v2002, 1.442695
  %v2225 = vpow.pop %v2224
  %v2226 = vmul.f32 %v2003, 1.442695
  %v2227 = vpow.pop %v2226
  %v2228 = vmul.f32 %v2004, 1.442695
  %v2229 = vpow.pop %v2228
  %v2230 = vmul.f32 %v2005, 1.442695
  %v2231 = vpow.pop %v2230
  %v2232 = vmul.f32 %v2006, 1.442695
  %v2233 = vpow.pop %v2232
  %v2234 = vmul.f32 %v2007, 1.442695
  %v2235 = vpow.pop %v2234
  %v2236 = vmul.f32 %v2008, 1.442695
  %v2237 = vpow.pop %v2236
  %v2238 = vmul.f32 %v2009, 1.442695
  %v2239 = vpow.pop %v2238
  %v2240 = vmul.f32 %v2010, 1.442695
  %v2241 = vpow.pop %v2240
  %v2242 = vmul.f32 %v2011, 1.442695
  %v2243 = vpow.pop %v2242
  %v2244 = vmul.f32 %v2012, 1.442695
  %v2245 = vpow.pop %v2244
  %v2246 = vmul.f32 %v2013, 1.442695
  %v2247 = vpow.pop %v2246
  %v2248 = vmul.f32 %v2014, 1.442695
  %v2249 = vpow.pop %v2248
  %v2250 = vmul.f32 %v2015, 1.442695
  %v2251 = vpow.pop %v2250
  %v2252 = vmul.f32 %v2016, 1.442695
  %v2253 = vpow.pop %v2252
  %v2254 = vmul.f32 %v2017, 1.442695
  %v2255 = vpow.pop %v2254
  %v2256 = vmul.f32 %v2018, 1.442695
  %v2257 = vpow.pop %v2256
  %v2258 = vmul.f32 %v2019, 1.442695
  %v2259 = vpow.pop %v2258
  %v2260 = vmul.f32 %v2020, 1.442695
  %v2261 = vpow.pop %v2260
  %v2262 = vmul.f32 %v2021, 1.442695
  %v2263 = vpow.pop %v2262
  %v2264 = vmul.f32 %v2022, 1.442695
  %v2265 = vpow.pop %v2264
  %v2266 = vmul.f32 %v2023, 1.442695
  %v2267 = vpow.pop %v2266
  %v2268 = vmul.f32 %v2024, 1.442695
  %v2269 = vpow.pop %v2268
  %v2270 = vmul.f32 %v2025, 1.442695
  %v2271 = vpow.pop %v2270
  %v2272 = vmul.f32 %v2026, 1.442695
  %v2273 = vpow.pop %v2272
  %v2274 = vmul.f32 %v2027, 1.442695
  %v2275 = vpow.pop %v2274
  %v2276 = vmul.f32 %v2028, 1.442695
  %v2277 = vpow.pop %v2276
  %v2278 = vmul.f32 %v2029, 1.442695
  %v2279 = vpow.pop %v2278
  %v2280 = vmul.f32 %v2030, 1.442695
  %v2281 = vpow.pop %v2280
  %v2282 = vmul.f32 %v2031, 1.442695
  %v2283 = vpow.pop %v2282
  %v2284 = vmul.f32 %v2032, 1.442695
  %v2285 = vpow.pop %v2284
  %v2286 = vmul.f32 %v2033, 1.442695
  %v2287 = vpow.pop %v2286
  %v2288 = vmul.f32 %v2034, 1.442695
  %v2289 = vpow.pop %v2288
  %v2290 = vmul.f32 %v2035, 1.442695
  %v2291 = vpow.pop %v2290
  %v2292 = vmul.f32 %v2036, 1.442695
  %v2293 = vpow.pop %v2292
  %v2294 = vmul.f32 %v2037, 1.442695
  %v2295 = vpow.pop %v2294
  %v2296 = vmul.f32 %v2038, 1.442695
  %v2297 = vpow.pop %v2296
  %v2298 = vmul.f32 %v2039, 1.442695
  %v2299 = vpow.pop %v2298
  %v2300 = vmul.f32 %v2040, 1.442695
  %v2301 = vpow.pop %v2300
  %v2302 = vmul.f32 %v2041, 1.442695
  %v2303 = vpow.pop %v2302
  %v2304 = vmul.f32 %v2042, 1.442695
  %v2305 = vpow.pop %v2304
  %v2306 = vmul.f32 %v2043, 1.442695
  %v2307 = vpow.pop %v2306
  %v2308 = vmul.f32 %v2044, 1.442695
  %v2309 = vpow.pop %v2308
  %v2310 = vmul.f32 %v2045, 1.442695
  %v2311 = vpow.pop %v2310
  %v2312 = vmul.f32 %v2046, 1.442695
  %v2313 = vpow.pop %v2312
  %v2314 = vmul.f32 %v2047, 1.442695
  %v2315 = vpow.pop %v2314
  %v2316 = vmul.f32 %v2048, 1.442695
  %v2317 = vpow.pop %v2316
  %v2318 = vmul.f32 %v2049, 1.442695
  %v2319 = vpow.pop %v2318
  %v2320 = vmul.f32 %v2050, 1.442695
  %v2321 = vpow.pop %v2320
  %v2322 = vmul.f32 %v2051, 1.442695
  %v2323 = vpow.pop %v2322
  %v2324 = vmul.f32 %v2052, 1.442695
  %v2325 = vpow.pop %v2324
  %v2326 = vmul.f32 %v2053, 1.442695
  %v2327 = vpow.pop %v2326
  %v2328 = vmul.f32 %v2054, 1.442695
  %v2329 = vpow.pop %v2328
  %v2330 = vmul.f32 %v2055, 1.442695
  %v2331 = vpow.pop %v2330
  %v2332 = vmul.f32 %v2056, 1.442695
  %v2333 = vpow.pop %v2332
  %v2334 = vmul.f32 %v2057, 1.442695
  %v2335 = vpow.pop %v2334
  %v2336 = vmul.f32 %v2058, 1.442695
  %v2337 = vpow.pop %v2336
  %v2338 = vmul.f32 %v2059, 1.442695
  %v2339 = vpow.pop %v2338
  %v2340 = vmul.f32 %v2060, 1.442695
  %v2341 = vpow.pop %v2340
  %v2342 = vmul.f32 %v2061, 1.442695
  %v2343 = vpow.pop %v2342
  %v2344 = vmul.f32 %v2062, 1.442695
  %v2345 = vpow.pop %v2344
  %v2346 = vmul.f32 %v2063, 1.442695
  %v2347 = vpow.pop %v2346
  %v2348 = vmul.f32 %v2064, 1.442695
  %v2349 = vpow.pop %v2348
  %v2350 = vmul.f32 %v2065, 1.442695
  %v2351 = vpow.pop %v2350
  %v2352 = vmul.f32 %v2066, 1.442695
  %v2353 = vpow.pop %v2352
  %v2354 = vmul.f32 %v2067, 1.442695
  %v2355 = vpow.pop %v2354
  %v2356 = vadd.f32 %v2069, %v2071
  %v2357 = vadd.f32 %v2356, %v2073
  %2358 = vadd.xlane.f32.xlu0 %v2357
  %v2359 = vpop.xlane.xlu0 %2358
  %v2360 = vadd.f32 %v2075, %v2077
  %v2361 = vadd.f32 %v2360, %v2079
  %2362 = vadd.xlane.f32.xlu0 %v2361
  %v2363 = vpop.xlane.xlu0 %2362
  %v2364 = vadd.f32 %v2081, %v2083
  %v2365 = vadd.f32 %v2364, %v2085
  %2366 = vadd.xlane.f32.xlu0 %v2365
  %v2367 = vpop.xlane.xlu0 %2366
  %v2368 = vadd.f32 %v2087, %v2089
  %v2369 = vadd.f32 %v2368, %v2091
  %2370 = vadd.xlane.f32.xlu0 %v2369
  %v2371 = vpop.xlane.xlu0 %2370
  %v2372 = vadd.f32 %v2093, %v2095
  %v2373 = vadd.f32 %v2372, %v2097
  %2374 = vadd.xlane.f32.xlu0 %v2373
  %v2375 = vpop.xlane.xlu0 %2374
  %v2376 = vadd.f32 %v2099, %v2101
  %v2377 = vadd.f32 %v2376, %v2103
  %2378 = vadd.xlane.f32.xlu0 %v2377
  %v2379 = vpop.xlane.xlu0 %2378
  %v2380 = vadd.f32 %v2105, %v2107
  %v2381 = vadd.f32 %v2380, %v2109
  %2382 = vadd.xlane.f32.xlu0 %v2381
  %v2383 = vpop.xlane.xlu0 %2382
  %v2384 = vadd.f32 %v2111, %v2113
  %v2385 = vadd.f32 %v2384, %v2115
  %2386 = vadd.xlane.f32.xlu0 %v2385
  %v2387 = vpop.xlane.xlu0 %2386
  %v2388 = vadd.f32 %v2117, %v2119
  %v2389 = vadd.f32 %v2388, %v2121
  %2390 = vadd.xlane.f32.xlu0 %v2389
  %v2391 = vpop.xlane.xlu0 %2390
  %v2392 = vadd.f32 %v2123, %v2125
  %v2393 = vadd.f32 %v2392, %v2127
  %2394 = vadd.xlane.f32.xlu0 %v2393
  %v2395 = vpop.xlane.xlu0 %2394
  %v2396 = vadd.f32 %v2129, %v2131
  %v2397 = vadd.f32 %v2396, %v2133
  %2398 = vadd.xlane.f32.xlu0 %v2397
  %v2399 = vpop.xlane.xlu0 %2398
  %v2400 = vadd.f32 %v2135, %v2137
  %v2401 = vadd.f32 %v2400, %v2139
  %2402 = vadd.xlane.f32.xlu0 %v2401
  %v2403 = vpop.xlane.xlu0 %2402
  %v2404 = vadd.f32 %v2141, %v2143
  %v2405 = vadd.f32 %v2404, %v2145
  %2406 = vadd.xlane.f32.xlu0 %v2405
  %v2407 = vpop.xlane.xlu0 %2406
  %v2408 = vadd.f32 %v2147, %v2149
  %v2409 = vadd.f32 %v2408, %v2151
  %2410 = vadd.xlane.f32.xlu0 %v2409
  %v2411 = vpop.xlane.xlu0 %2410
  %v2412 = vadd.f32 %v2153, %v2155
  %v2413 = vadd.f32 %v2412, %v2157
  %2414 = vadd.xlane.f32.xlu0 %v2413
  %v2415 = vpop.xlane.xlu0 %2414
  %v2416 = vadd.f32 %v2159, %v2161
  %v2417 = vadd.f32 %v2416, %v2163
  %2418 = vadd.xlane.f32.xlu0 %v2417
  %v2419 = vpop.xlane.xlu0 %2418
  %v2420 = vadd.f32 %v2165, %v2167
  %v2421 = vadd.f32 %v2420, %v2169
  %2422 = vadd.xlane.f32.xlu0 %v2421
  %v2423 = vpop.xlane.xlu0 %2422
  %v2424 = vadd.f32 %v2171, %v2173
  %v2425 = vadd.f32 %v2424, %v2175
  %2426 = vadd.xlane.f32.xlu0 %v2425
  %v2427 = vpop.xlane.xlu0 %2426
  %v2428 = vadd.f32 %v2177, %v2179
  %v2429 = vadd.f32 %v2428, %v2181
  %2430 = vadd.xlane.f32.xlu0 %v2429
  %v2431 = vpop.xlane.xlu0 %2430
  %v2432 = vadd.f32 %v2183, %v2185
  %v2433 = vadd.f32 %v2432, %v2187
  %2434 = vadd.xlane.f32.xlu0 %v2433
  %v2435 = vpop.xlane.xlu0 %2434
  %v2436 = vadd.f32 %v2189, %v2191
  %v2437 = vadd.f32 %v2436, %v2193
  %2438 = vadd.xlane.f32.xlu0 %v2437
  %v2439 = vpop.xlane.xlu0 %2438
  %v2440 = vadd.f32 %v2195, %v2197
  %v2441 = vadd.f32 %v2440, %v2199
  %2442 = vadd.xlane.f32.xlu0 %v2441
  %v2443 = vpop.xlane.xlu0 %2442
  %v2444 = vadd.f32 %v2201, %v2203
  %v2445 = vadd.f32 %v2444, %v2205
  %2446 = vadd.xlane.f32.xlu0 %v2445
  %v2447 = vpop.xlane.xlu0 %2446
  %v2448 = vadd.f32 %v2207, %v2209
  %v2449 = vadd.f32 %v2448, %v2211
  %2450 = vadd.xlane.f32.xlu0 %v2449
  %v2451 = vpop.xlane.xlu0 %2450
  %v2452 = vadd.f32 %v2213, %v2215
  %v2453 = vadd.f32 %v2452, %v2217
  %2454 = vadd.xlane.f32.xlu0 %v2453
  %v2455 = vpop.xlane.xlu0 %2454
  %v2456 = vadd.f32 %v2219, %v2221
  %v2457 = vadd.f32 %v2456, %v2223
  %2458 = vadd.xlane.f32.xlu0 %v2457
  %v2459 = vpop.xlane.xlu0 %2458
  %v2460 = vadd.f32 %v2225, %v2227
  %v2461 = vadd.f32 %v2460, %v2229
  %2462 = vadd.xlane.f32.xlu0 %v2461
  %v2463 = vpop.xlane.xlu0 %2462
  %v2464 = vadd.f32 %v2231, %v2233
  %v2465 = vadd.f32 %v2464, %v2235
  %2466 = vadd.xlane.f32.xlu0 %v2465
  %v2467 = vpop.xlane.xlu0 %2466
  %v2468 = vadd.f32 %v2237, %v2239
  %v2469 = vadd.f32 %v2468, %v2241
  %2470 = vadd.xlane.f32.xlu0 %v2469
  %v2471 = vpop.xlane.xlu0 %2470
  %v2472 = vadd.f32 %v2243, %v2245
  %v2473 = vadd.f32 %v2472, %v2247
  %2474 = vadd.xlane.f32.xlu0 %v2473
  %v2475 = vpop.xlane.xlu0 %2474
  %v2476 = vadd.f32 %v2249, %v2251
  %v2477 = vadd.f32 %v2476, %v2253
  %2478 = vadd.xlane.f32.xlu0 %v2477
  %v2479 = vpop.xlane.xlu0 %2478
  %v2480 = vadd.f32 %v2255, %v2257
  %v2481 = vadd.f32 %v2480, %v2259
  %2482 = vadd.xlane.f32.xlu0 %v2481
  %v2483 = vpop.xlane.xlu0 %2482
  %v2484 = vadd.f32 %v2261, %v2263
  %v2485 = vadd.f32 %v2484, %v2265
  %2486 = vadd.xlane.f32.xlu0 %v2485
  %v2487 = vpop.xlane.xlu0 %2486
  %v2488 = vadd.f32 %v2267, %v2269
  %v2489 = vadd.f32 %v2488, %v2271
  %2490 = vadd.xlane.f32.xlu0 %v2489
  %v2491 = vpop.xlane.xlu0 %2490
  %v2492 = vadd.f32 %v2273, %v2275
  %v2493 = vadd.f32 %v2492, %v2277
  %2494 = vadd.xlane.f32.xlu0 %v2493
  %v2495 = vpop.xlane.xlu0 %2494
  %v2496 = vadd.f32 %v2279, %v2281
  %v2497 = vadd.f32 %v2496, %v2283
  %2498 = vadd.xlane.f32.xlu0 %v2497
  %v2499 = vpop.xlane.xlu0 %2498
  %v2500 = vadd.f32 %v2285, %v2287
  %v2501 = vadd.f32 %v2500, %v2289
  %2502 = vadd.xlane.f32.xlu0 %v2501
  %v2503 = vpop.xlane.xlu0 %2502
  %v2504 = vadd.f32 %v2291, %v2293
  %v2505 = vadd.f32 %v2504, %v2295
  %2506 = vadd.xlane.f32.xlu0 %v2505
  %v2507 = vpop.xlane.xlu0 %2506
  %v2508 = vadd.f32 %v2297, %v2299
  %v2509 = vadd.f32 %v2508, %v2301
  %2510 = vadd.xlane.f32.xlu0 %v2509
  %v2511 = vpop.xlane.xlu0 %2510
  %v2512 = vadd.f32 %v2303, %v2305
  %v2513 = vadd.f32 %v2512, %v2307
  %2514 = vadd.xlane.f32.xlu0 %v2513
  %v2515 = vpop.xlane.xlu0 %2514
  %v2516 = vadd.f32 %v2309, %v2311
  %v2517 = vadd.f32 %v2516, %v2313
  %2518 = vadd.xlane.f32.xlu0 %v2517
  %v2519 = vpop.xlane.xlu0 %2518
  %v2520 = vadd.f32 %v2315, %v2317
  %v2521 = vadd.f32 %v2520, %v2319
  %2522 = vadd.xlane.f32.xlu0 %v2521
  %v2523 = vpop.xlane.xlu0 %2522
  %v2524 = vadd.f32 %v2321, %v2323
  %v2525 = vadd.f32 %v2524, %v2325
  %2526 = vadd.xlane.f32.xlu0 %v2525
  %v2527 = vpop.xlane.xlu0 %2526
  %v2528 = vadd.f32 %v2327, %v2329
  %v2529 = vadd.f32 %v2528, %v2331
  %2530 = vadd.xlane.f32.xlu0 %v2529
  %v2531 = vpop.xlane.xlu0 %2530
  %v2532 = vadd.f32 %v2333, %v2335
  %v2533 = vadd.f32 %v2532, %v2337
  %2534 = vadd.xlane.f32.xlu0 %v2533
  %v2535 = vpop.xlane.xlu0 %2534
  %v2536 = vadd.f32 %v2339, %v2341
  %v2537 = vadd.f32 %v2536, %v2343
  %2538 = vadd.xlane.f32.xlu0 %v2537
  %v2539 = vpop.xlane.xlu0 %2538
  %v2540 = vadd.f32 %v2345, %v2347
  %v2541 = vadd.f32 %v2540, %v2349
  %2542 = vadd.xlane.f32.xlu0 %v2541
  %v2543 = vpop.xlane.xlu0 %2542
  %v2544 = vadd.f32 %v2351, %v2353
  %v2545 = vadd.f32 %v2544, %v2355
  %2546 = vadd.xlane.f32.xlu0 %v2545
  %v2547 = vpop.xlane.xlu0 %2546
  %v2548 = vrcp.pop %v2359
  %v2549 = vmul.f32 %v2069, %v2548
  %v2550 = vmul.f32 %v2071, %v2548
  %v2551 = vmul.f32 %v2073, %v2548
  %v2552 = vrcp.pop %v2363
  %v2553 = vmul.f32 %v2075, %v2552
  %v2554 = vmul.f32 %v2077, %v2552
  %v2555 = vmul.f32 %v2079, %v2552
  %v2556 = vrcp.pop %v2367
  %v2557 = vmul.f32 %v2081, %v2556
  %v2558 = vmul.f32 %v2083, %v2556
  %v2559 = vmul.f32 %v2085, %v2556
  %v2560 = vrcp.pop %v2371
  %v2561 = vmul.f32 %v2087, %v2560
  %v2562 = vmul.f32 %v2089, %v2560
  %v2563 = vmul.f32 %v2091, %v2560
  %v2564 = vrcp.pop %v2375
  %v2565 = vmul.f32 %v2093, %v2564
  %v2566 = vmul.f32 %v2095, %v2564
  %v2567 = vmul.f32 %v2097, %v2564
  %v2568 = vrcp.pop %v2379
  %v2569 = vmul.f32 %v2099, %v2568
  %v2570 = vmul.f32 %v2101, %v2568
  %v2571 = vmul.f32 %v2103, %v2568
  %v2572 = vrcp.pop %v2383
  %v2573 = vmul.f32 %v2105, %v2572
  %v2574 = vmul.f32 %v2107, %v2572
  %v2575 = vmul.f32 %v2109, %v2572
  %v2576 = vrcp.pop %v2387
  %v2577 = vmul.f32 %v2111, %v2576
  %v2578 = vmul.f32 %v2113, %v2576
  %v2579 = vmul.f32 %v2115, %v2576
  %v2580 = vrcp.pop %v2391
  %v2581 = vmul.f32 %v2117, %v2580
  %v2582 = vmul.f32 %v2119, %v2580
  %v2583 = vmul.f32 %v2121, %v2580
  %v2584 = vrcp.pop %v2395
  %v2585 = vmul.f32 %v2123, %v2584
  %v2586 = vmul.f32 %v2125, %v2584
  %v2587 = vmul.f32 %v2127, %v2584
  %v2588 = vrcp.pop %v2399
  %v2589 = vmul.f32 %v2129, %v2588
  %v2590 = vmul.f32 %v2131, %v2588
  %v2591 = vmul.f32 %v2133, %v2588
  %v2592 = vrcp.pop %v2403
  %v2593 = vmul.f32 %v2135, %v2592
  %v2594 = vmul.f32 %v2137, %v2592
  %v2595 = vmul.f32 %v2139, %v2592
  %v2596 = vrcp.pop %v2407
  %v2597 = vmul.f32 %v2141, %v2596
  %v2598 = vmul.f32 %v2143, %v2596
  %v2599 = vmul.f32 %v2145, %v2596
  %v2600 = vrcp.pop %v2411
  %v2601 = vmul.f32 %v2147, %v2600
  %v2602 = vmul.f32 %v2149, %v2600
  %v2603 = vmul.f32 %v2151, %v2600
  %v2604 = vrcp.pop %v2415
  %v2605 = vmul.f32 %v2153, %v2604
  %v2606 = vmul.f32 %v2155, %v2604
  %v2607 = vmul.f32 %v2157, %v2604
  %v2608 = vrcp.pop %v2419
  %v2609 = vmul.f32 %v2159, %v2608
  %v2610 = vmul.f32 %v2161, %v2608
  %v2611 = vmul.f32 %v2163, %v2608
  %v2612 = vrcp.pop %v2423
  %v2613 = vmul.f32 %v2165, %v2612
  %v2614 = vmul.f32 %v2167, %v2612
  %v2615 = vmul.f32 %v2169, %v2612
  %v2616 = vrcp.pop %v2427
  %v2617 = vmul.f32 %v2171, %v2616
  %v2618 = vmul.f32 %v2173, %v2616
  %v2619 = vmul.f32 %v2175, %v2616
  %v2620 = vrcp.pop %v2431
  %v2621 = vmul.f32 %v2177, %v2620
  %v2622 = vmul.f32 %v2179, %v2620
  %v2623 = vmul.f32 %v2181, %v2620
  %v2624 = vrcp.pop %v2435
  %v2625 = vmul.f32 %v2183, %v2624
  %v2626 = vmul.f32 %v2185, %v2624
  %v2627 = vmul.f32 %v2187, %v2624
  %v2628 = vrcp.pop %v2439
  %v2629 = vmul.f32 %v2189, %v2628
  %v2630 = vmul.f32 %v2191, %v2628
  %v2631 = vmul.f32 %v2193, %v2628
  %v2632 = vrcp.pop %v2443
  %v2633 = vmul.f32 %v2195, %v2632
  %v2634 = vmul.f32 %v2197, %v2632
  %v2635 = vmul.f32 %v2199, %v2632
  %v2636 = vrcp.pop %v2447
  %v2637 = vmul.f32 %v2201, %v2636
  %v2638 = vmul.f32 %v2203, %v2636
  %v2639 = vmul.f32 %v2205, %v2636
  %v2640 = vrcp.pop %v2451
  %v2641 = vmul.f32 %v2207, %v2640
  %v2642 = vmul.f32 %v2209, %v2640
  %v2643 = vmul.f32 %v2211, %v2640
  %v2644 = vrcp.pop %v2455
  %v2645 = vmul.f32 %v2213, %v2644
  %v2646 = vmul.f32 %v2215, %v2644
  %v2647 = vmul.f32 %v2217, %v2644
  %v2648 = vrcp.pop %v2459
  %v2649 = vmul.f32 %v2219, %v2648
  %v2650 = vmul.f32 %v2221, %v2648
  %v2651 = vmul.f32 %v2223, %v2648
  %v2652 = vrcp.pop %v2463
  %v2653 = vmul.f32 %v2225, %v2652
  %v2654 = vmul.f32 %v2227, %v2652
  %v2655 = vmul.f32 %v2229, %v2652
  %v2656 = vrcp.pop %v2467
  %v2657 = vmul.f32 %v2231, %v2656
  %v2658 = vmul.f32 %v2233, %v2656
  %v2659 = vmul.f32 %v2235, %v2656
  %v2660 = vrcp.pop %v2471
  %v2661 = vmul.f32 %v2237, %v2660
  %v2662 = vmul.f32 %v2239, %v2660
  %v2663 = vmul.f32 %v2241, %v2660
  %v2664 = vrcp.pop %v2475
  %v2665 = vmul.f32 %v2243, %v2664
  %v2666 = vmul.f32 %v2245, %v2664
  %v2667 = vmul.f32 %v2247, %v2664
  %v2668 = vrcp.pop %v2479
  %v2669 = vmul.f32 %v2249, %v2668
  %v2670 = vmul.f32 %v2251, %v2668
  %v2671 = vmul.f32 %v2253, %v2668
  %v2672 = vrcp.pop %v2483
  %v2673 = vmul.f32 %v2255, %v2672
  %v2674 = vmul.f32 %v2257, %v2672
  %v2675 = vmul.f32 %v2259, %v2672
  %v2676 = vrcp.pop %v2487
  %v2677 = vmul.f32 %v2261, %v2676
  %v2678 = vmul.f32 %v2263, %v2676
  %v2679 = vmul.f32 %v2265, %v2676
  %v2680 = vrcp.pop %v2491
  %v2681 = vmul.f32 %v2267, %v2680
  %v2682 = vmul.f32 %v2269, %v2680
  %v2683 = vmul.f32 %v2271, %v2680
  %v2684 = vrcp.pop %v2495
  %v2685 = vmul.f32 %v2273, %v2684
  %v2686 = vmul.f32 %v2275, %v2684
  %v2687 = vmul.f32 %v2277, %v2684
  %v2688 = vrcp.pop %v2499
  %v2689 = vmul.f32 %v2279, %v2688
  %v2690 = vmul.f32 %v2281, %v2688
  %v2691 = vmul.f32 %v2283, %v2688
  %v2692 = vrcp.pop %v2503
  %v2693 = vmul.f32 %v2285, %v2692
  %v2694 = vmul.f32 %v2287, %v2692
  %v2695 = vmul.f32 %v2289, %v2692
  %v2696 = vrcp.pop %v2507
  %v2697 = vmul.f32 %v2291, %v2696
  %v2698 = vmul.f32 %v2293, %v2696
  %v2699 = vmul.f32 %v2295, %v2696
  %v2700 = vrcp.pop %v2511
  %v2701 = vmul.f32 %v2297, %v2700
  %v2702 = vmul.f32 %v2299, %v2700
  %v2703 = vmul.f32 %v2301, %v2700
  %v2704 = vrcp.pop %v2515
  %v2705 = vmul.f32 %v2303, %v2704
  %v2706 = vmul.f32 %v2305, %v2704
  %v2707 = vmul.f32 %v2307, %v2704
  %v2708 = vrcp.pop %v2519
  %v2709 = vmul.f32 %v2309, %v2708
  %v2710 = vmul.f32 %v2311, %v2708
  %v2711 = vmul.f32 %v2313, %v2708
  %v2712 = vrcp.pop %v2523
  %v2713 = vmul.f32 %v2315, %v2712
  %v2714 = vmul.f32 %v2317, %v2712
  %v2715 = vmul.f32 %v2319, %v2712
  %v2716 = vrcp.pop %v2527
  %v2717 = vmul.f32 %v2321, %v2716
  %v2718 = vmul.f32 %v2323, %v2716
  %v2719 = vmul.f32 %v2325, %v2716
  %v2720 = vrcp.pop %v2531
  %v2721 = vmul.f32 %v2327, %v2720
  %v2722 = vmul.f32 %v2329, %v2720
  %v2723 = vmul.f32 %v2331, %v2720
  %v2724 = vrcp.pop %v2535
  %v2725 = vmul.f32 %v2333, %v2724
  %v2726 = vmul.f32 %v2335, %v2724
  %v2727 = vmul.f32 %v2337, %v2724
  %v2728 = vrcp.pop %v2539
  %v2729 = vmul.f32 %v2339, %v2728
  %v2730 = vmul.f32 %v2341, %v2728
  %v2731 = vmul.f32 %v2343, %v2728
  %v2732 = vrcp.pop %v2543
  %v2733 = vmul.f32 %v2345, %v2732
  %v2734 = vmul.f32 %v2347, %v2732
  %v2735 = vmul.f32 %v2349, %v2732
  %v2736 = vrcp.pop %v2547
  %v2737 = vmul.f32 %v2351, %v2736
  %v2738 = vmul.f32 %v2353, %v2736
  %v2739 = vmul.f32 %v2355, %v2736
  %v2740 = vpack.c.bf16 %v2553, %v2549
  %v2741 = vpack.c.bf16 %v2554, %v2550
  %v2742 = vpack.c.bf16 %v2555, %v2551
  %v2743 = vpack.c.bf16 %v2561, %v2557
  %v2744 = vpack.c.bf16 %v2562, %v2558
  %v2745 = vpack.c.bf16 %v2563, %v2559
  %v2746 = vpack.c.bf16 %v2569, %v2565
  %v2747 = vpack.c.bf16 %v2570, %v2566
  %v2748 = vpack.c.bf16 %v2571, %v2567
  %v2749 = vpack.c.bf16 %v2577, %v2573
  %v2750 = vpack.c.bf16 %v2578, %v2574
  %v2751 = vpack.c.bf16 %v2579, %v2575
  %v2752 = vpack.c.bf16 %v2585, %v2581
  %v2753 = vpack.c.bf16 %v2586, %v2582
  %v2754 = vpack.c.bf16 %v2587, %v2583
  %v2755 = vpack.c.bf16 %v2593, %v2589
  %v2756 = vpack.c.bf16 %v2594, %v2590
  %v2757 = vpack.c.bf16 %v2595, %v2591
  %v2758 = vpack.c.bf16 %v2601, %v2597
  %v2759 = vpack.c.bf16 %v2602, %v2598
  %v2760 = vpack.c.bf16 %v2603, %v2599
  %v2761 = vpack.c.bf16 %v2609, %v2605
  %v2762 = vpack.c.bf16 %v2610, %v2606
  %v2763 = vpack.c.bf16 %v2611, %v2607
  %v2764 = vpack.c.bf16 %v2617, %v2613
  %v2765 = vpack.c.bf16 %v2618, %v2614
  %v2766 = vpack.c.bf16 %v2619, %v2615
  %v2767 = vpack.c.bf16 %v2625, %v2621
  %v2768 = vpack.c.bf16 %v2626, %v2622
  %v2769 = vpack.c.bf16 %v2627, %v2623
  %v2770 = vpack.c.bf16 %v2633, %v2629
  %v2771 = vpack.c.bf16 %v2634, %v2630
  %v2772 = vpack.c.bf16 %v2635, %v2631
  %v2773 = vpack.c.bf16 %v2641, %v2637
  %v2774 = vpack.c.bf16 %v2642, %v2638
  %v2775 = vpack.c.bf16 %v2643, %v2639
  %v2776 = vpack.c.bf16 %v2649, %v2645
  %v2777 = vpack.c.bf16 %v2650, %v2646
  %v2778 = vpack.c.bf16 %v2651, %v2647
  %v2779 = vpack.c.bf16 %v2657, %v2653
  %v2780 = vpack.c.bf16 %v2658, %v2654
  %v2781 = vpack.c.bf16 %v2659, %v2655
  %v2782 = vpack.c.bf16 %v2665, %v2661
  %v2783 = vpack.c.bf16 %v2666, %v2662
  %v2784 = vpack.c.bf16 %v2667, %v2663
  %v2785 = vpack.c.bf16 %v2673, %v2669
  %v2786 = vpack.c.bf16 %v2674, %v2670
  %v2787 = vpack.c.bf16 %v2675, %v2671
  %v2788 = vpack.c.bf16 %v2681, %v2677
  %v2789 = vpack.c.bf16 %v2682, %v2678
  %v2790 = vpack.c.bf16 %v2683, %v2679
  %v2791 = vpack.c.bf16 %v2689, %v2685
  %v2792 = vpack.c.bf16 %v2690, %v2686
  %v2793 = vpack.c.bf16 %v2691, %v2687
  %v2794 = vpack.c.bf16 %v2697, %v2693
  %v2795 = vpack.c.bf16 %v2698, %v2694
  %v2796 = vpack.c.bf16 %v2699, %v2695
  %v2797 = vpack.c.bf16 %v2705, %v2701
  %v2798 = vpack.c.bf16 %v2706, %v2702
  %v2799 = vpack.c.bf16 %v2707, %v2703
  %v2800 = vpack.c.bf16 %v2713, %v2709
  %v2801 = vpack.c.bf16 %v2714, %v2710
  %v2802 = vpack.c.bf16 %v2715, %v2711
  %v2803 = vpack.c.bf16 %v2721, %v2717
  %v2804 = vpack.c.bf16 %v2722, %v2718
  %v2805 = vpack.c.bf16 %v2723, %v2719
  %v2806 = vpack.c.bf16 %v2729, %v2725
  %v2807 = vpack.c.bf16 %v2730, %v2726
  %v2808 = vpack.c.bf16 %v2731, %v2727
  %v2809 = vpack.c.bf16 %v2737, %v2733
  %v2810 = vpack.c.bf16 %v2738, %v2734
  %v2811 = vpack.c.bf16 %v2739, %v2735
  %v2812 = vpack.c.bf16 %v845, %v842
  %v2813 = vpack.c.bf16 %v853, %v850
  %v2814 = vpack.c.bf16 %v861, %v858
  %v2815 = vpack.c.bf16 %v869, %v866
  %v2816 = vpack.c.bf16 %v877, %v874
  %v2817 = vpack.c.bf16 %v885, %v882
  %v2818 = vpack.c.bf16 %v893, %v890
  %v2819 = vpack.c.bf16 %v901, %v898
  %v2820 = vpack.c.bf16 %v909, %v906
  %v2821 = vpack.c.bf16 %v917, %v914
  %v2822 = vpack.c.bf16 %v925, %v922
  %v2823 = vpack.c.bf16 %v933, %v930
  %v2824 = vpack.c.bf16 %v941, %v938
  %v2825 = vpack.c.bf16 %v949, %v946
  %v2826 = vpack.c.bf16 %v957, %v954
  %v2827 = vpack.c.bf16 %v965, %v962
  %v2828 = vpack.c.bf16 %v973, %v970
  %v2829 = vpack.c.bf16 %v981, %v978
  %v2830 = vpack.c.bf16 %v989, %v986
  %v2831 = vpack.c.bf16 %v997, %v994
  %v2832 = vpack.c.bf16 %v1005, %v1002
  %v2833 = vpack.c.bf16 %v1013, %v1010
  %v2834 = vpack.c.bf16 %v1021, %v1018
  %v2835 = vpack.c.bf16 %v1029, %v1026
  %2836 = vmatprep.subr.bf16.mxu0 0
  %2837 = vmatpush1.bf16.msra.mxu0 %v2819
  %2838 = vmatprep.subr.bf16.mxu0 0
  %2839 = vmatpush1.bf16.msra.mxu0 %v2818
  %2840 = vmatprep.subr.bf16.mxu0 0
  %2841 = vmatpush1.bf16.msra.mxu0 %v2817
  %2842 = vmatprep.subr.bf16.mxu0 0
  %2843 = vmatpush1.bf16.msra.mxu0 %v2816
  %2844 = vmatprep.subr.bf16.mxu0 0
  %2845 = vmatpush1.bf16.msra.mxu0 %v2815
  %2846 = vmatprep.subr.bf16.mxu0 0
  %2847 = vmatpush1.bf16.msra.mxu0 %v2814
  %2848 = vmatprep.subr.bf16.mxu0 0
  %2849 = vmatpush1.bf16.msra.mxu0 %v2813
  %2850 = vmatprep.subr.bf16.mxu0 0
  %2851 = vmatpush1.bf16.msra.mxu0 %v2812
  %2852 = vmatprep.subr.bf16.mxu0 0
  %2853 = vmatpush2.bf16.msra.mxu0 %v2827
  %2854 = vmatprep.subr.bf16.mxu0 0
  %2855 = vmatpush2.bf16.msra.mxu0 %v2826
  %2856 = vmatprep.subr.bf16.mxu0 0
  %2857 = vmatpush2.bf16.msra.mxu0 %v2825
  %2858 = vmatprep.subr.bf16.mxu0 0
  %2859 = vmatpush2.bf16.msra.mxu0 %v2824
  %2860 = vmatprep.subr.bf16.mxu0 0
  %2861 = vmatpush2.bf16.msra.mxu0 %v2823
  %2862 = vmatprep.subr.bf16.mxu0 0
  %2863 = vmatpush2.bf16.msra.mxu0 %v2822
  %2864 = vmatprep.subr.bf16.mxu0 0
  %2865 = vmatpush2.bf16.msra.mxu0 %v2821
  %2866 = vmatprep.subr.bf16.mxu0 0
  %2867 = vmatpush2.bf16.msra.mxu0 %v2820
  %2868 = vmatprep.mubr.bf16.mxu0 %v2741
  %2869 = vmatmul.mubr.bf16.gmra.mxu0 %v2740
  %v2870 = vpop.f32.mrf.mxu0
  %v2871 = vadd.f32 0.0, %v2870
  %v2872 = vpop.f32.mrf.mxu0
  %v2873 = vpop.f32.mrf.mxu0
  %v2874 = vadd.f32 0.0, %v2873
  %v2875 = vpop.f32.mrf.mxu0
  %2876 = vmatprep.mubr.bf16.mxu0 %v2744
  %2877 = vmatmul.mubr.bf16.gmra.mxu0 %v2743
  %v2878 = vpop.f32.mrf.mxu0
  %v2879 = vadd.f32 0.0, %v2878
  %v2880 = vpop.f32.mrf.mxu0
  %v2881 = vpop.f32.mrf.mxu0
  %v2882 = vadd.f32 0.0, %v2881
  %v2883 = vpop.f32.mrf.mxu0
  %2884 = vmatprep.mubr.bf16.mxu0 %v2747
  %2885 = vmatmul.mubr.bf16.gmra.mxu0 %v2746
  %v2886 = vpop.f32.mrf.mxu0
  %v2887 = vadd.f32 0.0, %v2886
  %v2888 = vpop.f32.mrf.mxu0
  %v2889 = vpop.f32.mrf.mxu0
  %v2890 = vadd.f32 0.0, %v2889
  %v2891 = vpop.f32.mrf.mxu0
  %2892 = vmatprep.mubr.bf16.mxu0 %v2750
  %2893 = vmatmul.mubr.bf16.gmra.mxu0 %v2749
  %v2894 = vpop.f32.mrf.mxu0
  %v2895 = vadd.f32 0.0, %v2894
  %v2896 = vpop.f32.mrf.mxu0
  %v2897 = vpop.f32.mrf.mxu0
  %v2898 = vadd.f32 0.0, %v2897
  %v2899 = vpop.f32.mrf.mxu0
  %2900 = vmatprep.mubr.bf16.mxu0 %v2753
  %2901 = vmatmul.mubr.bf16.gmra.mxu0 %v2752
  %v2902 = vpop.f32.mrf.mxu0
  %v2903 = vadd.f32 0.0, %v2902
  %v2904 = vpop.f32.mrf.mxu0
  %v2905 = vpop.f32.mrf.mxu0
  %v2906 = vadd.f32 0.0, %v2905
  %v2907 = vpop.f32.mrf.mxu0
  %2908 = vmatprep.mubr.bf16.mxu0 %v2756
  %2909 = vmatmul.mubr.bf16.gmra.mxu0 %v2755
  %v2910 = vpop.f32.mrf.mxu0
  %v2911 = vadd.f32 0.0, %v2910
  %v2912 = vpop.f32.mrf.mxu0
  %v2913 = vpop.f32.mrf.mxu0
  %v2914 = vadd.f32 0.0, %v2913
  %v2915 = vpop.f32.mrf.mxu0
  %2916 = vmatprep.mubr.bf16.mxu0 %v2759
  %2917 = vmatmul.mubr.bf16.gmra.mxu0 %v2758
  %v2918 = vpop.f32.mrf.mxu0
  %v2919 = vadd.f32 0.0, %v2918
  %v2920 = vpop.f32.mrf.mxu0
  %v2921 = vpop.f32.mrf.mxu0
  %v2922 = vadd.f32 0.0, %v2921
  %v2923 = vpop.f32.mrf.mxu0
  %2924 = vmatprep.mubr.bf16.mxu0 %v2762
  %2925 = vmatmul.mubr.bf16.gmra.mxu0 %v2761
  %v2926 = vpop.f32.mrf.mxu0
  %v2927 = vadd.f32 0.0, %v2926
  %v2928 = vpop.f32.mrf.mxu0
  %v2929 = vpop.f32.mrf.mxu0
  %v2930 = vadd.f32 0.0, %v2929
  %v2931 = vpop.f32.mrf.mxu0
  %2932 = vmatprep.mubr.bf16.mxu0 %v2765
  %2933 = vmatmul.mubr.bf16.gmra.mxu0 %v2764
  %v2934 = vpop.f32.mrf.mxu0
  %v2935 = vadd.f32 0.0, %v2934
  %v2936 = vpop.f32.mrf.mxu0
  %v2937 = vpop.f32.mrf.mxu0
  %v2938 = vadd.f32 0.0, %v2937
  %v2939 = vpop.f32.mrf.mxu0
  %2940 = vmatprep.mubr.bf16.mxu0 %v2768
  %2941 = vmatmul.mubr.bf16.gmra.mxu0 %v2767
  %v2942 = vpop.f32.mrf.mxu0
  %v2943 = vadd.f32 0.0, %v2942
  %v2944 = vpop.f32.mrf.mxu0
  %v2945 = vpop.f32.mrf.mxu0
  %v2946 = vadd.f32 0.0, %v2945
  %v2947 = vpop.f32.mrf.mxu0
  %2948 = vmatprep.mubr.bf16.mxu0 %v2771
  %2949 = vmatmul.mubr.bf16.gmra.mxu0 %v2770
  %v2950 = vpop.f32.mrf.mxu0
  %v2951 = vadd.f32 0.0, %v2950
  %v2952 = vpop.f32.mrf.mxu0
  %v2953 = vpop.f32.mrf.mxu0
  %v2954 = vadd.f32 0.0, %v2953
  %v2955 = vpop.f32.mrf.mxu0
  %2956 = vmatprep.mubr.bf16.mxu0 %v2774
  %2957 = vmatmul.mubr.bf16.gmra.mxu0 %v2773
  %v2958 = vpop.f32.mrf.mxu0
  %v2959 = vadd.f32 0.0, %v2958
  %v2960 = vpop.f32.mrf.mxu0
  %v2961 = vpop.f32.mrf.mxu0
  %v2962 = vadd.f32 0.0, %v2961
  %v2963 = vpop.f32.mrf.mxu0
  %2964 = vmatprep.mubr.bf16.mxu0 %v2777
  %2965 = vmatmul.mubr.bf16.gmra.mxu0 %v2776
  %v2966 = vpop.f32.mrf.mxu0
  %v2967 = vadd.f32 0.0, %v2966
  %v2968 = vpop.f32.mrf.mxu0
  %v2969 = vpop.f32.mrf.mxu0
  %v2970 = vadd.f32 0.0, %v2969
  %v2971 = vpop.f32.mrf.mxu0
  %2972 = vmatprep.mubr.bf16.mxu0 %v2780
  %2973 = vmatmul.mubr.bf16.gmra.mxu0 %v2779
  %v2974 = vpop.f32.mrf.mxu0
  %v2975 = vadd.f32 0.0, %v2974
  %v2976 = vpop.f32.mrf.mxu0
  %v2977 = vpop.f32.mrf.mxu0
  %v2978 = vadd.f32 0.0, %v2977
  %v2979 = vpop.f32.mrf.mxu0
  %2980 = vmatprep.mubr.bf16.mxu0 %v2783
  %2981 = vmatmul.mubr.bf16.gmra.mxu0 %v2782
  %v2982 = vpop.f32.mrf.mxu0
  %v2983 = vadd.f32 0.0, %v2982
  %v2984 = vpop.f32.mrf.mxu0
  %v2985 = vpop.f32.mrf.mxu0
  %v2986 = vadd.f32 0.0, %v2985
  %v2987 = vpop.f32.mrf.mxu0
  %2988 = vmatprep.mubr.bf16.mxu0 %v2786
  %2989 = vmatmul.mubr.bf16.gmra.mxu0 %v2785
  %v2990 = vpop.f32.mrf.mxu0
  %v2991 = vadd.f32 0.0, %v2990
  %v2992 = vpop.f32.mrf.mxu0
  %v2993 = vpop.f32.mrf.mxu0
  %v2994 = vadd.f32 0.0, %v2993
  %v2995 = vpop.f32.mrf.mxu0
  %2996 = vmatprep.mubr.bf16.mxu0 %v2789
  %2997 = vmatmul.mubr.bf16.gmra.mxu0 %v2788
  %v2998 = vpop.f32.mrf.mxu0
  %v2999 = vadd.f32 0.0, %v2998
  %v3000 = vpop.f32.mrf.mxu0
  %v3001 = vpop.f32.mrf.mxu0
  %v3002 = vadd.f32 0.0, %v3001
  %v3003 = vpop.f32.mrf.mxu0
  %3004 = vmatprep.mubr.bf16.mxu0 %v2792
  %3005 = vmatmul.mubr.bf16.gmra.mxu0 %v2791
  %v3006 = vpop.f32.mrf.mxu0
  %v3007 = vadd.f32 0.0, %v3006
  %v3008 = vpop.f32.mrf.mxu0
  %v3009 = vpop.f32.mrf.mxu0
  %v3010 = vadd.f32 0.0, %v3009
  %v3011 = vpop.f32.mrf.mxu0
  %3012 = vmatprep.mubr.bf16.mxu0 %v2795
  %3013 = vmatmul.mubr.bf16.gmra.mxu0 %v2794
  %v3014 = vpop.f32.mrf.mxu0
  %v3015 = vadd.f32 0.0, %v3014
  %v3016 = vpop.f32.mrf.mxu0
  %v3017 = vpop.f32.mrf.mxu0
  %v3018 = vadd.f32 0.0, %v3017
  %v3019 = vpop.f32.mrf.mxu0
  %3020 = vmatprep.mubr.bf16.mxu0 %v2798
  %3021 = vmatmul.mubr.bf16.gmra.mxu0 %v2797
  %v3022 = vpop.f32.mrf.mxu0
  %v3023 = vadd.f32 0.0, %v3022
  %v3024 = vpop.f32.mrf.mxu0
  %v3025 = vpop.f32.mrf.mxu0
  %v3026 = vadd.f32 0.0, %v3025
  %v3027 = vpop.f32.mrf.mxu0
  %3028 = vmatprep.mubr.bf16.mxu0 %v2801
  %3029 = vmatmul.mubr.bf16.gmra.mxu0 %v2800
  %v3030 = vpop.f32.mrf.mxu0
  %v3031 = vadd.f32 0.0, %v3030
  %v3032 = vpop.f32.mrf.mxu0
  %v3033 = vpop.f32.mrf.mxu0
  %v3034 = vadd.f32 0.0, %v3033
  %v3035 = vpop.f32.mrf.mxu0
  %3036 = vmatprep.mubr.bf16.mxu0 %v2804
  %3037 = vmatmul.mubr.bf16.gmra.mxu0 %v2803
  %v3038 = vpop.f32.mrf.mxu0
  %v3039 = vadd.f32 0.0, %v3038
  %v3040 = vpop.f32.mrf.mxu0
  %v3041 = vpop.f32.mrf.mxu0
  %v3042 = vadd.f32 0.0, %v3041
  %v3043 = vpop.f32.mrf.mxu0
  %3044 = vmatprep.mubr.bf16.mxu0 %v2807
  %3045 = vmatmul.mubr.bf16.gmra.mxu0 %v2806
  %v3046 = vpop.f32.mrf.mxu0
  %v3047 = vadd.f32 0.0, %v3046
  %v3048 = vpop.f32.mrf.mxu0
  %v3049 = vpop.f32.mrf.mxu0
  %v3050 = vadd.f32 0.0, %v3049
  %v3051 = vpop.f32.mrf.mxu0
  %3052 = vmatprep.mubr.bf16.mxu0 %v2810
  %3053 = vmatmul.mubr.bf16.gmra.mxu0 %v2809
  %v3054 = vpop.f32.mrf.mxu0
  %v3055 = vadd.f32 0.0, %v3054
  %v3056 = vpop.f32.mrf.mxu0
  %v3057 = vpop.f32.mrf.mxu0
  %v3058 = vadd.f32 0.0, %v3057
  %v3059 = vpop.f32.mrf.mxu0
  %3060 = vdwg.mxu0
  %3061 = vmatprep.subr.bf16.mxu0 0
  %3062 = vmatpush1.bf16.msra.mxu0 %v2835
  %3063 = vmatprep.subr.bf16.mxu0 0
  %3064 = vmatpush1.bf16.msra.mxu0 %v2834
  %3065 = vmatprep.subr.bf16.mxu0 0
  %3066 = vmatpush1.bf16.msra.mxu0 %v2833
  %3067 = vmatprep.subr.bf16.mxu0 0
  %3068 = vmatpush1.bf16.msra.mxu0 %v2832
  %3069 = vmatprep.subr.bf16.mxu0 0
  %3070 = vmatpush1.bf16.msra.mxu0 %v2831
  %3071 = vmatprep.subr.bf16.mxu0 0
  %3072 = vmatpush1.bf16.msra.mxu0 %v2830
  %3073 = vmatprep.subr.bf16.mxu0 0
  %3074 = vmatpush1.bf16.msra.mxu0 %v2829
  %3075 = vmatprep.subr.bf16.mxu0 0
  %3076 = vmatpush1.bf16.msra.mxu0 %v2828
  %3077 = vmatprep.subr.bf16.mxu0 0
  %3078 = vmatpush2.bf16.msra.mxu0 0
  %3079 = vmatprep.subr.bf16.mxu0 0
  %3080 = vmatpush2.bf16.msra.mxu0 0
  %3081 = vmatprep.subr.bf16.mxu0 0
  %3082 = vmatpush2.bf16.msra.mxu0 0
  %3083 = vmatprep.subr.bf16.mxu0 0
  %3084 = vmatpush2.bf16.msra.mxu0 0
  %3085 = vmatprep.subr.bf16.mxu0 0
  %3086 = vmatpush2.bf16.msra.mxu0 0
  %3087 = vmatprep.subr.bf16.mxu0 0
  %3088 = vmatpush2.bf16.msra.mxu0 0
  %3089 = vmatprep.subr.bf16.mxu0 0
  %3090 = vmatpush2.bf16.msra.mxu0 0
  %3091 = vmatprep.subr.bf16.mxu0 0
  %3092 = vmatpush2.bf16.msra.mxu0 0
  %3093 = vmatprep.mubr.bf16.mxu0 0
  %3094 = vmatmul.mubr.bf16.gmra.mxu0 %v2742
  %v3095 = vpop.f32.mrf.mxu0
  %v3096 = vadd.f32 %v2871, %v3095
  %v3097 = vpop.f32.mrf.mxu0
  %v3098 = vpop.f32.mrf.mxu0
  %v3099 = vadd.f32 %v2874, %v3098
  %v3100 = vpop.f32.mrf.mxu0
  %3101 = vmatprep.mubr.bf16.mxu0 0
  %3102 = vmatmul.mubr.bf16.gmra.mxu0 %v2745
  %v3103 = vpop.f32.mrf.mxu0
  %v3104 = vadd.f32 %v2879, %v3103
  %v3105 = vpop.f32.mrf.mxu0
  %v3106 = vpop.f32.mrf.mxu0
  %v3107 = vadd.f32 %v2882, %v3106
  %v3108 = vpop.f32.mrf.mxu0
  %3109 = vmatprep.mubr.bf16.mxu0 0
  %3110 = vmatmul.mubr.bf16.gmra.mxu0 %v2748
  %v3111 = vpop.f32.mrf.mxu0
  %v3112 = vadd.f32 %v2887, %v3111
  %v3113 = vpop.f32.mrf.mxu0
  %v3114 = vpop.f32.mrf.mxu0
  %v3115 = vadd.f32 %v2890, %v3114
  %v3116 = vpop.f32.mrf.mxu0
  %3117 = vmatprep.mubr.bf16.mxu0 0
  %3118 = vmatmul.mubr.bf16.gmra.mxu0 %v2751
  %v3119 = vpop.f32.mrf.mxu0
  %v3120 = vadd.f32 %v2895, %v3119
  %v3121 = vpop.f32.mrf.mxu0
  %v3122 = vpop.f32.mrf.mxu0
  %v3123 = vadd.f32 %v2898, %v3122
  %v3124 = vpop.f32.mrf.mxu0
  %3125 = vmatprep.mubr.bf16.mxu0 0
  %3126 = vmatmul.mubr.bf16.gmra.mxu0 %v2754
  %v3127 = vpop.f32.mrf.mxu0
  %v3128 = vadd.f32 %v2903, %v3127
  %v3129 = vpop.f32.mrf.mxu0
  %v3130 = vpop.f32.mrf.mxu0
  %v3131 = vadd.f32 %v2906, %v3130
  %v3132 = vpop.f32.mrf.mxu0
  %3133 = vmatprep.mubr.bf16.mxu0 0
  %3134 = vmatmul.mubr.bf16.gmra.mxu0 %v2757
  %v3135 = vpop.f32.mrf.mxu0
  %v3136 = vadd.f32 %v2911, %v3135
  %v3137 = vpop.f32.mrf.mxu0
  %v3138 = vpop.f32.mrf.mxu0
  %v3139 = vadd.f32 %v2914, %v3138
  %v3140 = vpop.f32.mrf.mxu0
  %3141 = vmatprep.mubr.bf16.mxu0 0
  %3142 = vmatmul.mubr.bf16.gmra.mxu0 %v2760
  %v3143 = vpop.f32.mrf.mxu0
  %v3144 = vadd.f32 %v2919, %v3143
  %v3145 = vpop.f32.mrf.mxu0
  %v3146 = vpop.f32.mrf.mxu0
  %v3147 = vadd.f32 %v2922, %v3146
  %v3148 = vpop.f32.mrf.mxu0
  %3149 = vmatprep.mubr.bf16.mxu0 0
  %3150 = vmatmul.mubr.bf16.gmra.mxu0 %v2763
  %v3151 = vpop.f32.mrf.mxu0
  %v3152 = vadd.f32 %v2927, %v3151
  %v3153 = vpop.f32.mrf.mxu0
  %v3154 = vpop.f32.mrf.mxu0
  %v3155 = vadd.f32 %v2930, %v3154
  %v3156 = vpop.f32.mrf.mxu0
  %3157 = vmatprep.mubr.bf16.mxu0 0
  %3158 = vmatmul.mubr.bf16.gmra.mxu0 %v2766
  %v3159 = vpop.f32.mrf.mxu0
  %v3160 = vadd.f32 %v2935, %v3159
  %v3161 = vpop.f32.mrf.mxu0
  %v3162 = vpop.f32.mrf.mxu0
  %v3163 = vadd.f32 %v2938, %v3162
  %v3164 = vpop.f32.mrf.mxu0
  %3165 = vmatprep.mubr.bf16.mxu0 0
  %3166 = vmatmul.mubr.bf16.gmra.mxu0 %v2769
  %v3167 = vpop.f32.mrf.mxu0
  %v3168 = vadd.f32 %v2943, %v3167
  %v3169 = vpop.f32.mrf.mxu0
  %v3170 = vpop.f32.mrf.mxu0
  %v3171 = vadd.f32 %v2946, %v3170
  %v3172 = vpop.f32.mrf.mxu0
  %3173 = vmatprep.mubr.bf16.mxu0 0
  %3174 = vmatmul.mubr.bf16.gmra.mxu0 %v2772
  %v3175 = vpop.f32.mrf.mxu0
  %v3176 = vadd.f32 %v2951, %v3175
  %v3177 = vpop.f32.mrf.mxu0
  %v3178 = vpop.f32.mrf.mxu0
  %v3179 = vadd.f32 %v2954, %v3178
  %v3180 = vpop.f32.mrf.mxu0
  %3181 = vmatprep.mubr.bf16.mxu0 0
  %3182 = vmatmul.mubr.bf16.gmra.mxu0 %v2775
  %v3183 = vpop.f32.mrf.mxu0
  %v3184 = vadd.f32 %v2959, %v3183
  %v3185 = vpop.f32.mrf.mxu0
  %v3186 = vpop.f32.mrf.mxu0
  %v3187 = vadd.f32 %v2962, %v3186
  %v3188 = vpop.f32.mrf.mxu0
  %3189 = vmatprep.mubr.bf16.mxu0 0
  %3190 = vmatmul.mubr.bf16.gmra.mxu0 %v2778
  %v3191 = vpop.f32.mrf.mxu0
  %v3192 = vadd.f32 %v2967, %v3191
  %v3193 = vpop.f32.mrf.mxu0
  %v3194 = vpop.f32.mrf.mxu0
  %v3195 = vadd.f32 %v2970, %v3194
  %v3196 = vpop.f32.mrf.mxu0
  %3197 = vmatprep.mubr.bf16.mxu0 0
  %3198 = vmatmul.mubr.bf16.gmra.mxu0 %v2781
  %v3199 = vpop.f32.mrf.mxu0
  %v3200 = vadd.f32 %v2975, %v3199
  %v3201 = vpop.f32.mrf.mxu0
  %v3202 = vpop.f32.mrf.mxu0
  %v3203 = vadd.f32 %v2978, %v3202
  %v3204 = vpop.f32.mrf.mxu0
  %3205 = vmatprep.mubr.bf16.mxu0 0
  %3206 = vmatmul.mubr.bf16.gmra.mxu0 %v2784
  %v3207 = vpop.f32.mrf.mxu0
  %v3208 = vadd.f32 %v2983, %v3207
  %v3209 = vpop.f32.mrf.mxu0
  %v3210 = vpop.f32.mrf.mxu0
  %v3211 = vadd.f32 %v2986, %v3210
  %v3212 = vpop.f32.mrf.mxu0
  %3213 = vmatprep.mubr.bf16.mxu0 0
  %3214 = vmatmul.mubr.bf16.gmra.mxu0 %v2787
  %v3215 = vpop.f32.mrf.mxu0
  %v3216 = vadd.f32 %v2991, %v3215
  %v3217 = vpop.f32.mrf.mxu0
  %v3218 = vpop.f32.mrf.mxu0
  %v3219 = vadd.f32 %v2994, %v3218
  %v3220 = vpop.f32.mrf.mxu0
  %3221 = vmatprep.mubr.bf16.mxu0 0
  %3222 = vmatmul.mubr.bf16.gmra.mxu0 %v2790
  %v3223 = vpop.f32.mrf.mxu0
  %v3224 = vadd.f32 %v2999, %v3223
  %v3225 = vpop.f32.mrf.mxu0
  %v3226 = vpop.f32.mrf.mxu0
  %v3227 = vadd.f32 %v3002, %v3226
  %v3228 = vpop.f32.mrf.mxu0
  %3229 = vmatprep.mubr.bf16.mxu0 0
  %3230 = vmatmul.mubr.bf16.gmra.mxu0 %v2793
  %v3231 = vpop.f32.mrf.mxu0
  %v3232 = vadd.f32 %v3007, %v3231
  %v3233 = vpop.f32.mrf.mxu0
  %v3234 = vpop.f32.mrf.mxu0
  %v3235 = vadd.f32 %v3010, %v3234
  %v3236 = vpop.f32.mrf.mxu0
  %3237 = vmatprep.mubr.bf16.mxu0 0
  %3238 = vmatmul.mubr.bf16.gmra.mxu0 %v2796
  %v3239 = vpop.f32.mrf.mxu0
  %v3240 = vadd.f32 %v3015, %v3239
  %v3241 = vpop.f32.mrf.mxu0
  %v3242 = vpop.f32.mrf.mxu0
  %v3243 = vadd.f32 %v3018, %v3242
  %v3244 = vpop.f32.mrf.mxu0
  %3245 = vmatprep.mubr.bf16.mxu0 0
  %3246 = vmatmul.mubr.bf16.gmra.mxu0 %v2799
  %v3247 = vpop.f32.mrf.mxu0
  %v3248 = vadd.f32 %v3023, %v3247
  %v3249 = vpop.f32.mrf.mxu0
  %v3250 = vpop.f32.mrf.mxu0
  %v3251 = vadd.f32 %v3026, %v3250
  %v3252 = vpop.f32.mrf.mxu0
  %3253 = vmatprep.mubr.bf16.mxu0 0
  %3254 = vmatmul.mubr.bf16.gmra.mxu0 %v2802
  %v3255 = vpop.f32.mrf.mxu0
  %v3256 = vadd.f32 %v3031, %v3255
  %v3257 = vpop.f32.mrf.mxu0
  %v3258 = vpop.f32.mrf.mxu0
  %v3259 = vadd.f32 %v3034, %v3258
  %v3260 = vpop.f32.mrf.mxu0
  %3261 = vmatprep.mubr.bf16.mxu0 0
  %3262 = vmatmul.mubr.bf16.gmra.mxu0 %v2805
  %v3263 = vpop.f32.mrf.mxu0
  %v3264 = vadd.f32 %v3039, %v3263
  %v3265 = vpop.f32.mrf.mxu0
  %v3266 = vpop.f32.mrf.mxu0
  %v3267 = vadd.f32 %v3042, %v3266
  %v3268 = vpop.f32.mrf.mxu0
  %3269 = vmatprep.mubr.bf16.mxu0 0
  %3270 = vmatmul.mubr.bf16.gmra.mxu0 %v2808
  %v3271 = vpop.f32.mrf.mxu0
  %v3272 = vadd.f32 %v3047, %v3271
  %v3273 = vpop.f32.mrf.mxu0
  %v3274 = vpop.f32.mrf.mxu0
  %v3275 = vadd.f32 %v3050, %v3274
  %v3276 = vpop.f32.mrf.mxu0
  %3277 = vmatprep.mubr.bf16.mxu0 0
  %3278 = vmatmul.mubr.bf16.gmra.mxu0 %v2811
  %v3279 = vpop.f32.mrf.mxu0
  %v3280 = vadd.f32 %v3055, %v3279
  %v3281 = vpop.f32.mrf.mxu0
  %v3282 = vpop.f32.mrf.mxu0
  %v3283 = vadd.f32 %v3058, %v3282
  %v3284 = vpop.f32.mrf.mxu0
  %3285 = vdwg.mxu0
  %v3286 = vld [vmem:[%s7] sm:$0xf]
  %v3287 = vld [vmem:[%s7 + $0x4] sm:$0xf]
  %v3288 = vld [vmem:[%s7 + $0x8] sm:$0xf]
  %v3289 = vld [vmem:[%s7 + $0xc] sm:$0xf]
  %v3290 = vld [vmem:[%s7 + $0x10] sm:$0xf]
  %v3291 = vld [vmem:[%s7 + $0x14] sm:$0xf]
  %v3292 = vld [vmem:[%s7 + $0x18] sm:$0xf]
  %v3293 = vld [vmem:[%s7 + $0x1c] sm:$0xf]
  %v3294 = vpack.c.bf16 %v3099, %v3096
  %v3295 = vpack.c.bf16 %v3107, %v3104
  %v3296 = vpack.c.bf16 %v3115, %v3112
  %v3297 = vpack.c.bf16 %v3123, %v3120
  %v3298 = vpack.c.bf16 %v3131, %v3128
  %v3299 = vpack.c.bf16 %v3139, %v3136
  %v3300 = vpack.c.bf16 %v3147, %v3144
  %v3301 = vpack.c.bf16 %v3155, %v3152
  %v3302 = vpack.c.bf16 %v3163, %v3160
  %v3303 = vpack.c.bf16 %v3171, %v3168
  %v3304 = vpack.c.bf16 %v3179, %v3176
  %v3305 = vpack.c.bf16 %v3187, %v3184
  %v3306 = vpack.c.bf16 %v3195, %v3192
  %v3307 = vpack.c.bf16 %v3203, %v3200
  %v3308 = vpack.c.bf16 %v3211, %v3208
  %v3309 = vpack.c.bf16 %v3219, %v3216
  %v3310 = vpack.c.bf16 %v3227, %v3224
  %v3311 = vpack.c.bf16 %v3235, %v3232
  %v3312 = vpack.c.bf16 %v3243, %v3240
  %v3313 = vpack.c.bf16 %v3251, %v3248
  %v3314 = vpack.c.bf16 %v3259, %v3256
  %v3315 = vpack.c.bf16 %v3267, %v3264
  %v3316 = vpack.c.bf16 %v3275, %v3272
  %v3317 = vpack.c.bf16 %v3283, %v3280
  %v3318 = vld [vmem:[%s8] sm:$0x1]
  %v3320 = vlaneseq
  %v3321 = vshrl.u32 %v3320, 7
  %v3322 = vsub.s32 0, %v3321
  %v3323 = vrot.slane %v3318, %v3322
  %v3333 = vunpack.c.l.b16 %v3286
  %v3334 = vunpack.c.l.b16 %v3287
  %v3335 = vunpack.c.l.b16 %v3288
  %v3336 = vunpack.c.l.b16 %v3289
  %v3337 = vunpack.c.l.b16 %v3290
  %v3338 = vunpack.c.l.b16 %v3291
  %v3339 = vunpack.c.l.b16 %v3292
  %v3340 = vunpack.c.l.b16 %v3293
  %v3341 = vpack.c.b16 %v3334, %v3333
  %v3342 = vpack.c.b16 %v3336, %v3335
  %v3343 = vpack.c.b16 %v3338, %v3337
  %v3344 = vpack.c.b16 %v3340, %v3339
  %v3350 = vsel %vm158, %v3294, 0
  %v3353 = vsel %vm158, %v3295, 0
  %v3356 = vsel %vm158, %v3296, 0
  %v3359 = vsel %vm158, %v3297, 0
  %v3362 = vsel %vm158, %v3298, 0
  %v3365 = vsel %vm158, %v3299, 0
  %v3368 = vsel %vm158, %v3300, 0
  %v3371 = vsel %vm158, %v3301, 0
  %v3374 = vsel %vm158, %v3302, 0
  %v3377 = vsel %vm158, %v3303, 0
  %v3380 = vsel %vm158, %v3304, 0
  %v3383 = vsel %vm158, %v3305, 0
  %v3386 = vsel %vm158, %v3306, 0
  %v3389 = vsel %vm158, %v3307, 0
  %v3392 = vsel %vm158, %v3308, 0
  %v3395 = vsel %vm158, %v3309, 0
  %v3398 = vsel %vm158, %v3310, 0
  %v3401 = vsel %vm158, %v3311, 0
  %v3404 = vsel %vm158, %v3312, 0
  %v3407 = vsel %vm158, %v3313, 0
  %v3410 = vsel %vm158, %v3314, 0
  %v3413 = vsel %vm158, %v3315, 0
  %v3416 = vsel %vm158, %v3316, 0
  %v3419 = vsel %vm158, %v3317, 0
  %3421 = vmatprep.subr.bf16.mxu0 0
  %3422 = vmatpush1.bf16.msra.mxu0 0
  %3423 = vmatprep.subr.bf16.mxu0 0
  %3424 = vmatpush1.bf16.msra.mxu0 0
  %3425 = vmatprep.subr.bf16.mxu0 0
  %3426 = vmatpush1.bf16.msra.mxu0 0
  %3427 = vmatprep.subr.bf16.mxu0 0
  %3428 = vmatpush1.bf16.msra.mxu0 0
  %3429 = vmatprep.subr.bf16.mxu0 0
  %3430 = vmatpush1.bf16.msra.mxu0 %v3344
  %3431 = vmatprep.subr.bf16.mxu0 0
  %3432 = vmatpush1.bf16.msra.mxu0 %v3343
  %3433 = vmatprep.subr.bf16.mxu0 0
  %3434 = vmatpush1.bf16.msra.mxu0 %v3342
  %3435 = vmatprep.subr.bf16.mxu0 0
  %3436 = vmatpush1.bf16.msra.mxu0 %v3341
  %3437 = vmatprep.subr.bf16.mxu0 0
  %3438 = vmatpush2.bf16.msra.mxu0 0
  %3439 = vmatprep.subr.bf16.mxu0 0
  %3440 = vmatpush2.bf16.msra.mxu0 0
  %3441 = vmatprep.subr.bf16.mxu0 0
  %3442 = vmatpush2.bf16.msra.mxu0 0
  %3443 = vmatprep.subr.bf16.mxu0 0
  %3444 = vmatpush2.bf16.msra.mxu0 0
  %3445 = vmatprep.subr.bf16.mxu0 0
  %3446 = vmatpush2.bf16.msra.mxu0 0
  %3447 = vmatprep.subr.bf16.mxu0 0
  %3448 = vmatpush2.bf16.msra.mxu0 0
  %3449 = vmatprep.subr.bf16.mxu0 0
  %3450 = vmatpush2.bf16.msra.mxu0 0
  %3451 = vmatprep.subr.bf16.mxu0 0
  %3452 = vmatpush2.bf16.msra.mxu0 0
  %3453 = vmatprep.mubr.bf16.mxu0 0
  %3454 = vmatmul.mubr.bf16.gmra.mxu0 %v3350
  %v3455 = vpop.f32.mrf.mxu0
  %v3456 = vadd.f32 %v3323, %v3455
  %v3457 = vpop.f32.mrf.mxu0
  %v3458 = vpop.f32.mrf.mxu0
  %v3459 = vadd.f32 %v3323, %v3458
  %v3460 = vpop.f32.mrf.mxu0
  %3461 = vmatprep.mubr.bf16.mxu0 0
  %3462 = vmatmul.mubr.bf16.gmra.mxu0 %v3353
  %v3463 = vpop.f32.mrf.mxu0
  %v3464 = vadd.f32 %v3323, %v3463
  %v3465 = vpop.f32.mrf.mxu0
  %v3466 = vpop.f32.mrf.mxu0
  %v3467 = vadd.f32 %v3323, %v3466
  %v3468 = vpop.f32.mrf.mxu0
  %3469 = vmatprep.mubr.bf16.mxu0 0
  %3470 = vmatmul.mubr.bf16.gmra.mxu0 %v3356
  %v3471 = vpop.f32.mrf.mxu0
  %v3472 = vadd.f32 %v3323, %v3471
  %v3473 = vpop.f32.mrf.mxu0
  %v3474 = vpop.f32.mrf.mxu0
  %v3475 = vadd.f32 %v3323, %v3474
  %v3476 = vpop.f32.mrf.mxu0
  %3477 = vmatprep.mubr.bf16.mxu0 0
  %3478 = vmatmul.mubr.bf16.gmra.mxu0 %v3359
  %v3479 = vpop.f32.mrf.mxu0
  %v3480 = vadd.f32 %v3323, %v3479
  %v3481 = vpop.f32.mrf.mxu0
  %v3482 = vpop.f32.mrf.mxu0
  %v3483 = vadd.f32 %v3323, %v3482
  %v3484 = vpop.f32.mrf.mxu0
  %3485 = vmatprep.mubr.bf16.mxu0 0
  %3486 = vmatmul.mubr.bf16.gmra.mxu0 %v3362
  %v3487 = vpop.f32.mrf.mxu0
  %v3488 = vadd.f32 %v3323, %v3487
  %v3489 = vpop.f32.mrf.mxu0
  %v3490 = vpop.f32.mrf.mxu0
  %v3491 = vadd.f32 %v3323, %v3490
  %v3492 = vpop.f32.mrf.mxu0
  %3493 = vmatprep.mubr.bf16.mxu0 0
  %3494 = vmatmul.mubr.bf16.gmra.mxu0 %v3365
  %v3495 = vpop.f32.mrf.mxu0
  %v3496 = vadd.f32 %v3323, %v3495
  %v3497 = vpop.f32.mrf.mxu0
  %v3498 = vpop.f32.mrf.mxu0
  %v3499 = vadd.f32 %v3323, %v3498
  %v3500 = vpop.f32.mrf.mxu0
  %3501 = vmatprep.mubr.bf16.mxu0 0
  %3502 = vmatmul.mubr.bf16.gmra.mxu0 %v3368
  %v3503 = vpop.f32.mrf.mxu0
  %v3504 = vadd.f32 %v3323, %v3503
  %v3505 = vpop.f32.mrf.mxu0
  %v3506 = vpop.f32.mrf.mxu0
  %v3507 = vadd.f32 %v3323, %v3506
  %v3508 = vpop.f32.mrf.mxu0
  %3509 = vmatprep.mubr.bf16.mxu0 0
  %3510 = vmatmul.mubr.bf16.gmra.mxu0 %v3371
  %v3511 = vpop.f32.mrf.mxu0
  %v3512 = vadd.f32 %v3323, %v3511
  %v3513 = vpop.f32.mrf.mxu0
  %v3514 = vpop.f32.mrf.mxu0
  %v3515 = vadd.f32 %v3323, %v3514
  %v3516 = vpop.f32.mrf.mxu0
  %3517 = vmatprep.mubr.bf16.mxu0 0
  %3518 = vmatmul.mubr.bf16.gmra.mxu0 %v3374
  %v3519 = vpop.f32.mrf.mxu0
  %v3520 = vadd.f32 %v3323, %v3519
  %v3521 = vpop.f32.mrf.mxu0
  %v3522 = vpop.f32.mrf.mxu0
  %v3523 = vadd.f32 %v3323, %v3522
  %v3524 = vpop.f32.mrf.mxu0
  %3525 = vmatprep.mubr.bf16.mxu0 0
  %3526 = vmatmul.mubr.bf16.gmra.mxu0 %v3377
  %v3527 = vpop.f32.mrf.mxu0
  %v3528 = vadd.f32 %v3323, %v3527
  %v3529 = vpop.f32.mrf.mxu0
  %v3530 = vpop.f32.mrf.mxu0
  %v3531 = vadd.f32 %v3323, %v3530
  %v3532 = vpop.f32.mrf.mxu0
  %3533 = vmatprep.mubr.bf16.mxu0 0
  %3534 = vmatmul.mubr.bf16.gmra.mxu0 %v3380
  %v3535 = vpop.f32.mrf.mxu0
  %v3536 = vadd.f32 %v3323, %v3535
  %v3537 = vpop.f32.mrf.mxu0
  %v3538 = vpop.f32.mrf.mxu0
  %v3539 = vadd.f32 %v3323, %v3538
  %v3540 = vpop.f32.mrf.mxu0
  %3541 = vmatprep.mubr.bf16.mxu0 0
  %3542 = vmatmul.mubr.bf16.gmra.mxu0 %v3383
  %v3543 = vpop.f32.mrf.mxu0
  %v3544 = vadd.f32 %v3323, %v3543
  %v3545 = vpop.f32.mrf.mxu0
  %v3546 = vpop.f32.mrf.mxu0
  %v3547 = vadd.f32 %v3323, %v3546
  %v3548 = vpop.f32.mrf.mxu0
  %3549 = vmatprep.mubr.bf16.mxu0 0
  %3550 = vmatmul.mubr.bf16.gmra.mxu0 %v3386
  %v3551 = vpop.f32.mrf.mxu0
  %v3552 = vadd.f32 %v3323, %v3551
  %v3553 = vpop.f32.mrf.mxu0
  %v3554 = vpop.f32.mrf.mxu0
  %v3555 = vadd.f32 %v3323, %v3554
  %v3556 = vpop.f32.mrf.mxu0
  %3557 = vmatprep.mubr.bf16.mxu0 0
  %3558 = vmatmul.mubr.bf16.gmra.mxu0 %v3389
  %v3559 = vpop.f32.mrf.mxu0
  %v3560 = vadd.f32 %v3323, %v3559
  %v3561 = vpop.f32.mrf.mxu0
  %v3562 = vpop.f32.mrf.mxu0
  %v3563 = vadd.f32 %v3323, %v3562
  %v3564 = vpop.f32.mrf.mxu0
  %3565 = vmatprep.mubr.bf16.mxu0 0
  %3566 = vmatmul.mubr.bf16.gmra.mxu0 %v3392
  %v3567 = vpop.f32.mrf.mxu0
  %v3568 = vadd.f32 %v3323, %v3567
  %v3569 = vpop.f32.mrf.mxu0
  %v3570 = vpop.f32.mrf.mxu0
  %v3571 = vadd.f32 %v3323, %v3570
  %v3572 = vpop.f32.mrf.mxu0
  %3573 = vmatprep.mubr.bf16.mxu0 0
  %3574 = vmatmul.mubr.bf16.gmra.mxu0 %v3395
  %v3575 = vpop.f32.mrf.mxu0
  %v3576 = vadd.f32 %v3323, %v3575
  %v3577 = vpop.f32.mrf.mxu0
  %v3578 = vpop.f32.mrf.mxu0
  %v3579 = vadd.f32 %v3323, %v3578
  %v3580 = vpop.f32.mrf.mxu0
  %3581 = vmatprep.mubr.bf16.mxu0 0
  %3582 = vmatmul.mubr.bf16.gmra.mxu0 %v3398
  %v3583 = vpop.f32.mrf.mxu0
  %v3584 = vadd.f32 %v3323, %v3583
  %v3585 = vpop.f32.mrf.mxu0
  %v3586 = vpop.f32.mrf.mxu0
  %v3587 = vadd.f32 %v3323, %v3586
  %v3588 = vpop.f32.mrf.mxu0
  %3589 = vmatprep.mubr.bf16.mxu0 0
  %3590 = vmatmul.mubr.bf16.gmra.mxu0 %v3401
  %v3591 = vpop.f32.mrf.mxu0
  %v3592 = vadd.f32 %v3323, %v3591
  %v3593 = vpop.f32.mrf.mxu0
  %v3594 = vpop.f32.mrf.mxu0
  %v3595 = vadd.f32 %v3323, %v3594
  %v3596 = vpop.f32.mrf.mxu0
  %3597 = vmatprep.mubr.bf16.mxu0 0
  %3598 = vmatmul.mubr.bf16.gmra.mxu0 %v3404
  %v3599 = vpop.f32.mrf.mxu0
  %v3600 = vadd.f32 %v3323, %v3599
  %v3601 = vpop.f32.mrf.mxu0
  %v3602 = vpop.f32.mrf.mxu0
  %v3603 = vadd.f32 %v3323, %v3602
  %v3604 = vpop.f32.mrf.mxu0
  %3605 = vmatprep.mubr.bf16.mxu0 0
  %3606 = vmatmul.mubr.bf16.gmra.mxu0 %v3407
  %v3607 = vpop.f32.mrf.mxu0
  %v3608 = vadd.f32 %v3323, %v3607
  %v3609 = vpop.f32.mrf.mxu0
  %v3610 = vpop.f32.mrf.mxu0
  %v3611 = vadd.f32 %v3323, %v3610
  %v3612 = vpop.f32.mrf.mxu0
  %3613 = vmatprep.mubr.bf16.mxu0 0
  %3614 = vmatmul.mubr.bf16.gmra.mxu0 %v3410
  %v3615 = vpop.f32.mrf.mxu0
  %v3616 = vadd.f32 %v3323, %v3615
  %v3617 = vpop.f32.mrf.mxu0
  %v3618 = vpop.f32.mrf.mxu0
  %v3619 = vadd.f32 %v3323, %v3618
  %v3620 = vpop.f32.mrf.mxu0
  %3621 = vmatprep.mubr.bf16.mxu0 0
  %3622 = vmatmul.mubr.bf16.gmra.mxu0 %v3413
  %v3623 = vpop.f32.mrf.mxu0
  %v3624 = vadd.f32 %v3323, %v3623
  %v3625 = vpop.f32.mrf.mxu0
  %v3626 = vpop.f32.mrf.mxu0
  %v3627 = vadd.f32 %v3323, %v3626
  %v3628 = vpop.f32.mrf.mxu0
  %3629 = vmatprep.mubr.bf16.mxu0 0
  %3630 = vmatmul.mubr.bf16.gmra.mxu0 %v3416
  %v3631 = vpop.f32.mrf.mxu0
  %v3632 = vadd.f32 %v3323, %v3631
  %v3633 = vpop.f32.mrf.mxu0
  %v3634 = vpop.f32.mrf.mxu0
  %v3635 = vadd.f32 %v3323, %v3634
  %v3636 = vpop.f32.mrf.mxu0
  %3637 = vmatprep.mubr.bf16.mxu0 0
  %3638 = vmatmul.mubr.bf16.gmra.mxu0 %v3419
  %v3639 = vpop.f32.mrf.mxu0
  %v3640 = vadd.f32 %v3323, %v3639
  %v3641 = vpop.f32.mrf.mxu0
  %v3642 = vpop.f32.mrf.mxu0
  %v3643 = vadd.f32 %v3323, %v3642
  %v3644 = vpop.f32.mrf.mxu0
  %3645 = vdwg.mxu0
  %v3646 = vadd.f32 %v47, %v3456
  %v3647 = vadd.f32 %v48, %v3459
  %v3648 = vadd.f32 %v49, %v3464
  %v3649 = vadd.f32 %v50, %v3467
  %v3650 = vadd.f32 %v51, %v3472
  %v3651 = vadd.f32 %v52, %v3475
  %v3652 = vadd.f32 %v53, %v3480
  %v3653 = vadd.f32 %v54, %v3483
  %v3654 = vadd.f32 %v55, %v3488
  %v3655 = vadd.f32 %v56, %v3491
  %v3656 = vadd.f32 %v57, %v3496
  %v3657 = vadd.f32 %v58, %v3499
  %v3658 = vadd.f32 %v59, %v3504
  %v3659 = vadd.f32 %v60, %v3507
  %v3660 = vadd.f32 %v61, %v3512
  %v3661 = vadd.f32 %v62, %v3515
  %v3662 = vadd.f32 %v63, %v3520
  %v3663 = vadd.f32 %v64, %v3523
  %v3664 = vadd.f32 %v65, %v3528
  %v3665 = vadd.f32 %v66, %v3531
  %v3666 = vadd.f32 %v67, %v3536
  %v3667 = vadd.f32 %v68, %v3539
  %v3668 = vadd.f32 %v69, %v3544
  %v3669 = vadd.f32 %v70, %v3547
  %v3670 = vadd.f32 %v71, %v3552
  %v3671 = vadd.f32 %v72, %v3555
  %v3672 = vadd.f32 %v73, %v3560
  %v3673 = vadd.f32 %v74, %v3563
  %v3674 = vadd.f32 %v75, %v3568
  %v3675 = vadd.f32 %v76, %v3571
  %v3676 = vadd.f32 %v77, %v3576
  %v3677 = vadd.f32 %v78, %v3579
  %v3678 = vadd.f32 %v79, %v3584
  %v3679 = vadd.f32 %v80, %v3587
  %v3680 = vadd.f32 %v81, %v3592
  %v3681 = vadd.f32 %v82, %v3595
  %v3682 = vadd.f32 %v83, %v3600
  %v3683 = vadd.f32 %v84, %v3603
  %v3684 = vadd.f32 %v85, %v3608
  %v3685 = vadd.f32 %v86, %v3611
  %v3686 = vadd.f32 %v87, %v3616
  %v3687 = vadd.f32 %v88, %v3619
  %v3688 = vadd.f32 %v89, %v3624
  %v3689 = vadd.f32 %v90, %v3627
  %v3690 = vadd.f32 %v91, %v3632
  %v3691 = vadd.f32 %v92, %v3635
  %v3692 = vadd.f32 %v93, %v3640
  %v3693 = vadd.f32 %v94, %v3643
  %v3694 = vld [vmem:[%s11] sm:$0x1]
  %v3695 = vld [vmem:[%s12] sm:$0x1]
  %v3696 = vsel %vm158, %v3646, 0.0
  %3697 = vadd.xlane.f32.xlu0 %v3696
  %v3698 = vpop.xlane.xlu0 %3697
  %v3699 = vsel %vm158, %v3647, 0.0
  %3700 = vadd.xlane.f32.xlu0 %v3699
  %v3701 = vpop.xlane.xlu0 %3700
  %v3702 = vsel %vm158, %v3648, 0.0
  %3703 = vadd.xlane.f32.xlu0 %v3702
  %v3704 = vpop.xlane.xlu0 %3703
  %v3705 = vsel %vm158, %v3649, 0.0
  %3706 = vadd.xlane.f32.xlu0 %v3705
  %v3707 = vpop.xlane.xlu0 %3706
  %v3708 = vsel %vm158, %v3650, 0.0
  %3709 = vadd.xlane.f32.xlu0 %v3708
  %v3710 = vpop.xlane.xlu0 %3709
  %v3711 = vsel %vm158, %v3651, 0.0
  %3712 = vadd.xlane.f32.xlu0 %v3711
  %v3713 = vpop.xlane.xlu0 %3712
  %v3714 = vsel %vm158, %v3652, 0.0
  %3715 = vadd.xlane.f32.xlu0 %v3714
  %v3716 = vpop.xlane.xlu0 %3715
  %v3717 = vsel %vm158, %v3653, 0.0
  %3718 = vadd.xlane.f32.xlu0 %v3717
  %v3719 = vpop.xlane.xlu0 %3718
  %v3720 = vsel %vm158, %v3654, 0.0
  %3721 = vadd.xlane.f32.xlu0 %v3720
  %v3722 = vpop.xlane.xlu0 %3721
  %v3723 = vsel %vm158, %v3655, 0.0
  %3724 = vadd.xlane.f32.xlu0 %v3723
  %v3725 = vpop.xlane.xlu0 %3724
  %v3726 = vsel %vm158, %v3656, 0.0
  %3727 = vadd.xlane.f32.xlu0 %v3726
  %v3728 = vpop.xlane.xlu0 %3727
  %v3729 = vsel %vm158, %v3657, 0.0
  %3730 = vadd.xlane.f32.xlu0 %v3729
  %v3731 = vpop.xlane.xlu0 %3730
  %v3732 = vsel %vm158, %v3658, 0.0
  %3733 = vadd.xlane.f32.xlu0 %v3732
  %v3734 = vpop.xlane.xlu0 %3733
  %v3735 = vsel %vm158, %v3659, 0.0
  %3736 = vadd.xlane.f32.xlu0 %v3735
  %v3737 = vpop.xlane.xlu0 %3736
  %v3738 = vsel %vm158, %v3660, 0.0
  %3739 = vadd.xlane.f32.xlu0 %v3738
  %v3740 = vpop.xlane.xlu0 %3739
  %v3741 = vsel %vm158, %v3661, 0.0
  %3742 = vadd.xlane.f32.xlu0 %v3741
  %v3743 = vpop.xlane.xlu0 %3742
  %v3744 = vsel %vm158, %v3662, 0.0
  %3745 = vadd.xlane.f32.xlu0 %v3744
  %v3746 = vpop.xlane.xlu0 %3745
  %v3747 = vsel %vm158, %v3663, 0.0
  %3748 = vadd.xlane.f32.xlu0 %v3747
  %v3749 = vpop.xlane.xlu0 %3748
  %v3750 = vsel %vm158, %v3664, 0.0
  %3751 = vadd.xlane.f32.xlu0 %v3750
  %v3752 = vpop.xlane.xlu0 %3751
  %v3753 = vsel %vm158, %v3665, 0.0
  %3754 = vadd.xlane.f32.xlu0 %v3753
  %v3755 = vpop.xlane.xlu0 %3754
  %v3756 = vsel %vm158, %v3666, 0.0
  %3757 = vadd.xlane.f32.xlu0 %v3756
  %v3758 = vpop.xlane.xlu0 %3757
  %v3759 = vsel %vm158, %v3667, 0.0
  %3760 = vadd.xlane.f32.xlu0 %v3759
  %v3761 = vpop.xlane.xlu0 %3760
  %v3762 = vsel %vm158, %v3668, 0.0
  %3763 = vadd.xlane.f32.xlu0 %v3762
  %v3764 = vpop.xlane.xlu0 %3763
  %v3765 = vsel %vm158, %v3669, 0.0
  %3766 = vadd.xlane.f32.xlu0 %v3765
  %v3767 = vpop.xlane.xlu0 %3766
  %v3768 = vsel %vm158, %v3670, 0.0
  %3769 = vadd.xlane.f32.xlu0 %v3768
  %v3770 = vpop.xlane.xlu0 %3769
  %v3771 = vsel %vm158, %v3671, 0.0
  %3772 = vadd.xlane.f32.xlu0 %v3771
  %v3773 = vpop.xlane.xlu0 %3772
  %v3774 = vsel %vm158, %v3672, 0.0
  %3775 = vadd.xlane.f32.xlu0 %v3774
  %v3776 = vpop.xlane.xlu0 %3775
  %v3777 = vsel %vm158, %v3673, 0.0
  %3778 = vadd.xlane.f32.xlu0 %v3777
  %v3779 = vpop.xlane.xlu0 %3778
  %v3780 = vsel %vm158, %v3674, 0.0
  %3781 = vadd.xlane.f32.xlu0 %v3780
  %v3782 = vpop.xlane.xlu0 %3781
  %v3783 = vsel %vm158, %v3675, 0.0
  %3784 = vadd.xlane.f32.xlu0 %v3783
  %v3785 = vpop.xlane.xlu0 %3784
  %v3786 = vsel %vm158, %v3676, 0.0
  %3787 = vadd.xlane.f32.xlu0 %v3786
  %v3788 = vpop.xlane.xlu0 %3787
  %v3789 = vsel %vm158, %v3677, 0.0
  %3790 = vadd.xlane.f32.xlu0 %v3789
  %v3791 = vpop.xlane.xlu0 %3790
  %v3792 = vsel %vm158, %v3678, 0.0
  %3793 = vadd.xlane.f32.xlu0 %v3792
  %v3794 = vpop.xlane.xlu0 %3793
  %v3795 = vsel %vm158, %v3679, 0.0
  %3796 = vadd.xlane.f32.xlu0 %v3795
  %v3797 = vpop.xlane.xlu0 %3796
  %v3798 = vsel %vm158, %v3680, 0.0
  %3799 = vadd.xlane.f32.xlu0 %v3798
  %v3800 = vpop.xlane.xlu0 %3799
  %v3801 = vsel %vm158, %v3681, 0.0
  %3802 = vadd.xlane.f32.xlu0 %v3801
  %v3803 = vpop.xlane.xlu0 %3802
  %v3804 = vsel %vm158, %v3682, 0.0
  %3805 = vadd.xlane.f32.xlu0 %v3804
  %v3806 = vpop.xlane.xlu0 %3805
  %v3807 = vsel %vm158, %v3683, 0.0
  %3808 = vadd.xlane.f32.xlu0 %v3807
  %v3809 = vpop.xlane.xlu0 %3808
  %v3810 = vsel %vm158, %v3684, 0.0
  %3811 = vadd.xlane.f32.xlu0 %v3810
  %v3812 = vpop.xlane.xlu0 %3811
  %v3813 = vsel %vm158, %v3685, 0.0
  %3814 = vadd.xlane.f32.xlu0 %v3813
  %v3815 = vpop.xlane.xlu0 %3814
  %v3816 = vsel %vm158, %v3686, 0.0
  %3817 = vadd.xlane.f32.xlu0 %v3816
  %v3818 = vpop.xlane.xlu0 %3817
  %v3819 = vsel %vm158, %v3687, 0.0
  %3820 = vadd.xlane.f32.xlu0 %v3819
  %v3821 = vpop.xlane.xlu0 %3820
  %v3822 = vsel %vm158, %v3688, 0.0
  %3823 = vadd.xlane.f32.xlu0 %v3822
  %v3824 = vpop.xlane.xlu0 %3823
  %v3825 = vsel %vm158, %v3689, 0.0
  %3826 = vadd.xlane.f32.xlu0 %v3825
  %v3827 = vpop.xlane.xlu0 %3826
  %v3828 = vsel %vm158, %v3690, 0.0
  %3829 = vadd.xlane.f32.xlu0 %v3828
  %v3830 = vpop.xlane.xlu0 %3829
  %v3831 = vsel %vm158, %v3691, 0.0
  %3832 = vadd.xlane.f32.xlu0 %v3831
  %v3833 = vpop.xlane.xlu0 %3832
  %v3834 = vsel %vm158, %v3692, 0.0
  %3835 = vadd.xlane.f32.xlu0 %v3834
  %v3836 = vpop.xlane.xlu0 %3835
  %v3837 = vsel %vm158, %v3693, 0.0
  %3838 = vadd.xlane.f32.xlu0 %v3837
  %v3839 = vpop.xlane.xlu0 %3838
  %v3840 = vrcp.pop 64.0
  %v3841 = vmul.f32 %v3698, %v3840
  %v3842 = vmul.f32 %v3701, %v3840
  %v3843 = vmul.f32 %v3704, %v3840
  %v3844 = vmul.f32 %v3707, %v3840
  %v3845 = vmul.f32 %v3710, %v3840
  %v3846 = vmul.f32 %v3713, %v3840
  %v3847 = vmul.f32 %v3716, %v3840
  %v3848 = vmul.f32 %v3719, %v3840
  %v3849 = vmul.f32 %v3722, %v3840
  %v3850 = vmul.f32 %v3725, %v3840
  %v3851 = vmul.f32 %v3728, %v3840
  %v3852 = vmul.f32 %v3731, %v3840
  %v3853 = vmul.f32 %v3734, %v3840
  %v3854 = vmul.f32 %v3737, %v3840
  %v3855 = vmul.f32 %v3740, %v3840
  %v3856 = vmul.f32 %v3743, %v3840
  %v3857 = vmul.f32 %v3746, %v3840
  %v3858 = vmul.f32 %v3749, %v3840
  %v3859 = vmul.f32 %v3752, %v3840
  %v3860 = vmul.f32 %v3755, %v3840
  %v3861 = vmul.f32 %v3758, %v3840
  %v3862 = vmul.f32 %v3761, %v3840
  %v3863 = vmul.f32 %v3764, %v3840
  %v3864 = vmul.f32 %v3767, %v3840
  %v3865 = vmul.f32 %v3770, %v3840
  %v3866 = vmul.f32 %v3773, %v3840
  %v3867 = vmul.f32 %v3776, %v3840
  %v3868 = vmul.f32 %v3779, %v3840
  %v3869 = vmul.f32 %v3782, %v3840
  %v3870 = vmul.f32 %v3785, %v3840
  %v3871 = vmul.f32 %v3788, %v3840
  %v3872 = vmul.f32 %v3791, %v3840
  %v3873 = vmul.f32 %v3794, %v3840
  %v3874 = vmul.f32 %v3797, %v3840
  %v3875 = vmul.f32 %v3800, %v3840
  %v3876 = vmul.f32 %v3803, %v3840
  %v3877 = vmul.f32 %v3806, %v3840
  %v3878 = vmul.f32 %v3809, %v3840
  %v3879 = vmul.f32 %v3812, %v3840
  %v3880 = vmul.f32 %v3815, %v3840
  %v3881 = vmul.f32 %v3818, %v3840
  %v3882 = vmul.f32 %v3821, %v3840
  %v3883 = vmul.f32 %v3824, %v3840
  %v3884 = vmul.f32 %v3827, %v3840
  %v3885 = vmul.f32 %v3830, %v3840
  %v3886 = vmul.f32 %v3833, %v3840
  %v3887 = vmul.f32 %v3836, %v3840
  %v3888 = vmul.f32 %v3839, %v3840
  %v3889 = vsub.f32 %v3646, %v3841
  %v3890 = vsub.f32 %v3647, %v3842
  %v3891 = vsub.f32 %v3648, %v3843
  %v3892 = vsub.f32 %v3649, %v3844
  %v3893 = vsub.f32 %v3650, %v3845
  %v3894 = vsub.f32 %v3651, %v3846
  %v3895 = vsub.f32 %v3652, %v3847
  %v3896 = vsub.f32 %v3653, %v3848
  %v3897 = vsub.f32 %v3654, %v3849
  %v3898 = vsub.f32 %v3655, %v3850
  %v3899 = vsub.f32 %v3656, %v3851
  %v3900 = vsub.f32 %v3657, %v3852
  %v3901 = vsub.f32 %v3658, %v3853
  %v3902 = vsub.f32 %v3659, %v3854
  %v3903 = vsub.f32 %v3660, %v3855
  %v3904 = vsub.f32 %v3661, %v3856
  %v3905 = vsub.f32 %v3662, %v3857
  %v3906 = vsub.f32 %v3663, %v3858
  %v3907 = vsub.f32 %v3664, %v3859
  %v3908 = vsub.f32 %v3665, %v3860
  %v3909 = vsub.f32 %v3666, %v3861
  %v3910 = vsub.f32 %v3667, %v3862
  %v3911 = vsub.f32 %v3668, %v3863
  %v3912 = vsub.f32 %v3669, %v3864
  %v3913 = vsub.f32 %v3670, %v3865
  %v3914 = vsub.f32 %v3671, %v3866
  %v3915 = vsub.f32 %v3672, %v3867
  %v3916 = vsub.f32 %v3673, %v3868
  %v3917 = vsub.f32 %v3674, %v3869
  %v3918 = vsub.f32 %v3675, %v3870
  %v3919 = vsub.f32 %v3676, %v3871
  %v3920 = vsub.f32 %v3677, %v3872
  %v3921 = vsub.f32 %v3678, %v3873
  %v3922 = vsub.f32 %v3679, %v3874
  %v3923 = vsub.f32 %v3680, %v3875
  %v3924 = vsub.f32 %v3681, %v3876
  %v3925 = vsub.f32 %v3682, %v3877
  %v3926 = vsub.f32 %v3683, %v3878
  %v3927 = vsub.f32 %v3684, %v3879
  %v3928 = vsub.f32 %v3685, %v3880
  %v3929 = vsub.f32 %v3686, %v3881
  %v3930 = vsub.f32 %v3687, %v3882
  %v3931 = vsub.f32 %v3688, %v3883
  %v3932 = vsub.f32 %v3689, %v3884
  %v3933 = vsub.f32 %v3690, %v3885
  %v3934 = vsub.f32 %v3691, %v3886
  %v3935 = vsub.f32 %v3692, %v3887
  %v3936 = vsub.f32 %v3693, %v3888
  %v3937 = vmul.f32 %v3889, %v3889
  %v3938 = vmul.f32 %v3890, %v3890
  %v3939 = vmul.f32 %v3891, %v3891
  %v3940 = vmul.f32 %v3892, %v3892
  %v3941 = vmul.f32 %v3893, %v3893
  %v3942 = vmul.f32 %v3894, %v3894
  %v3943 = vmul.f32 %v3895, %v3895
  %v3944 = vmul.f32 %v3896, %v3896
  %v3945 = vmul.f32 %v3897, %v3897
  %v3946 = vmul.f32 %v3898, %v3898
  %v3947 = vmul.f32 %v3899, %v3899
  %v3948 = vmul.f32 %v3900, %v3900
  %v3949 = vmul.f32 %v3901, %v3901
  %v3950 = vmul.f32 %v3902, %v3902
  %v3951 = vmul.f32 %v3903, %v3903
  %v3952 = vmul.f32 %v3904, %v3904
  %v3953 = vmul.f32 %v3905, %v3905
  %v3954 = vmul.f32 %v3906, %v3906
  %v3955 = vmul.f32 %v3907, %v3907
  %v3956 = vmul.f32 %v3908, %v3908
  %v3957 = vmul.f32 %v3909, %v3909
  %v3958 = vmul.f32 %v3910, %v3910
  %v3959 = vmul.f32 %v3911, %v3911
  %v3960 = vmul.f32 %v3912, %v3912
  %v3961 = vmul.f32 %v3913, %v3913
  %v3962 = vmul.f32 %v3914, %v3914
  %v3963 = vmul.f32 %v3915, %v3915
  %v3964 = vmul.f32 %v3916, %v3916
  %v3965 = vmul.f32 %v3917, %v3917
  %v3966 = vmul.f32 %v3918, %v3918
  %v3967 = vmul.f32 %v3919, %v3919
  %v3968 = vmul.f32 %v3920, %v3920
  %v3969 = vmul.f32 %v3921, %v3921
  %v3970 = vmul.f32 %v3922, %v3922
  %v3971 = vmul.f32 %v3923, %v3923
  %v3972 = vmul.f32 %v3924, %v3924
  %v3973 = vmul.f32 %v3925, %v3925
  %v3974 = vmul.f32 %v3926, %v3926
  %v3975 = vmul.f32 %v3927, %v3927
  %v3976 = vmul.f32 %v3928, %v3928
  %v3977 = vmul.f32 %v3929, %v3929
  %v3978 = vmul.f32 %v3930, %v3930
  %v3979 = vmul.f32 %v3931, %v3931
  %v3980 = vmul.f32 %v3932, %v3932
  %v3981 = vmul.f32 %v3933, %v3933
  %v3982 = vmul.f32 %v3934, %v3934
  %v3983 = vmul.f32 %v3935, %v3935
  %v3984 = vmul.f32 %v3936, %v3936
  %v3985 = vsel %vm158, %v3937, 0.0
  %3986 = vadd.xlane.f32.xlu0 %v3985
  %v3987 = vpop.xlane.xlu0 %3986
  %v3988 = vsel %vm158, %v3938, 0.0
  %3989 = vadd.xlane.f32.xlu0 %v3988
  %v3990 = vpop.xlane.xlu0 %3989
  %v3991 = vsel %vm158, %v3939, 0.0
  %3992 = vadd.xlane.f32.xlu0 %v3991
  %v3993 = vpop.xlane.xlu0 %3992
  %v3994 = vsel %vm158, %v3940, 0.0
  %3995 = vadd.xlane.f32.xlu0 %v3994
  %v3996 = vpop.xlane.xlu0 %3995
  %v3997 = vsel %vm158, %v3941, 0.0
  %3998 = vadd.xlane.f32.xlu0 %v3997
  %v3999 = vpop.xlane.xlu0 %3998
  %v4000 = vsel %vm158, %v3942, 0.0
  %4001 = vadd.xlane.f32.xlu0 %v4000
  %v4002 = vpop.xlane.xlu0 %4001
  %v4003 = vsel %vm158, %v3943, 0.0
  %4004 = vadd.xlane.f32.xlu0 %v4003
  %v4005 = vpop.xlane.xlu0 %4004
  %v4006 = vsel %vm158, %v3944, 0.0
  %4007 = vadd.xlane.f32.xlu0 %v4006
  %v4008 = vpop.xlane.xlu0 %4007
  %v4009 = vsel %vm158, %v3945, 0.0
  %4010 = vadd.xlane.f32.xlu0 %v4009
  %v4011 = vpop.xlane.xlu0 %4010
  %v4012 = vsel %vm158, %v3946, 0.0
  %4013 = vadd.xlane.f32.xlu0 %v4012
  %v4014 = vpop.xlane.xlu0 %4013
  %v4015 = vsel %vm158, %v3947, 0.0
  %4016 = vadd.xlane.f32.xlu0 %v4015
  %v4017 = vpop.xlane.xlu0 %4016
  %v4018 = vsel %vm158, %v3948, 0.0
  %4019 = vadd.xlane.f32.xlu0 %v4018
  %v4020 = vpop.xlane.xlu0 %4019
  %v4021 = vsel %vm158, %v3949, 0.0
  %4022 = vadd.xlane.f32.xlu0 %v4021
  %v4023 = vpop.xlane.xlu0 %4022
  %v4024 = vsel %vm158, %v3950, 0.0
  %4025 = vadd.xlane.f32.xlu0 %v4024
  %v4026 = vpop.xlane.xlu0 %4025
  %v4027 = vsel %vm158, %v3951, 0.0
  %4028 = vadd.xlane.f32.xlu0 %v4027
  %v4029 = vpop.xlane.xlu0 %4028
  %v4030 = vsel %vm158, %v3952, 0.0
  %4031 = vadd.xlane.f32.xlu0 %v4030
  %v4032 = vpop.xlane.xlu0 %4031
  %v4033 = vsel %vm158, %v3953, 0.0
  %4034 = vadd.xlane.f32.xlu0 %v4033
  %v4035 = vpop.xlane.xlu0 %4034
  %v4036 = vsel %vm158, %v3954, 0.0
  %4037 = vadd.xlane.f32.xlu0 %v4036
  %v4038 = vpop.xlane.xlu0 %4037
  %v4039 = vsel %vm158, %v3955, 0.0
  %4040 = vadd.xlane.f32.xlu0 %v4039
  %v4041 = vpop.xlane.xlu0 %4040
  %v4042 = vsel %vm158, %v3956, 0.0
  %4043 = vadd.xlane.f32.xlu0 %v4042
  %v4044 = vpop.xlane.xlu0 %4043
  %v4045 = vsel %vm158, %v3957, 0.0
  %4046 = vadd.xlane.f32.xlu0 %v4045
  %v4047 = vpop.xlane.xlu0 %4046
  %v4048 = vsel %vm158, %v3958, 0.0
  %4049 = vadd.xlane.f32.xlu0 %v4048
  %v4050 = vpop.xlane.xlu0 %4049
  %v4051 = vsel %vm158, %v3959, 0.0
  %4052 = vadd.xlane.f32.xlu0 %v4051
  %v4053 = vpop.xlane.xlu0 %4052
  %v4054 = vsel %vm158, %v3960, 0.0
  %4055 = vadd.xlane.f32.xlu0 %v4054
  %v4056 = vpop.xlane.xlu0 %4055
  %v4057 = vsel %vm158, %v3961, 0.0
  %4058 = vadd.xlane.f32.xlu0 %v4057
  %v4059 = vpop.xlane.xlu0 %4058
  %v4060 = vsel %vm158, %v3962, 0.0
  %4061 = vadd.xlane.f32.xlu0 %v4060
  %v4062 = vpop.xlane.xlu0 %4061
  %v4063 = vsel %vm158, %v3963, 0.0
  %4064 = vadd.xlane.f32.xlu0 %v4063
  %v4065 = vpop.xlane.xlu0 %4064
  %v4066 = vsel %vm158, %v3964, 0.0
  %4067 = vadd.xlane.f32.xlu0 %v4066
  %v4068 = vpop.xlane.xlu0 %4067
  %v4069 = vsel %vm158, %v3965, 0.0
  %4070 = vadd.xlane.f32.xlu0 %v4069
  %v4071 = vpop.xlane.xlu0 %4070
  %v4072 = vsel %vm158, %v3966, 0.0
  %4073 = vadd.xlane.f32.xlu0 %v4072
  %v4074 = vpop.xlane.xlu0 %4073
  %v4075 = vsel %vm158, %v3967, 0.0
  %4076 = vadd.xlane.f32.xlu0 %v4075
  %v4077 = vpop.xlane.xlu0 %4076
  %v4078 = vsel %vm158, %v3968, 0.0
  %4079 = vadd.xlane.f32.xlu0 %v4078
  %v4080 = vpop.xlane.xlu0 %4079
  %v4081 = vsel %vm158, %v3969, 0.0
  %4082 = vadd.xlane.f32.xlu0 %v4081
  %v4083 = vpop.xlane.xlu0 %4082
  %v4084 = vsel %vm158, %v3970, 0.0
  %4085 = vadd.xlane.f32.xlu0 %v4084
  %v4086 = vpop.xlane.xlu0 %4085
  %v4087 = vsel %vm158, %v3971, 0.0
  %4088 = vadd.xlane.f32.xlu0 %v4087
  %v4089 = vpop.xlane.xlu0 %4088
  %v4090 = vsel %vm158, %v3972, 0.0
  %4091 = vadd.xlane.f32.xlu0 %v4090
  %v4092 = vpop.xlane.xlu0 %4091
  %v4093 = vsel %vm158, %v3973, 0.0
  %4094 = vadd.xlane.f32.xlu0 %v4093
  %v4095 = vpop.xlane.xlu0 %4094
  %v4096 = vsel %vm158, %v3974, 0.0
  %4097 = vadd.xlane.f32.xlu0 %v4096
  %v4098 = vpop.xlane.xlu0 %4097
  %v4099 = vsel %vm158, %v3975, 0.0
  %4100 = vadd.xlane.f32.xlu0 %v4099
  %v4101 = vpop.xlane.xlu0 %4100
  %v4102 = vsel %vm158, %v3976, 0.0
  %4103 = vadd.xlane.f32.xlu0 %v4102
  %v4104 = vpop.xlane.xlu0 %4103
  %v4105 = vsel %vm158, %v3977, 0.0
  %4106 = vadd.xlane.f32.xlu0 %v4105
  %v4107 = vpop.xlane.xlu0 %4106
  %v4108 = vsel %vm158, %v3978, 0.0
  %4109 = vadd.xlane.f32.xlu0 %v4108
  %v4110 = vpop.xlane.xlu0 %4109
  %v4111 = vsel %vm158, %v3979, 0.0
  %4112 = vadd.xlane.f32.xlu0 %v4111
  %v4113 = vpop.xlane.xlu0 %4112
  %v4114 = vsel %vm158, %v3980, 0.0
  %4115 = vadd.xlane.f32.xlu0 %v4114
  %v4116 = vpop.xlane.xlu0 %4115
  %v4117 = vsel %vm158, %v3981, 0.0
  %4118 = vadd.xlane.f32.xlu0 %v4117
  %v4119 = vpop.xlane.xlu0 %4118
  %v4120 = vsel %vm158, %v3982, 0.0
  %4121 = vadd.xlane.f32.xlu0 %v4120
  %v4122 = vpop.xlane.xlu0 %4121
  %v4123 = vsel %vm158, %v3983, 0.0
  %4124 = vadd.xlane.f32.xlu0 %v4123
  %v4125 = vpop.xlane.xlu0 %4124
  %v4126 = vsel %vm158, %v3984, 0.0
  %4127 = vadd.xlane.f32.xlu0 %v4126
  %v4128 = vpop.xlane.xlu0 %4127
  %v4129 = vmul.f32 %v3987, %v3840
  %v4130 = vmul.f32 %v3990, %v3840
  %v4131 = vmul.f32 %v3993, %v3840
  %v4132 = vmul.f32 %v3996, %v3840
  %v4133 = vmul.f32 %v3999, %v3840
  %v4134 = vmul.f32 %v4002, %v3840
  %v4135 = vmul.f32 %v4005, %v3840
  %v4136 = vmul.f32 %v4008, %v3840
  %v4137 = vmul.f32 %v4011, %v3840
  %v4138 = vmul.f32 %v4014, %v3840
  %v4139 = vmul.f32 %v4017, %v3840
  %v4140 = vmul.f32 %v4020, %v3840
  %v4141 = vmul.f32 %v4023, %v3840
  %v4142 = vmul.f32 %v4026, %v3840
  %v4143 = vmul.f32 %v4029, %v3840
  %v4144 = vmul.f32 %v4032, %v3840
  %v4145 = vmul.f32 %v4035, %v3840
  %v4146 = vmul.f32 %v4038, %v3840
  %v4147 = vmul.f32 %v4041, %v3840
  %v4148 = vmul.f32 %v4044, %v3840
  %v4149 = vmul.f32 %v4047, %v3840
  %v4150 = vmul.f32 %v4050, %v3840
  %v4151 = vmul.f32 %v4053, %v3840
  %v4152 = vmul.f32 %v4056, %v3840
  %v4153 = vmul.f32 %v4059, %v3840
  %v4154 = vmul.f32 %v4062, %v3840
  %v4155 = vmul.f32 %v4065, %v3840
  %v4156 = vmul.f32 %v4068, %v3840
  %v4157 = vmul.f32 %v4071, %v3840
  %v4158 = vmul.f32 %v4074, %v3840
  %v4159 = vmul.f32 %v4077, %v3840
  %v4160 = vmul.f32 %v4080, %v3840
  %v4161 = vmul.f32 %v4083, %v3840
  %v4162 = vmul.f32 %v4086, %v3840
  %v4163 = vmul.f32 %v4089, %v3840
  %v4164 = vmul.f32 %v4092, %v3840
  %v4165 = vmul.f32 %v4095, %v3840
  %v4166 = vmul.f32 %v4098, %v3840
  %v4167 = vmul.f32 %v4101, %v3840
  %v4168 = vmul.f32 %v4104, %v3840
  %v4169 = vmul.f32 %v4107, %v3840
  %v4170 = vmul.f32 %v4110, %v3840
  %v4171 = vmul.f32 %v4113, %v3840
  %v4172 = vmul.f32 %v4116, %v3840
  %v4173 = vmul.f32 %v4119, %v3840
  %v4174 = vmul.f32 %v4122, %v3840
  %v4175 = vmul.f32 %v4125, %v3840
  %v4176 = vmul.f32 %v4128, %v3840
  %v4177 = vadd.f32 %v4129, 1e-05
  %v4178 = vadd.f32 %v4130, 1e-05
  %v4179 = vadd.f32 %v4131, 1e-05
  %v4180 = vadd.f32 %v4132, 1e-05
  %v4181 = vadd.f32 %v4133, 1e-05
  %v4182 = vadd.f32 %v4134, 1e-05
  %v4183 = vadd.f32 %v4135, 1e-05
  %v4184 = vadd.f32 %v4136, 1e-05
  %v4185 = vadd.f32 %v4137, 1e-05
  %v4186 = vadd.f32 %v4138, 1e-05
  %v4187 = vadd.f32 %v4139, 1e-05
  %v4188 = vadd.f32 %v4140, 1e-05
  %v4189 = vadd.f32 %v4141, 1e-05
  %v4190 = vadd.f32 %v4142, 1e-05
  %v4191 = vadd.f32 %v4143, 1e-05
  %v4192 = vadd.f32 %v4144, 1e-05
  %v4193 = vadd.f32 %v4145, 1e-05
  %v4194 = vadd.f32 %v4146, 1e-05
  %v4195 = vadd.f32 %v4147, 1e-05
  %v4196 = vadd.f32 %v4148, 1e-05
  %v4197 = vadd.f32 %v4149, 1e-05
  %v4198 = vadd.f32 %v4150, 1e-05
  %v4199 = vadd.f32 %v4151, 1e-05
  %v4200 = vadd.f32 %v4152, 1e-05
  %v4201 = vadd.f32 %v4153, 1e-05
  %v4202 = vadd.f32 %v4154, 1e-05
  %v4203 = vadd.f32 %v4155, 1e-05
  %v4204 = vadd.f32 %v4156, 1e-05
  %v4205 = vadd.f32 %v4157, 1e-05
  %v4206 = vadd.f32 %v4158, 1e-05
  %v4207 = vadd.f32 %v4159, 1e-05
  %v4208 = vadd.f32 %v4160, 1e-05
  %v4209 = vadd.f32 %v4161, 1e-05
  %v4210 = vadd.f32 %v4162, 1e-05
  %v4211 = vadd.f32 %v4163, 1e-05
  %v4212 = vadd.f32 %v4164, 1e-05
  %v4213 = vadd.f32 %v4165, 1e-05
  %v4214 = vadd.f32 %v4166, 1e-05
  %v4215 = vadd.f32 %v4167, 1e-05
  %v4216 = vadd.f32 %v4168, 1e-05
  %v4217 = vadd.f32 %v4169, 1e-05
  %v4218 = vadd.f32 %v4170, 1e-05
  %v4219 = vadd.f32 %v4171, 1e-05
  %v4220 = vadd.f32 %v4172, 1e-05
  %v4221 = vadd.f32 %v4173, 1e-05
  %v4222 = vadd.f32 %v4174, 1e-05
  %v4223 = vadd.f32 %v4175, 1e-05
  %v4224 = vadd.f32 %v4176, 1e-05
  %v4225 = vrsqrt.pop %v4177
  %v4226 = vrsqrt.pop %v4178
  %v4227 = vrsqrt.pop %v4179
  %v4228 = vrsqrt.pop %v4180
  %v4229 = vrsqrt.pop %v4181
  %v4230 = vrsqrt.pop %v4182
  %v4231 = vrsqrt.pop %v4183
  %v4232 = vrsqrt.pop %v4184
  %v4233 = vrsqrt.pop %v4185
  %v4234 = vrsqrt.pop %v4186
  %v4235 = vrsqrt.pop %v4187
  %v4236 = vrsqrt.pop %v4188
  %v4237 = vrsqrt.pop %v4189
  %v4238 = vrsqrt.pop %v4190
  %v4239 = vrsqrt.pop %v4191
  %v4240 = vrsqrt.pop %v4192
  %v4241 = vrsqrt.pop %v4193
  %v4242 = vrsqrt.pop %v4194
  %v4243 = vrsqrt.pop %v4195
  %v4244 = vrsqrt.pop %v4196
  %v4245 = vrsqrt.pop %v4197
  %v4246 = vrsqrt.pop %v4198
  %v4247 = vrsqrt.pop %v4199
  %v4248 = vrsqrt.pop %v4200
  %v4249 = vrsqrt.pop %v4201
  %v4250 = vrsqrt.pop %v4202
  %v4251 = vrsqrt.pop %v4203
  %v4252 = vrsqrt.pop %v4204
  %v4253 = vrsqrt.pop %v4205
  %v4254 = vrsqrt.pop %v4206
  %v4255 = vrsqrt.pop %v4207
  %v4256 = vrsqrt.pop %v4208
  %v4257 = vrsqrt.pop %v4209
  %v4258 = vrsqrt.pop %v4210
  %v4259 = vrsqrt.pop %v4211
  %v4260 = vrsqrt.pop %v4212
  %v4261 = vrsqrt.pop %v4213
  %v4262 = vrsqrt.pop %v4214
  %v4263 = vrsqrt.pop %v4215
  %v4264 = vrsqrt.pop %v4216
  %v4265 = vrsqrt.pop %v4217
  %v4266 = vrsqrt.pop %v4218
  %v4267 = vrsqrt.pop %v4219
  %v4268 = vrsqrt.pop %v4220
  %v4269 = vrsqrt.pop %v4221
  %v4270 = vrsqrt.pop %v4222
  %v4271 = vrsqrt.pop %v4223
  %v4272 = vrsqrt.pop %v4224
  %v4273 = vmul.f32 %v3889, %v4225
  %v4274 = vmul.f32 %v3890, %v4226
  %v4275 = vmul.f32 %v3891, %v4227
  %v4276 = vmul.f32 %v3892, %v4228
  %v4277 = vmul.f32 %v3893, %v4229
  %v4278 = vmul.f32 %v3894, %v4230
  %v4279 = vmul.f32 %v3895, %v4231
  %v4280 = vmul.f32 %v3896, %v4232
  %v4281 = vmul.f32 %v3897, %v4233
  %v4282 = vmul.f32 %v3898, %v4234
  %v4283 = vmul.f32 %v3899, %v4235
  %v4284 = vmul.f32 %v3900, %v4236
  %v4285 = vmul.f32 %v3901, %v4237
  %v4286 = vmul.f32 %v3902, %v4238
  %v4287 = vmul.f32 %v3903, %v4239
  %v4288 = vmul.f32 %v3904, %v4240
  %v4289 = vmul.f32 %v3905, %v4241
  %v4290 = vmul.f32 %v3906, %v4242
  %v4291 = vmul.f32 %v3907, %v4243
  %v4292 = vmul.f32 %v3908, %v4244
  %v4293 = vmul.f32 %v3909, %v4245
  %v4294 = vmul.f32 %v3910, %v4246
  %v4295 = vmul.f32 %v3911, %v4247
  %v4296 = vmul.f32 %v3912, %v4248
  %v4297 = vmul.f32 %v3913, %v4249
  %v4298 = vmul.f32 %v3914, %v4250
  %v4299 = vmul.f32 %v3915, %v4251
  %v4300 = vmul.f32 %v3916, %v4252
  %v4301 = vmul.f32 %v3917, %v4253
  %v4302 = vmul.f32 %v3918, %v4254
  %v4303 = vmul.f32 %v3919, %v4255
  %v4304 = vmul.f32 %v3920, %v4256
  %v4305 = vmul.f32 %v3921, %v4257
  %v4306 = vmul.f32 %v3922, %v4258
  %v4307 = vmul.f32 %v3923, %v4259
  %v4308 = vmul.f32 %v3924, %v4260
  %v4309 = vmul.f32 %v3925, %v4261
  %v4310 = vmul.f32 %v3926, %v4262
  %v4311 = vmul.f32 %v3927, %v4263
  %v4312 = vmul.f32 %v3928, %v4264
  %v4313 = vmul.f32 %v3929, %v4265
  %v4314 = vmul.f32 %v3930, %v4266
  %v4315 = vmul.f32 %v3931, %v4267
  %v4316 = vmul.f32 %v3932, %v4268
  %v4317 = vmul.f32 %v3933, %v4269
  %v4318 = vmul.f32 %v3934, %v4270
  %v4319 = vmul.f32 %v3935, %v4271
  %v4320 = vmul.f32 %v3936, %v4272
  %v4321 = vlaneseq
  %v4322 = vshrl.u32 %v4321, 7
  %v4323 = vsub.s32 0, %v4322
  %v4324 = vrot.slane %v3694, %v4323
  %v4325 = vmul.f32 %v4273, %v4324
  %v4326 = vmul.f32 %v4274, %v4324
  %v4327 = vmul.f32 %v4275, %v4324
  %v4328 = vmul.f32 %v4276, %v4324
  %v4329 = vmul.f32 %v4277, %v4324
  %v4330 = vmul.f32 %v4278, %v4324
  %v4331 = vmul.f32 %v4279, %v4324
  %v4332 = vmul.f32 %v4280, %v4324
  %v4333 = vmul.f32 %v4281, %v4324
  %v4334 = vmul.f32 %v4282, %v4324
  %v4335 = vmul.f32 %v4283, %v4324
  %v4336 = vmul.f32 %v4284, %v4324
  %v4337 = vmul.f32 %v4285, %v4324
  %v4338 = vmul.f32 %v4286, %v4324
  %v4339 = vmul.f32 %v4287, %v4324
  %v4340 = vmul.f32 %v4288, %v4324
  %v4341 = vmul.f32 %v4289, %v4324
  %v4342 = vmul.f32 %v4290, %v4324
  %v4343 = vmul.f32 %v4291, %v4324
  %v4344 = vmul.f32 %v4292, %v4324
  %v4345 = vmul.f32 %v4293, %v4324
  %v4346 = vmul.f32 %v4294, %v4324
  %v4347 = vmul.f32 %v4295, %v4324
  %v4348 = vmul.f32 %v4296, %v4324
  %v4349 = vmul.f32 %v4297, %v4324
  %v4350 = vmul.f32 %v4298, %v4324
  %v4351 = vmul.f32 %v4299, %v4324
  %v4352 = vmul.f32 %v4300, %v4324
  %v4353 = vmul.f32 %v4301, %v4324
  %v4354 = vmul.f32 %v4302, %v4324
  %v4355 = vmul.f32 %v4303, %v4324
  %v4356 = vmul.f32 %v4304, %v4324
  %v4357 = vmul.f32 %v4305, %v4324
  %v4358 = vmul.f32 %v4306, %v4324
  %v4359 = vmul.f32 %v4307, %v4324
  %v4360 = vmul.f32 %v4308, %v4324
  %v4361 = vmul.f32 %v4309, %v4324
  %v4362 = vmul.f32 %v4310, %v4324
  %v4363 = vmul.f32 %v4311, %v4324
  %v4364 = vmul.f32 %v4312, %v4324
  %v4365 = vmul.f32 %v4313, %v4324
  %v4366 = vmul.f32 %v4314, %v4324
  %v4367 = vmul.f32 %v4315, %v4324
  %v4368 = vmul.f32 %v4316, %v4324
  %v4369 = vmul.f32 %v4317, %v4324
  %v4370 = vmul.f32 %v4318, %v4324
  %v4371 = vmul.f32 %v4319, %v4324
  %v4372 = vmul.f32 %v4320, %v4324
  %v4373 = vlaneseq
  %v4374 = vshrl.u32 %v4373, 7
  %v4375 = vsub.s32 0, %v4374
  %v4376 = vrot.slane %v3695, %v4375
  %v4377 = vadd.f32 %v4325, %v4376
  %v4378 = vadd.f32 %v4326, %v4376
  %v4379 = vadd.f32 %v4327, %v4376
  %v4380 = vadd.f32 %v4328, %v4376
  %v4381 = vadd.f32 %v4329, %v4376
  %v4382 = vadd.f32 %v4330, %v4376
  %v4383 = vadd.f32 %v4331, %v4376
  %v4384 = vadd.f32 %v4332, %v4376
  %v4385 = vadd.f32 %v4333, %v4376
  %v4386 = vadd.f32 %v4334, %v4376
  %v4387 = vadd.f32 %v4335, %v4376
  %v4388 = vadd.f32 %v4336, %v4376
  %v4389 = vadd.f32 %v4337, %v4376
  %v4390 = vadd.f32 %v4338, %v4376
  %v4391 = vadd.f32 %v4339, %v4376
  %v4392 = vadd.f32 %v4340, %v4376
  %v4393 = vadd.f32 %v4341, %v4376
  %v4394 = vadd.f32 %v4342, %v4376
  %v4395 = vadd.f32 %v4343, %v4376
  %v4396 = vadd.f32 %v4344, %v4376
  %v4397 = vadd.f32 %v4345, %v4376
  %v4398 = vadd.f32 %v4346, %v4376
  %v4399 = vadd.f32 %v4347, %v4376
  %v4400 = vadd.f32 %v4348, %v4376
  %v4401 = vadd.f32 %v4349, %v4376
  %v4402 = vadd.f32 %v4350, %v4376
  %v4403 = vadd.f32 %v4351, %v4376
  %v4404 = vadd.f32 %v4352, %v4376
  %v4405 = vadd.f32 %v4353, %v4376
  %v4406 = vadd.f32 %v4354, %v4376
  %v4407 = vadd.f32 %v4355, %v4376
  %v4408 = vadd.f32 %v4356, %v4376
  %v4409 = vadd.f32 %v4357, %v4376
  %v4410 = vadd.f32 %v4358, %v4376
  %v4411 = vadd.f32 %v4359, %v4376
  %v4412 = vadd.f32 %v4360, %v4376
  %v4413 = vadd.f32 %v4361, %v4376
  %v4414 = vadd.f32 %v4362, %v4376
  %v4415 = vadd.f32 %v4363, %v4376
  %v4416 = vadd.f32 %v4364, %v4376
  %v4417 = vadd.f32 %v4365, %v4376
  %v4418 = vadd.f32 %v4366, %v4376
  %v4419 = vadd.f32 %v4367, %v4376
  %v4420 = vadd.f32 %v4368, %v4376
  %v4421 = vadd.f32 %v4369, %v4376
  %v4422 = vadd.f32 %v4370, %v4376
  %v4423 = vadd.f32 %v4371, %v4376
  %v4424 = vadd.f32 %v4372, %v4376
  %4425 = vst.msk [vmem:[%s13] sm:$0xff] %vm158, %v4377
  %4426 = vst.msk [vmem:[%s13 + $0x8] sm:$0xff] %vm158, %v4378
  %4427 = vst.msk [vmem:[%s13 + $0x10] sm:$0xff] %vm158, %v4379
  %4428 = vst.msk [vmem:[%s13 + $0x18] sm:$0xff] %vm158, %v4380
  %4429 = vst.msk [vmem:[%s13 + $0x20] sm:$0xff] %vm158, %v4381
  %4430 = vst.msk [vmem:[%s13 + $0x28] sm:$0xff] %vm158, %v4382
  %4431 = vst.msk [vmem:[%s13 + $0x30] sm:$0xff] %vm158, %v4383
  %4432 = vst.msk [vmem:[%s13 + $0x38] sm:$0xff] %vm158, %v4384
  %4433 = vst.msk [vmem:[%s13 + $0x40] sm:$0xff] %vm158, %v4385
  %4434 = vst.msk [vmem:[%s13 + $0x48] sm:$0xff] %vm158, %v4386
  %4435 = vst.msk [vmem:[%s13 + $0x50] sm:$0xff] %vm158, %v4387
  %4436 = vst.msk [vmem:[%s13 + $0x58] sm:$0xff] %vm158, %v4388
  %4437 = vst.msk [vmem:[%s13 + $0x60] sm:$0xff] %vm158, %v4389
  %4438 = vst.msk [vmem:[%s13 + $0x68] sm:$0xff] %vm158, %v4390
  %4439 = vst.msk [vmem:[%s13 + $0x70] sm:$0xff] %vm158, %v4391
  %4440 = vst.msk [vmem:[%s13 + $0x78] sm:$0xff] %vm158, %v4392
  %4441 = vst.msk [vmem:[%s13 + $0x80] sm:$0xff] %vm158, %v4393
  %4442 = vst.msk [vmem:[%s13 + $0x88] sm:$0xff] %vm158, %v4394
  %4443 = vst.msk [vmem:[%s13 + $0x90] sm:$0xff] %vm158, %v4395
  %4444 = vst.msk [vmem:[%s13 + $0x98] sm:$0xff] %vm158, %v4396
  %4445 = vst.msk [vmem:[%s13 + $0xa0] sm:$0xff] %vm158, %v4397
  %4446 = vst.msk [vmem:[%s13 + $0xa8] sm:$0xff] %vm158, %v4398
  %4447 = vst.msk [vmem:[%s13 + $0xb0] sm:$0xff] %vm158, %v4399
  %4448 = vst.msk [vmem:[%s13 + $0xb8] sm:$0xff] %vm158, %v4400
  %4449 = vst.msk [vmem:[%s13 + $0xc0] sm:$0xff] %vm158, %v4401
  %4450 = vst.msk [vmem:[%s13 + $0xc8] sm:$0xff] %vm158, %v4402
  %4451 = vst.msk [vmem:[%s13 + $0xd0] sm:$0xff] %vm158, %v4403
  %4452 = vst.msk [vmem:[%s13 + $0xd8] sm:$0xff] %vm158, %v4404
  %4453 = vst.msk [vmem:[%s13 + $0xe0] sm:$0xff] %vm158, %v4405
  %4454 = vst.msk [vmem:[%s13 + $0xe8] sm:$0xff] %vm158, %v4406
  %4455 = vst.msk [vmem:[%s13 + $0xf0] sm:$0xff] %vm158, %v4407
  %4456 = vst.msk [vmem:[%s13 + $0xf8] sm:$0xff] %vm158, %v4408
  %4457 = vst.msk [vmem:[%s13 + $0x100] sm:$0xff] %vm158, %v4409
  %4458 = vst.msk [vmem:[%s13 + $0x108] sm:$0xff] %vm158, %v4410
  %4459 = vst.msk [vmem:[%s13 + $0x110] sm:$0xff] %vm158, %v4411
  %4460 = vst.msk [vmem:[%s13 + $0x118] sm:$0xff] %vm158, %v4412
  %4461 = vst.msk [vmem:[%s13 + $0x120] sm:$0xff] %vm158, %v4413
  %4462 = vst.msk [vmem:[%s13 + $0x128] sm:$0xff] %vm158, %v4414
  %4463 = vst.msk [vmem:[%s13 + $0x130] sm:$0xff] %vm158, %v4415
  %4464 = vst.msk [vmem:[%s13 + $0x138] sm:$0xff] %vm158, %v4416
  %4465 = vst.msk [vmem:[%s13 + $0x140] sm:$0xff] %vm158, %v4417
  %4466 = vst.msk [vmem:[%s13 + $0x148] sm:$0xff] %vm158, %v4418
  %4467 = vst.msk [vmem:[%s13 + $0x150] sm:$0xff] %vm158, %v4419
  %4468 = vst.msk [vmem:[%s13 + $0x158] sm:$0xff] %vm158, %v4420
  %4469 = vst.msk [vmem:[%s13 + $0x160] sm:$0xff] %vm158, %v4421
  %4470 = vst.msk [vmem:[%s13 + $0x168] sm:$0xff] %vm158, %v4422
  %4471 = vst.msk [vmem:[%s13 + $0x170] sm:$0xff] %vm158, %v4423
  %4472 = vst.msk [vmem:[%s13 + $0x178] sm:$0xff] %vm158, %v4424
  %v4473 = vld [vmem:[%s9] sm:$0xf]
  %v4474 = vld [vmem:[%s9 + $0x4] sm:$0xf]
  %v4475 = vld [vmem:[%s9 + $0x8] sm:$0xf]
  %v4476 = vld [vmem:[%s9 + $0xc] sm:$0xf]
  %v4477 = vld [vmem:[%s9 + $0x10] sm:$0xf]
  %v4478 = vld [vmem:[%s9 + $0x14] sm:$0xf]
  %v4479 = vld [vmem:[%s9 + $0x18] sm:$0xf]
  %v4480 = vld [vmem:[%s9 + $0x1c] sm:$0xf]
  %v4481 = vpack.c.bf16 %v4378, %v4377
  %v4482 = vpack.c.bf16 %v4380, %v4379
  %v4483 = vpack.c.bf16 %v4382, %v4381
  %v4484 = vpack.c.bf16 %v4384, %v4383
  %v4485 = vpack.c.bf16 %v4386, %v4385
  %v4486 = vpack.c.bf16 %v4388, %v4387
  %v4487 = vpack.c.bf16 %v4390, %v4389
  %v4488 = vpack.c.bf16 %v4392, %v4391
  %v4489 = vpack.c.bf16 %v4394, %v4393
  %v4490 = vpack.c.bf16 %v4396, %v4395
  %v4491 = vpack.c.bf16 %v4398, %v4397
  %v4492 = vpack.c.bf16 %v4400, %v4399
  %v4493 = vpack.c.bf16 %v4402, %v4401
  %v4494 = vpack.c.bf16 %v4404, %v4403
  %v4495 = vpack.c.bf16 %v4406, %v4405
  %v4496 = vpack.c.bf16 %v4408, %v4407
  %v4497 = vpack.c.bf16 %v4410, %v4409
  %v4498 = vpack.c.bf16 %v4412, %v4411
  %v4499 = vpack.c.bf16 %v4414, %v4413
  %v4500 = vpack.c.bf16 %v4416, %v4415
  %v4501 = vpack.c.bf16 %v4418, %v4417
  %v4502 = vpack.c.bf16 %v4420, %v4419
  %v4503 = vpack.c.bf16 %v4422, %v4421
  %v4504 = vpack.c.bf16 %v4424, %v4423
  %v4505 = vld [vmem:[%s10] sm:$0x1]
  %v4507 = vlaneseq
  %v4508 = vshrl.u32 %v4507, 7
  %v4509 = vsub.s32 0, %v4508
  %v4510 = vrot.slane %v4505, %v4509
  %v4520 = vunpack.c.l.b16 %v4473
  %v4521 = vunpack.c.l.b16 %v4474
  %v4522 = vunpack.c.l.b16 %v4475
  %v4523 = vunpack.c.l.b16 %v4476
  %v4524 = vunpack.c.l.b16 %v4477
  %v4525 = vunpack.c.l.b16 %v4478
  %v4526 = vunpack.c.l.b16 %v4479
  %v4527 = vunpack.c.l.b16 %v4480
  %v4528 = vpack.c.b16 %v4521, %v4520
  %v4529 = vpack.c.b16 %v4523, %v4522
  %v4530 = vpack.c.b16 %v4525, %v4524
  %v4531 = vpack.c.b16 %v4527, %v4526
  %v4537 = vsel %vm158, %v4481, 0
  %v4540 = vsel %vm158, %v4482, 0
  %v4543 = vsel %vm158, %v4483, 0
  %v4546 = vsel %vm158, %v4484, 0
  %v4549 = vsel %vm158, %v4485, 0
  %v4552 = vsel %vm158, %v4486, 0
  %v4555 = vsel %vm158, %v4487, 0
  %v4558 = vsel %vm158, %v4488, 0
  %v4561 = vsel %vm158, %v4489, 0
  %v4564 = vsel %vm158, %v4490, 0
  %v4567 = vsel %vm158, %v4491, 0
  %v4570 = vsel %vm158, %v4492, 0
  %v4573 = vsel %vm158, %v4493, 0
  %v4576 = vsel %vm158, %v4494, 0
  %v4579 = vsel %vm158, %v4495, 0
  %v4582 = vsel %vm158, %v4496, 0
  %v4585 = vsel %vm158, %v4497, 0
  %v4588 = vsel %vm158, %v4498, 0
  %v4591 = vsel %vm158, %v4499, 0
  %v4594 = vsel %vm158, %v4500, 0
  %v4597 = vsel %vm158, %v4501, 0
  %v4600 = vsel %vm158, %v4502, 0
  %v4603 = vsel %vm158, %v4503, 0
  %v4606 = vsel %vm158, %v4504, 0
  %4608 = vmatprep.subr.bf16.mxu0 0
  %4609 = vmatpush1.bf16.msra.mxu0 0
  %4610 = vmatprep.subr.bf16.mxu0 0
  %4611 = vmatpush1.bf16.msra.mxu0 0
  %4612 = vmatprep.subr.bf16.mxu0 0
  %4613 = vmatpush1.bf16.msra.mxu0 0
  %4614 = vmatprep.subr.bf16.mxu0 0
  %4615 = vmatpush1.bf16.msra.mxu0 0
  %4616 = vmatprep.subr.bf16.mxu0 0
  %4617 = vmatpush1.bf16.msra.mxu0 %v4531
  %4618 = vmatprep.subr.bf16.mxu0 0
  %4619 = vmatpush1.bf16.msra.mxu0 %v4530
  %4620 = vmatprep.subr.bf16.mxu0 0
  %4621 = vmatpush1.bf16.msra.mxu0 %v4529
  %4622 = vmatprep.subr.bf16.mxu0 0
  %4623 = vmatpush1.bf16.msra.mxu0 %v4528
  %4624 = vmatprep.subr.bf16.mxu0 0
  %4625 = vmatpush2.bf16.msra.mxu0 0
  %4626 = vmatprep.subr.bf16.mxu0 0
  %4627 = vmatpush2.bf16.msra.mxu0 0
  %4628 = vmatprep.subr.bf16.mxu0 0
  %4629 = vmatpush2.bf16.msra.mxu0 0
  %4630 = vmatprep.subr.bf16.mxu0 0
  %4631 = vmatpush2.bf16.msra.mxu0 0
  %4632 = vmatprep.subr.bf16.mxu0 0
  %4633 = vmatpush2.bf16.msra.mxu0 0
  %4634 = vmatprep.subr.bf16.mxu0 0
  %4635 = vmatpush2.bf16.msra.mxu0 0
  %4636 = vmatprep.subr.bf16.mxu0 0
  %4637 = vmatpush2.bf16.msra.mxu0 0
  %4638 = vmatprep.subr.bf16.mxu0 0
  %4639 = vmatpush2.bf16.msra.mxu0 0
  %4640 = vmatprep.mubr.bf16.mxu0 0
  %4641 = vmatmul.mubr.bf16.gmra.mxu0 %v4537
  %v4642 = vpop.f32.mrf.mxu0
  %v4643 = vadd.f32 %v4510, %v4642
  %v4644 = vpop.f32.mrf.mxu0
  %v4645 = vpop.f32.mrf.mxu0
  %v4646 = vadd.f32 %v4510, %v4645
  %v4647 = vpop.f32.mrf.mxu0
  %4648 = vmatprep.mubr.bf16.mxu0 0
  %4649 = vmatmul.mubr.bf16.gmra.mxu0 %v4540
  %v4650 = vpop.f32.mrf.mxu0
  %v4651 = vadd.f32 %v4510, %v4650
  %v4652 = vpop.f32.mrf.mxu0
  %v4653 = vpop.f32.mrf.mxu0
  %v4654 = vadd.f32 %v4510, %v4653
  %v4655 = vpop.f32.mrf.mxu0
  %4656 = vmatprep.mubr.bf16.mxu0 0
  %4657 = vmatmul.mubr.bf16.gmra.mxu0 %v4543
  %v4658 = vpop.f32.mrf.mxu0
  %v4659 = vadd.f32 %v4510, %v4658
  %v4660 = vpop.f32.mrf.mxu0
  %v4661 = vpop.f32.mrf.mxu0
  %v4662 = vadd.f32 %v4510, %v4661
  %v4663 = vpop.f32.mrf.mxu0
  %4664 = vmatprep.mubr.bf16.mxu0 0
  %4665 = vmatmul.mubr.bf16.gmra.mxu0 %v4546
  %v4666 = vpop.f32.mrf.mxu0
  %v4667 = vadd.f32 %v4510, %v4666
  %v4668 = vpop.f32.mrf.mxu0
  %v4669 = vpop.f32.mrf.mxu0
  %v4670 = vadd.f32 %v4510, %v4669
  %v4671 = vpop.f32.mrf.mxu0
  %4672 = vmatprep.mubr.bf16.mxu0 0
  %4673 = vmatmul.mubr.bf16.gmra.mxu0 %v4549
  %v4674 = vpop.f32.mrf.mxu0
  %v4675 = vadd.f32 %v4510, %v4674
  %v4676 = vpop.f32.mrf.mxu0
  %v4677 = vpop.f32.mrf.mxu0
  %v4678 = vadd.f32 %v4510, %v4677
  %v4679 = vpop.f32.mrf.mxu0
  %4680 = vmatprep.mubr.bf16.mxu0 0
  %4681 = vmatmul.mubr.bf16.gmra.mxu0 %v4552
  %v4682 = vpop.f32.mrf.mxu0
  %v4683 = vadd.f32 %v4510, %v4682
  %v4684 = vpop.f32.mrf.mxu0
  %v4685 = vpop.f32.mrf.mxu0
  %v4686 = vadd.f32 %v4510, %v4685
  %v4687 = vpop.f32.mrf.mxu0
  %4688 = vmatprep.mubr.bf16.mxu0 0
  %4689 = vmatmul.mubr.bf16.gmra.mxu0 %v4555
  %v4690 = vpop.f32.mrf.mxu0
  %v4691 = vadd.f32 %v4510, %v4690
  %v4692 = vpop.f32.mrf.mxu0
  %v4693 = vpop.f32.mrf.mxu0
  %v4694 = vadd.f32 %v4510, %v4693
  %v4695 = vpop.f32.mrf.mxu0
  %4696 = vmatprep.mubr.bf16.mxu0 0
  %4697 = vmatmul.mubr.bf16.gmra.mxu0 %v4558
  %v4698 = vpop.f32.mrf.mxu0
  %v4699 = vadd.f32 %v4510, %v4698
  %v4700 = vpop.f32.mrf.mxu0
  %v4701 = vpop.f32.mrf.mxu0
  %v4702 = vadd.f32 %v4510, %v4701
  %v4703 = vpop.f32.mrf.mxu0
  %4704 = vmatprep.mubr.bf16.mxu0 0
  %4705 = vmatmul.mubr.bf16.gmra.mxu0 %v4561
  %v4706 = vpop.f32.mrf.mxu0
  %v4707 = vadd.f32 %v4510, %v4706
  %v4708 = vpop.f32.mrf.mxu0
  %v4709 = vpop.f32.mrf.mxu0
  %v4710 = vadd.f32 %v4510, %v4709
  %v4711 = vpop.f32.mrf.mxu0
  %4712 = vmatprep.mubr.bf16.mxu0 0
  %4713 = vmatmul.mubr.bf16.gmra.mxu0 %v4564
  %v4714 = vpop.f32.mrf.mxu0
  %v4715 = vadd.f32 %v4510, %v4714
  %v4716 = vpop.f32.mrf.mxu0
  %v4717 = vpop.f32.mrf.mxu0
  %v4718 = vadd.f32 %v4510, %v4717
  %v4719 = vpop.f32.mrf.mxu0
  %4720 = vmatprep.mubr.bf16.mxu0 0
  %4721 = vmatmul.mubr.bf16.gmra.mxu0 %v4567
  %v4722 = vpop.f32.mrf.mxu0
  %v4723 = vadd.f32 %v4510, %v4722
  %v4724 = vpop.f32.mrf.mxu0
  %v4725 = vpop.f32.mrf.mxu0
  %v4726 = vadd.f32 %v4510, %v4725
  %v4727 = vpop.f32.mrf.mxu0
  %4728 = vmatprep.mubr.bf16.mxu0 0
  %4729 = vmatmul.mubr.bf16.gmra.mxu0 %v4570
  %v4730 = vpop.f32.mrf.mxu0
  %v4731 = vadd.f32 %v4510, %v4730
  %v4732 = vpop.f32.mrf.mxu0
  %v4733 = vpop.f32.mrf.mxu0
  %v4734 = vadd.f32 %v4510, %v4733
  %v4735 = vpop.f32.mrf.mxu0
  %4736 = vmatprep.mubr.bf16.mxu0 0
  %4737 = vmatmul.mubr.bf16.gmra.mxu0 %v4573
  %v4738 = vpop.f32.mrf.mxu0
  %v4739 = vadd.f32 %v4510, %v4738
  %v4740 = vpop.f32.mrf.mxu0
  %v4741 = vpop.f32.mrf.mxu0
  %v4742 = vadd.f32 %v4510, %v4741
  %v4743 = vpop.f32.mrf.mxu0
  %4744 = vmatprep.mubr.bf16.mxu0 0
  %4745 = vmatmul.mubr.bf16.gmra.mxu0 %v4576
  %v4746 = vpop.f32.mrf.mxu0
  %v4747 = vadd.f32 %v4510, %v4746
  %v4748 = vpop.f32.mrf.mxu0
  %v4749 = vpop.f32.mrf.mxu0
  %v4750 = vadd.f32 %v4510, %v4749
  %v4751 = vpop.f32.mrf.mxu0
  %4752 = vmatprep.mubr.bf16.mxu0 0
  %4753 = vmatmul.mubr.bf16.gmra.mxu0 %v4579
  %v4754 = vpop.f32.mrf.mxu0
  %v4755 = vadd.f32 %v4510, %v4754
  %v4756 = vpop.f32.mrf.mxu0
  %v4757 = vpop.f32.mrf.mxu0
  %v4758 = vadd.f32 %v4510, %v4757
  %v4759 = vpop.f32.mrf.mxu0
  %4760 = vmatprep.mubr.bf16.mxu0 0
  %4761 = vmatmul.mubr.bf16.gmra.mxu0 %v4582
  %v4762 = vpop.f32.mrf.mxu0
  %v4763 = vadd.f32 %v4510, %v4762
  %v4764 = vpop.f32.mrf.mxu0
  %v4765 = vpop.f32.mrf.mxu0
  %v4766 = vadd.f32 %v4510, %v4765
  %v4767 = vpop.f32.mrf.mxu0
  %4768 = vmatprep.mubr.bf16.mxu0 0
  %4769 = vmatmul.mubr.bf16.gmra.mxu0 %v4585
  %v4770 = vpop.f32.mrf.mxu0
  %v4771 = vadd.f32 %v4510, %v4770
  %v4772 = vpop.f32.mrf.mxu0
  %v4773 = vpop.f32.mrf.mxu0
  %v4774 = vadd.f32 %v4510, %v4773
  %v4775 = vpop.f32.mrf.mxu0
  %4776 = vmatprep.mubr.bf16.mxu0 0
  %4777 = vmatmul.mubr.bf16.gmra.mxu0 %v4588
  %v4778 = vpop.f32.mrf.mxu0
  %v4779 = vadd.f32 %v4510, %v4778
  %v4780 = vpop.f32.mrf.mxu0
  %v4781 = vpop.f32.mrf.mxu0
  %v4782 = vadd.f32 %v4510, %v4781
  %v4783 = vpop.f32.mrf.mxu0
  %4784 = vmatprep.mubr.bf16.mxu0 0
  %4785 = vmatmul.mubr.bf16.gmra.mxu0 %v4591
  %v4786 = vpop.f32.mrf.mxu0
  %v4787 = vadd.f32 %v4510, %v4786
  %v4788 = vpop.f32.mrf.mxu0
  %v4789 = vpop.f32.mrf.mxu0
  %v4790 = vadd.f32 %v4510, %v4789
  %v4791 = vpop.f32.mrf.mxu0
  %4792 = vmatprep.mubr.bf16.mxu0 0
  %4793 = vmatmul.mubr.bf16.gmra.mxu0 %v4594
  %v4794 = vpop.f32.mrf.mxu0
  %v4795 = vadd.f32 %v4510, %v4794
  %v4796 = vpop.f32.mrf.mxu0
  %v4797 = vpop.f32.mrf.mxu0
  %v4798 = vadd.f32 %v4510, %v4797
  %v4799 = vpop.f32.mrf.mxu0
  %4800 = vmatprep.mubr.bf16.mxu0 0
  %4801 = vmatmul.mubr.bf16.gmra.mxu0 %v4597
  %v4802 = vpop.f32.mrf.mxu0
  %v4803 = vadd.f32 %v4510, %v4802
  %v4804 = vpop.f32.mrf.mxu0
  %v4805 = vpop.f32.mrf.mxu0
  %v4806 = vadd.f32 %v4510, %v4805
  %v4807 = vpop.f32.mrf.mxu0
  %4808 = vmatprep.mubr.bf16.mxu0 0
  %4809 = vmatmul.mubr.bf16.gmra.mxu0 %v4600
  %v4810 = vpop.f32.mrf.mxu0
  %v4811 = vadd.f32 %v4510, %v4810
  %v4812 = vpop.f32.mrf.mxu0
  %v4813 = vpop.f32.mrf.mxu0
  %v4814 = vadd.f32 %v4510, %v4813
  %v4815 = vpop.f32.mrf.mxu0
  %4816 = vmatprep.mubr.bf16.mxu0 0
  %4817 = vmatmul.mubr.bf16.gmra.mxu0 %v4603
  %v4818 = vpop.f32.mrf.mxu0
  %v4819 = vadd.f32 %v4510, %v4818
  %v4820 = vpop.f32.mrf.mxu0
  %v4821 = vpop.f32.mrf.mxu0
  %v4822 = vadd.f32 %v4510, %v4821
  %v4823 = vpop.f32.mrf.mxu0
  %4824 = vmatprep.mubr.bf16.mxu0 0
  %4825 = vmatmul.mubr.bf16.gmra.mxu0 %v4606
  %v4826 = vpop.f32.mrf.mxu0
  %v4827 = vadd.f32 %v4510, %v4826
  %v4828 = vpop.f32.mrf.mxu0
  %v4829 = vpop.f32.mrf.mxu0
  %v4830 = vadd.f32 %v4510, %v4829
  %v4831 = vpop.f32.mrf.mxu0
  %4832 = vdwg.mxu0
  %v4833 = vmul.f32 %v4643, 0.125
  %v4834 = vmul.f32 %v4646, 0.125
  %v4835 = vmul.f32 %v4651, 0.125
  %v4836 = vmul.f32 %v4654, 0.125
  %v4837 = vmul.f32 %v4659, 0.125
  %v4838 = vmul.f32 %v4662, 0.125
  %v4839 = vmul.f32 %v4667, 0.125
  %v4840 = vmul.f32 %v4670, 0.125
  %v4841 = vmul.f32 %v4675, 0.125
  %v4842 = vmul.f32 %v4678, 0.125
  %v4843 = vmul.f32 %v4683, 0.125
  %v4844 = vmul.f32 %v4686, 0.125
  %v4845 = vmul.f32 %v4691, 0.125
  %v4846 = vmul.f32 %v4694, 0.125
  %v4847 = vmul.f32 %v4699, 0.125
  %v4848 = vmul.f32 %v4702, 0.125
  %v4849 = vmul.f32 %v4707, 0.125
  %v4850 = vmul.f32 %v4710, 0.125
  %v4851 = vmul.f32 %v4715, 0.125
  %v4852 = vmul.f32 %v4718, 0.125
  %v4853 = vmul.f32 %v4723, 0.125
  %v4854 = vmul.f32 %v4726, 0.125
  %v4855 = vmul.f32 %v4731, 0.125
  %v4856 = vmul.f32 %v4734, 0.125
  %v4857 = vmul.f32 %v4739, 0.125
  %v4858 = vmul.f32 %v4742, 0.125
  %v4859 = vmul.f32 %v4747, 0.125
  %v4860 = vmul.f32 %v4750, 0.125
  %v4861 = vmul.f32 %v4755, 0.125
  %v4862 = vmul.f32 %v4758, 0.125
  %v4863 = vmul.f32 %v4763, 0.125
  %v4864 = vmul.f32 %v4766, 0.125
  %v4865 = vmul.f32 %v4771, 0.125
  %v4866 = vmul.f32 %v4774, 0.125
  %v4867 = vmul.f32 %v4779, 0.125
  %v4868 = vmul.f32 %v4782, 0.125
  %v4869 = vmul.f32 %v4787, 0.125
  %v4870 = vmul.f32 %v4790, 0.125
  %v4871 = vmul.f32 %v4795, 0.125
  %v4872 = vmul.f32 %v4798, 0.125
  %v4873 = vmul.f32 %v4803, 0.125
  %v4874 = vmul.f32 %v4806, 0.125
  %v4875 = vmul.f32 %v4811, 0.125
  %v4876 = vmul.f32 %v4814, 0.125
  %v4877 = vmul.f32 %v4819, 0.125
  %v4878 = vmul.f32 %v4822, 0.125
  %v4879 = vmul.f32 %v4827, 0.125
  %v4880 = vmul.f32 %v4830, 0.125
  %v4881 = vpack.c.bf16 %v4834, %v4833
  %v4882 = vpack.c.bf16 %v4836, %v4835
  %v4883 = vpack.c.bf16 %v4838, %v4837
  %v4884 = vpack.c.bf16 %v4840, %v4839
  %v4885 = vpack.c.bf16 %v4842, %v4841
  %v4886 = vpack.c.bf16 %v4844, %v4843
  %v4887 = vpack.c.bf16 %v4846, %v4845
  %v4888 = vpack.c.bf16 %v4848, %v4847
  %v4889 = vpack.c.bf16 %v4850, %v4849
  %v4890 = vpack.c.bf16 %v4852, %v4851
  %v4891 = vpack.c.bf16 %v4854, %v4853
  %v4892 = vpack.c.bf16 %v4856, %v4855
  %v4893 = vpack.c.bf16 %v4858, %v4857
  %v4894 = vpack.c.bf16 %v4860, %v4859
  %v4895 = vpack.c.bf16 %v4862, %v4861
  %v4896 = vpack.c.bf16 %v4864, %v4863
  %v4897 = vpack.c.bf16 %v4866, %v4865
  %v4898 = vpack.c.bf16 %v4868, %v4867
  %v4899 = vpack.c.bf16 %v4870, %v4869
  %v4900 = vpack.c.bf16 %v4872, %v4871
  %v4901 = vpack.c.bf16 %v4874, %v4873
  %v4902 = vpack.c.bf16 %v4876, %v4875
  %v4903 = vpack.c.bf16 %v4878, %v4877
  %v4904 = vpack.c.bf16 %v4880, %v4879
  %v4929 = vunpack.c.l.b16 %v4881
  %v4930 = vunpack.c.h.b16 %v4881
  %v4931 = vunpack.c.l.b16 %v4882
  %v4932 = vunpack.c.h.b16 %v4882
  %v4933 = vunpack.c.l.b16 %v4883
  %v4934 = vunpack.c.h.b16 %v4883
  %v4935 = vunpack.c.l.b16 %v4884
  %v4936 = vunpack.c.h.b16 %v4884
  %v4937 = vunpack.c.l.b16 %v4885
  %v4938 = vunpack.c.h.b16 %v4885
  %v4939 = vunpack.c.l.b16 %v4886
  %v4940 = vunpack.c.h.b16 %v4886
  %v4941 = vunpack.c.l.b16 %v4887
  %v4942 = vunpack.c.h.b16 %v4887
  %v4943 = vunpack.c.l.b16 %v4888
  %v4944 = vunpack.c.h.b16 %v4888
  %v4945 = vunpack.c.l.b16 %v4889
  %v4946 = vunpack.c.h.b16 %v4889
  %v4947 = vunpack.c.l.b16 %v4890
  %v4948 = vunpack.c.h.b16 %v4890
  %v4949 = vunpack.c.l.b16 %v4891
  %v4950 = vunpack.c.h.b16 %v4891
  %v4951 = vunpack.c.l.b16 %v4892
  %v4952 = vunpack.c.h.b16 %v4892
  %v4953 = vunpack.c.l.b16 %v4893
  %v4954 = vunpack.c.h.b16 %v4893
  %v4955 = vunpack.c.l.b16 %v4894
  %v4956 = vunpack.c.h.b16 %v4894
  %v4957 = vunpack.c.l.b16 %v4895
  %v4958 = vunpack.c.h.b16 %v4895
  %v4959 = vunpack.c.l.b16 %v4896
  %v4960 = vunpack.c.h.b16 %v4896
  %v4961 = vunpack.c.l.b16 %v4897
  %v4962 = vunpack.c.h.b16 %v4897
  %v4963 = vunpack.c.l.b16 %v4898
  %v4964 = vunpack.c.h.b16 %v4898
  %v4965 = vunpack.c.l.b16 %v4899
  %v4966 = vunpack.c.h.b16 %v4899
  %v4967 = vunpack.c.l.b16 %v4900
  %v4968 = vunpack.c.h.b16 %v4900
  %v4969 = vunpack.c.l.b16 %v4901
  %v4970 = vunpack.c.h.b16 %v4901
  %v4971 = vunpack.c.l.b16 %v4902
  %v4972 = vunpack.c.h.b16 %v4902
  %v4973 = vunpack.c.l.b16 %v4903
  %v4974 = vunpack.c.h.b16 %v4903
  %v4975 = vunpack.c.l.b16 %v4904
  %v4976 = vunpack.c.h.b16 %v4904
  %v4977 = vpack.c.b16 %v4929, %v4929
  %v4978 = vpack.c.b16 %v4930, %v4930
  %v4979 = vpack.c.b16 %v4931, %v4931
  %v4980 = vpack.c.b16 %v4932, %v4932
  %v4981 = vpack.c.b16 %v4933, %v4933
  %v4982 = vpack.c.b16 %v4934, %v4934
  %v4983 = vpack.c.b16 %v4935, %v4935
  %v4984 = vpack.c.b16 %v4936, %v4936
  %v4985 = vpack.c.b16 %v4937, %v4937
  %v4986 = vpack.c.b16 %v4938, %v4938
  %v4987 = vpack.c.b16 %v4939, %v4939
  %v4988 = vpack.c.b16 %v4940, %v4940
  %v4989 = vpack.c.b16 %v4941, %v4941
  %v4990 = vpack.c.b16 %v4942, %v4942
  %v4991 = vpack.c.b16 %v4943, %v4943
  %v4992 = vpack.c.b16 %v4944, %v4944
  %v4993 = vpack.c.b16 %v4945, %v4945
  %v4994 = vpack.c.b16 %v4946, %v4946
  %v4995 = vpack.c.b16 %v4947, %v4947
  %v4996 = vpack.c.b16 %v4948, %v4948
  %v4997 = vpack.c.b16 %v4949, %v4949
  %v4998 = vpack.c.b16 %v4950, %v4950
  %v4999 = vpack.c.b16 %v4951, %v4951
  %v5000 = vpack.c.b16 %v4952, %v4952
  %v5001 = vpack.c.b16 %v4953, %v4953
  %v5002 = vpack.c.b16 %v4954, %v4954
  %v5003 = vpack.c.b16 %v4955, %v4955
  %v5004 = vpack.c.b16 %v4956, %v4956
  %v5005 = vpack.c.b16 %v4957, %v4957
  %v5006 = vpack.c.b16 %v4958, %v4958
  %v5007 = vpack.c.b16 %v4959, %v4959
  %v5008 = vpack.c.b16 %v4960, %v4960
  %v5009 = vpack.c.b16 %v4961, %v4961
  %v5010 = vpack.c.b16 %v4962, %v4962
  %v5011 = vpack.c.b16 %v4963, %v4963
  %v5012 = vpack.c.b16 %v4964, %v4964
  %v5013 = vpack.c.b16 %v4965, %v4965
  %v5014 = vpack.c.b16 %v4966, %v4966
  %v5015 = vpack.c.b16 %v4967, %v4967
  %v5016 = vpack.c.b16 %v4968, %v4968
  %v5017 = vpack.c.b16 %v4969, %v4969
  %v5018 = vpack.c.b16 %v4970, %v4970
  %v5019 = vpack.c.b16 %v4971, %v4971
  %v5020 = vpack.c.b16 %v4972, %v4972
  %v5021 = vpack.c.b16 %v4973, %v4973
  %v5022 = vpack.c.b16 %v4974, %v4974
  %v5023 = vpack.c.b16 %v4975, %v4975
  %v5024 = vpack.c.b16 %v4976, %v4976
  %vm5073 = vcmask 519168
  %5074 = vst.msk [vmem:[%s14] sm:$0xf] %vm5073, %v4977
  %5075 = vst.msk [vmem:[%s14 + $0x4] sm:$0xf] %vm5073, %v4978
  %5076 = vst.msk [vmem:[%s14 + $0x8] sm:$0xf] %vm5073, %v4979
  %5077 = vst.msk [vmem:[%s14 + $0xc] sm:$0xf] %vm5073, %v4980
  %5078 = vst.msk [vmem:[%s14 + $0x10] sm:$0xf] %vm5073, %v4981
  %5079 = vst.msk [vmem:[%s14 + $0x14] sm:$0xf] %vm5073, %v4982
  %5080 = vst.msk [vmem:[%s14 + $0x18] sm:$0xf] %vm5073, %v4983
  %5081 = vst.msk [vmem:[%s14 + $0x1c] sm:$0xf] %vm5073, %v4984
  %5082 = vst.msk [vmem:[%s14 + $0x20] sm:$0xf] %vm5073, %v4985
  %5083 = vst.msk [vmem:[%s14 + $0x24] sm:$0xf] %vm5073, %v4986
  %5084 = vst.msk [vmem:[%s14 + $0x28] sm:$0xf] %vm5073, %v4987
  %5085 = vst.msk [vmem:[%s14 + $0x2c] sm:$0xf] %vm5073, %v4988
  %5086 = vst.msk [vmem:[%s14 + $0x30] sm:$0xf] %vm5073, %v4989
  %5087 = vst.msk [vmem:[%s14 + $0x34] sm:$0xf] %vm5073, %v4990
  %5088 = vst.msk [vmem:[%s14 + $0x38] sm:$0xf] %vm5073, %v4991
  %5089 = vst.msk [vmem:[%s14 + $0x3c] sm:$0xf] %vm5073, %v4992
  %5090 = vst.msk [vmem:[%s14 + $0x40] sm:$0xf] %vm5073, %v4993
  %5091 = vst.msk [vmem:[%s14 + $0x44] sm:$0xf] %vm5073, %v4994
  %5092 = vst.msk [vmem:[%s14 + $0x48] sm:$0xf] %vm5073, %v4995
  %5093 = vst.msk [vmem:[%s14 + $0x4c] sm:$0xf] %vm5073, %v4996
  %5094 = vst.msk [vmem:[%s14 + $0x50] sm:$0xf] %vm5073, %v4997
  %5095 = vst.msk [vmem:[%s14 + $0x54] sm:$0xf] %vm5073, %v4998
  %5096 = vst.msk [vmem:[%s14 + $0x58] sm:$0xf] %vm5073, %v4999
  %5097 = vst.msk [vmem:[%s14 + $0x5c] sm:$0xf] %vm5073, %v5000
  %5098 = vst.msk [vmem:[%s14 + $0x60] sm:$0xf] %vm5073, %v5001
  %5099 = vst.msk [vmem:[%s14 + $0x64] sm:$0xf] %vm5073, %v5002
  %5100 = vst.msk [vmem:[%s14 + $0x68] sm:$0xf] %vm5073, %v5003
  %5101 = vst.msk [vmem:[%s14 + $0x6c] sm:$0xf] %vm5073, %v5004
  %5102 = vst.msk [vmem:[%s14 + $0x70] sm:$0xf] %vm5073, %v5005
  %5103 = vst.msk [vmem:[%s14 + $0x74] sm:$0xf] %vm5073, %v5006
  %5104 = vst.msk [vmem:[%s14 + $0x78] sm:$0xf] %vm5073, %v5007
  %5105 = vst.msk [vmem:[%s14 + $0x7c] sm:$0xf] %vm5073, %v5008
  %5106 = vst.msk [vmem:[%s14 + $0x80] sm:$0xf] %vm5073, %v5009
  %5107 = vst.msk [vmem:[%s14 + $0x84] sm:$0xf] %vm5073, %v5010
  %5108 = vst.msk [vmem:[%s14 + $0x88] sm:$0xf] %vm5073, %v5011
  %5109 = vst.msk [vmem:[%s14 + $0x8c] sm:$0xf] %vm5073, %v5012
  %5110 = vst.msk [vmem:[%s14 + $0x90] sm:$0xf] %vm5073, %v5013
  %5111 = vst.msk [vmem:[%s14 + $0x94] sm:$0xf] %vm5073, %v5014
  %5112 = vst.msk [vmem:[%s14 + $0x98] sm:$0xf] %vm5073, %v5015
  %5113 = vst.msk [vmem:[%s14 + $0x9c] sm:$0xf] %vm5073, %v5016
  %5114 = vst.msk [vmem:[%s14 + $0xa0] sm:$0xf] %vm5073, %v5017
  %5115 = vst.msk [vmem:[%s14 + $0xa4] sm:$0xf] %vm5073, %v5018
  %5116 = vst.msk [vmem:[%s14 + $0xa8] sm:$0xf] %vm5073, %v5019
  %5117 = vst.msk [vmem:[%s14 + $0xac] sm:$0xf] %vm5073, %v5020
  %5118 = vst.msk [vmem:[%s14 + $0xb0] sm:$0xf] %vm5073, %v5021
  %5119 = vst.msk [vmem:[%s14 + $0xb4] sm:$0xf] %vm5073, %v5022
  %5120 = vst.msk [vmem:[%s14 + $0xb8] sm:$0xf] %vm5073, %v5023
  %5121 = vst.msk [vmem:[%s14 + $0xbc] sm:$0xf] %vm5073, %v5024
  // Predicated region
  $region54: #{tpu_custom_call.1} parent=0 // pred_check
    _
  $region55: #{tpu_custom_call.1} parent=0 // pred_check_branch
    %5123 = sbr.rel (0) target = $region57
  $region56: #{tpu_custom_call.1} parent=0 // pred_region
    _
  $region57: #{tpu_custom_call.1} parent=0 // pred_fallthru
    _
  // Predicated region
  $region58: #{tpu_custom_call.1} parent=0 // pred_check
    _
  $region59: #{tpu_custom_call.1} parent=0 // pred_check_branch
    %5125 = sbr.rel (0) target = $region61
  $region60: #{tpu_custom_call.1} parent=0 // pred_region
    _
  $region61: #{tpu_custom_call.1} parent=0 // pred_fallthru
    _
  // Predicated region
  $region62: #{tpu_custom_call.1} parent=0 // pred_check
    _
  $region63: #{tpu_custom_call.1} parent=0 // pred_check_branch
    %5127 = sbr.rel (0) target = $region65
  $region64: #{tpu_custom_call.1} parent=0 // pred_region
    _
  $region65: #{tpu_custom_call.1} parent=0 // pred_fallthru
    _
  // Predicated region
  $region66: #{tpu_custom_call.1} parent=0 // pred_check
    _
  $region67: #{tpu_custom_call.1} parent=0 // pred_check_branch
    %5129 = sbr.rel (0) target = $region69
  $region68: #{tpu_custom_call.1} parent=0 // pred_region
    _
  $region69: #{tpu_custom_call.1} parent=0 // pred_fallthru
    _

</llo_original>
